<compile_context>
chip_gen: v7x
topology: tpu7x:2x2x1
jax: 0.10.0
libtpu: 0.0.40
codegen_flags: <defaults>
</compile_context>

<pallas_src>
import functools

import jax
import jax.numpy as jnp
from jax import lax
from jax.experimental import pallas as pl
from jax.experimental.pallas import tpu as pltpu


def _semiflow_kernel(u_ref, wt_ref, b_ref, o_ref, *, T, time_steps):
    """Integrate x' = tanh(x @ Wt + b) from 0 to T with fixed-step dopri5."""
    x0 = u_ref[...].astype(jnp.float32)
    Wt = wt_ref[...].astype(jnp.float32)
    # Hoisted bias broadcast: one broadcast total (JAX does not CSE it, and the
    # RK loop below is fully unrolled).
    bb = jnp.broadcast_to(b_ref[...].astype(jnp.float32), x0.shape)

    dt = float(T) / float(time_steps - 1)
    n_steps = time_steps - 1

    # Dormand-Prince (dopri5) Butcher tableau with dt folded in at trace time
    # (Python floats -> constants), removing the per-stage dt*() VPU multiply
    # from the serial MXU->EUP->VPU chain.
    c21 = dt * (1.0 / 5.0)
    c31, c32 = dt * (3.0 / 40.0), dt * (9.0 / 40.0)
    c41, c42, c43 = dt * (44.0 / 45.0), dt * (-56.0 / 15.0), dt * (32.0 / 9.0)
    c51, c52, c53, c54 = (dt * (19372.0 / 6561.0), dt * (-25360.0 / 2187.0),
                          dt * (64448.0 / 6561.0), dt * (-212.0 / 729.0))
    c61, c62, c63, c64, c65 = (dt * (9017.0 / 3168.0), dt * (-355.0 / 33.0),
                               dt * (46732.0 / 5247.0), dt * (49.0 / 176.0),
                               dt * (-5103.0 / 18656.0))
    d1, d3, d4, d5, d6 = (dt * (35.0 / 384.0), dt * (500.0 / 1113.0),
                          dt * (125.0 / 192.0), dt * (-2187.0 / 6784.0),
                          dt * (11.0 / 84.0))

    def f(x):
        # hot path: MXU matmul + VPU bias add + EUP tanh
        return jnp.tanh(
            jnp.dot(x, Wt, preferred_element_type=jnp.float32) + bb
        )

    def step(_, x):
        k1 = f(x)
        k2 = f(x + c21 * k1)
        k3 = f(x + c31 * k1 + c32 * k2)
        k4 = f(x + c41 * k1 + c42 * k2 + c43 * k3)
        k5 = f(x + c51 * k1 + c52 * k2 + c53 * k3 + c54 * k4)
        k6 = f(x + c61 * k1 + c62 * k2 + c63 * k3 + c64 * k4 + c65 * k5)
        return x + d1 * k1 + d3 * k3 + d4 * k4 + d5 * k5 + d6 * k6

    x_T = lax.fori_loop(0, n_steps, step, x0, unroll=True)
    o_ref[...] = x_T.astype(o_ref.dtype)


def _num_tc_blocks(batch):
    """1 block on single-TensorCore chips (v5e/v6e), 2 on v7x (2 TCs/chip)."""
    try:
        kind = jax.devices()[0].device_kind.lower()
    except Exception:  # pragma: no cover - conservative fallback
        kind = ""
    blocks = 2 if "v7" in kind else 1
    # Safety: tiles must evenly divide the batch and be sublane-friendly.
    if blocks > 1 and (batch % blocks != 0 or (batch // blocks) % 8 != 0):
        blocks = 1
    return blocks


def semiflow_forward(u, W, b, *, T=10, time_steps=10, num_blocks=None):
    """Semiflow.forward(u) -> x(T).

    u: (B, D), W: (D, D) nn.Linear weight (applied as x @ W.T + b), b: (D,).
    """
    assert time_steps >= 2, "time_steps must be >= 2 (dt = T/(time_steps-1))"
    B, D = u.shape

    if num_blocks is None:
        num_blocks = _num_tc_blocks(B)
    batch_tile = B // num_blocks

    # Pad the feature dim to a multiple of 128 (lane-dense loads/stores, full
    # MXU K/N).  Exact: zero-padded Wt rows/cols and zero bias keep padded
    # lanes identically 0 through tanh and the RK update.
    Dp = max(128, ((D + 127) // 128) * 128)
    u32 = u.astype(jnp.float32)
    Wt = W.astype(jnp.float32).T  # (in, out) so kernel does x @ Wt + b
    u_p = jnp.zeros((B, Dp), jnp.float32).at[:, :D].set(u32)
    Wt_p = jnp.zeros((Dp, Dp), jnp.float32).at[:D, :D].set(Wt)
    b_p = jnp.zeros((1, Dp), jnp.float32).at[0, :D].set(b.astype(jnp.float32))

    kernel = functools.partial(_semiflow_kernel, T=T, time_steps=time_steps)

    out_p = pl.pallas_call(
        kernel,
        out_shape=jax.ShapeDtypeStruct((B, Dp), jnp.float32),
        grid=(num_blocks,),
        in_specs=[
            pl.BlockSpec((batch_tile, Dp), lambda i: (i, 0)),  # u tile
            pl.BlockSpec((Dp, Dp), lambda i: (0, 0)),          # Wt (shared)
            pl.BlockSpec((1, Dp), lambda i: (0, 0)),           # bias (shared)
        ],
        out_specs=pl.BlockSpec((batch_tile, Dp), lambda i: (i, 0)),
        compiler_params=pltpu.CompilerParams(
            dimension_semantics=("parallel",)),
    )(u_p, Wt_p, b_p)

    return out_p[:, :D]


def _reference_forward(u, W, b, *, T=10, time_steps=10):
    """Pure-JAX reference (same fixed-step dopri5) for a sanity check."""
    dt = T / (time_steps - 1)

    def f(x):
        return jnp.tanh(x @ W.T + b)

    a = dict(
        a21=1 / 5, a31=3 / 40, a32=9 / 40, a41=44 / 45, a42=-56 / 15,
        a43=32 / 9, a51=19372 / 6561, a52=-25360 / 2187, a53=64448 / 6561,
        a54=-212 / 729, a61=9017 / 3168, a62=-355 / 33, a63=46732 / 5247,
        a64=49 / 176, a65=-5103 / 18656,
    )
    bw = (35 / 384, 0.0, 500 / 1113, 125 / 192, -2187 / 6784, 11 / 84)
    x = u
    for _ in range(time_steps - 1):
        k1 = f(x)
        k2 = f(x + dt * a["a21"] * k1)
        k3 = f(x + dt * (a["a31"] * k1 + a["a32"] * k2))
        k4 = f(x + dt * (a["a41"] * k1 + a["a42"] * k2 + a["a43"] * k3))
        k5 = f(x + dt * (a["a51"] * k1 + a["a52"] * k2 + a["a53"] * k3
                         + a["a54"] * k4))
        k6 = f(x + dt * (a["a61"] * k1 + a["a62"] * k2 + a["a63"] * k3
                         + a["a64"] * k4 + a["a65"] * k5))
        x = x + dt * (bw[0] * k1 + bw[2] * k3 + bw[3] * k4 + bw[4] * k5
                      + bw[5] * k6)
    return x


if __name__ == "__main__":
    key = jax.random.PRNGKey(0)
    k_u, k_w, k_b = jax.random.split(key, 3)

    B, D = 16, 32           # batch, hidden dim (small, kernel-friendly)
    T, time_steps = 10, 10  # Semiflow defaults

    u = jax.random.normal(k_u, (B, D), dtype=jnp.float32)
    # Deterministic nn.Linear-style init (scaled so T=10 integration is tame).
    W = jax.random.normal(k_w, (D, D), dtype=jnp.float32) / jnp.sqrt(D)
    b = 0.1 * jax.random.normal(k_b, (D,), dtype=jnp.float32)

    out = semiflow_forward(u, W, b, T=T, time_steps=time_steps)
    out = jax.block_until_ready(out)

    ref = _reference_forward(u, W, b, T=T, time_steps=time_steps)
    assert out.shape == (B, D)
    assert jnp.allclose(out, ref, atol=1e-4, rtol=1e-4), "mismatch vs reference"

    print("KERNEL_OK")
</pallas_src>

<mosaic_0001>
module attributes {stable_mosaic.version = 11 : i64} {
  func.func @_semiflow_kernel(%arg0: i32, %arg1: memref<16x128xf32, #tpu.memory_space<vmem>>, %arg2: memref<128x128xf32, #tpu.memory_space<vmem>>, %arg3: memref<1x128xf32, #tpu.memory_space<vmem>>, %arg4: memref<16x128xf32, #tpu.memory_space<vmem>>) attributes {dimension_semantics = [#tpu.dimension_semantics<parallel>], iteration_bounds = array<i64: 1>, scalar_prefetch = 0 : i64, scratch_operands = 0 : i64, tpu.core_type = #tpu.core_type<tc>, window_params = [{transform_indices = @transform_0, window_bounds = array<i64: 16, 128>}, {pipeline_mode = #tpu.pipeline_mode<synchronous>, transform_indices = @transform_1, window_bounds = array<i64: 128, 128>}, {pipeline_mode = #tpu.pipeline_mode<synchronous>, transform_indices = @transform_2, window_bounds = array<i64: 1, 128>}, {transform_indices = @transform_3, window_bounds = array<i64: 16, 128>}]} {
    %c0 = arith.constant 0 : index
    %c0_0 = arith.constant 0 : index
    %0 = vector.load %arg1[%c0, %c0_0] : memref<16x128xf32, #tpu.memory_space<vmem>>, vector<16x128xf32>
    %c0_1 = arith.constant 0 : index
    %c0_2 = arith.constant 0 : index
    %1 = vector.load %arg2[%c0_1, %c0_2] : memref<128x128xf32, #tpu.memory_space<vmem>>, vector<128x128xf32>
    %c0_3 = arith.constant 0 : index
    %c0_4 = arith.constant 0 : index
    %2 = vector.load %arg3[%c0_3, %c0_4] : memref<1x128xf32, #tpu.memory_space<vmem>>, vector<1x128xf32>
    %3 = vector.shape_cast %2 : vector<1x128xf32> to vector<1x128xf32>
    %4 = vector.broadcast %3 : vector<1x128xf32> to vector<16x128xf32>
    %c0_i32 = arith.constant 0 : i32
    %cst = arith.constant dense<0.000000e+00> : vector<16x128xf32>
    %5 = tpu.matmul %0, %1, %cst {dimension_numbers = #tpu.dot_dimension_numbers<[1], [0], [0], [1], [0, 0, 1, 1], [], []>} : vector<16x128xf32>, vector<128x128xf32>, vector<16x128xf32> -> vector<16x128xf32>
    %6 = arith.addf %5, %4 : vector<16x128xf32>
    %7 = math.tanh %6 : vector<16x128xf32>
    %cst_5 = arith.constant 0.222222224 : f32
    %8 = vector.broadcast %cst_5 : f32 to vector<16x128xf32>
    %9 = arith.mulf %8, %7 : vector<16x128xf32>
    %10 = arith.addf %0, %9 : vector<16x128xf32>
    %cst_6 = arith.constant dense<0.000000e+00> : vector<16x128xf32>
    %11 = tpu.matmul %10, %1, %cst_6 {dimension_numbers = #tpu.dot_dimension_numbers<[1], [0], [0], [1], [0, 0, 1, 1], [], []>} : vector<16x128xf32>, vector<128x128xf32>, vector<16x128xf32> -> vector<16x128xf32>
    %12 = arith.addf %11, %4 : vector<16x128xf32>
    %13 = math.tanh %12 : vector<16x128xf32>
    %cst_7 = arith.constant 0.0833333358 : f32
    %14 = vector.broadcast %cst_7 : f32 to vector<16x128xf32>
    %15 = arith.mulf %14, %7 : vector<16x128xf32>
    %16 = arith.addf %0, %15 : vector<16x128xf32>
    %cst_8 = arith.constant 2.500000e-01 : f32
    %17 = vector.broadcast %cst_8 : f32 to vector<16x128xf32>
    %18 = arith.mulf %17, %13 : vector<16x128xf32>
    %19 = arith.addf %16, %18 : vector<16x128xf32>
    %cst_9 = arith.constant dense<0.000000e+00> : vector<16x128xf32>
    %20 = tpu.matmul %19, %1, %cst_9 {dimension_numbers = #tpu.dot_dimension_numbers<[1], [0], [0], [1], [0, 0, 1, 1], [], []>} : vector<16x128xf32>, vector<128x128xf32>, vector<16x128xf32> -> vector<16x128xf32>
    %21 = arith.addf %20, %4 : vector<16x128xf32>
    %22 = math.tanh %21 : vector<16x128xf32>
    %cst_10 = arith.constant 1.0864197 : f32
    %23 = vector.broadcast %cst_10 : f32 to vector<16x128xf32>
    %24 = arith.mulf %23, %7 : vector<16x128xf32>
    %25 = arith.addf %0, %24 : vector<16x128xf32>
    %cst_11 = arith.constant -4.14814806 : f32
    %26 = vector.broadcast %cst_11 : f32 to vector<16x128xf32>
    %27 = arith.mulf %26, %13 : vector<16x128xf32>
    %28 = arith.addf %25, %27 : vector<16x128xf32>
    %cst_12 = arith.constant 3.95061731 : f32
    %29 = vector.broadcast %cst_12 : f32 to vector<16x128xf32>
    %30 = arith.mulf %29, %22 : vector<16x128xf32>
    %31 = arith.addf %28, %30 : vector<16x128xf32>
    %cst_13 = arith.constant dense<0.000000e+00> : vector<16x128xf32>
    %32 = tpu.matmul %31, %1, %cst_13 {dimension_numbers = #tpu.dot_dimension_numbers<[1], [0], [0], [1], [0, 0, 1, 1], [], []>} : vector<16x128xf32>, vector<128x128xf32>, vector<16x128xf32> -> vector<16x128xf32>
    %33 = arith.addf %32, %4 : vector<16x128xf32>
    %34 = math.tanh %33 : vector<16x128xf32>
    %cst_14 = arith.constant 3.28066516 : f32
    %35 = vector.broadcast %cst_14 : f32 to vector<16x128xf32>
    %36 = arith.mulf %35, %7 : vector<16x128xf32>
    %37 = arith.addf %0, %36 : vector<16x128xf32>
    %cst_15 = arith.constant -12.8842144 : f32
    %38 = vector.broadcast %cst_15 : f32 to vector<16x128xf32>
    %39 = arith.mulf %38, %13 : vector<16x128xf32>
    %40 = arith.addf %37, %39 : vector<16x128xf32>
    %cst_16 = arith.constant 10.9143257 : f32
    %41 = vector.broadcast %cst_16 : f32 to vector<16x128xf32>
    %42 = arith.mulf %41, %22 : vector<16x128xf32>
    %43 = arith.addf %40, %42 : vector<16x128xf32>
    %cst_17 = arith.constant -0.323121488 : f32
    %44 = vector.broadcast %cst_17 : f32 to vector<16x128xf32>
    %45 = arith.mulf %44, %34 : vector<16x128xf32>
    %46 = arith.addf %43, %45 : vector<16x128xf32>
    %cst_18 = arith.constant dense<0.000000e+00> : vector<16x128xf32>
    %47 = tpu.matmul %46, %1, %cst_18 {dimension_numbers = #tpu.dot_dimension_numbers<[1], [0], [0], [1], [0, 0, 1, 1], [], []>} : vector<16x128xf32>, vector<128x128xf32>, vector<16x128xf32> -> vector<16x128xf32>
    %48 = arith.addf %47, %4 : vector<16x128xf32>
    %49 = math.tanh %48 : vector<16x128xf32>
    %cst_19 = arith.constant 3.16252804 : f32
    %50 = vector.broadcast %cst_19 : f32 to vector<16x128xf32>
    %51 = arith.mulf %50, %7 : vector<16x128xf32>
    %52 = arith.addf %0, %51 : vector<16x128xf32>
    %cst_20 = arith.constant -11.9528618 : f32
    %53 = vector.broadcast %cst_20 : f32 to vector<16x128xf32>
    %54 = arith.mulf %53, %13 : vector<16x128xf32>
    %55 = arith.addf %52, %54 : vector<16x128xf32>
    %cst_21 = arith.constant 9.89602565 : f32
    %56 = vector.broadcast %cst_21 : f32 to vector<16x128xf32>
    %57 = arith.mulf %56, %22 : vector<16x128xf32>
    %58 = arith.addf %55, %57 : vector<16x128xf32>
    %cst_22 = arith.constant 0.309343427 : f32
    %59 = vector.broadcast %cst_22 : f32 to vector<16x128xf32>
    %60 = arith.mulf %59, %34 : vector<16x128xf32>
    %61 = arith.addf %58, %60 : vector<16x128xf32>
    %cst_23 = arith.constant -0.303923666 : f32
    %62 = vector.broadcast %cst_23 : f32 to vector<16x128xf32>
    %63 = arith.mulf %62, %49 : vector<16x128xf32>
    %64 = arith.addf %61, %63 : vector<16x128xf32>
    %cst_24 = arith.constant dense<0.000000e+00> : vector<16x128xf32>
    %65 = tpu.matmul %64, %1, %cst_24 {dimension_numbers = #tpu.dot_dimension_numbers<[1], [0], [0], [1], [0, 0, 1, 1], [], []>} : vector<16x128xf32>, vector<128x128xf32>, vector<16x128xf32> -> vector<16x128xf32>
    %66 = arith.addf %65, %4 : vector<16x128xf32>
    %67 = math.tanh %66 : vector<16x128xf32>
    %cst_25 = arith.constant 0.101273149 : f32
    %68 = vector.broadcast %cst_25 : f32 to vector<16x128xf32>
    %69 = arith.mulf %68, %7 : vector<16x128xf32>
    %70 = arith.addf %0, %69 : vector<16x128xf32>
    %cst_26 = arith.constant 0.499151438 : f32
    %71 = vector.broadcast %cst_26 : f32 to vector<16x128xf32>
    %72 = arith.mulf %71, %22 : vector<16x128xf32>
    %73 = arith.addf %70, %72 : vector<16x128xf32>
    %cst_27 = arith.constant 0.723379611 : f32
    %74 = vector.broadcast %cst_27 : f32 to vector<16x128xf32>
    %75 = arith.mulf %74, %34 : vector<16x128xf32>
    %76 = arith.addf %73, %75 : vector<16x128xf32>
    %cst_28 = arith.constant -0.358195752 : f32
    %77 = vector.broadcast %cst_28 : f32 to vector<16x128xf32>
    %78 = arith.mulf %77, %49 : vector<16x128xf32>
    %79 = arith.addf %76, %78 : vector<16x128xf32>
    %cst_29 = arith.constant 0.145502642 : f32
    %80 = vector.broadcast %cst_29 : f32 to vector<16x128xf32>
    %81 = arith.mulf %80, %67 : vector<16x128xf32>
    %82 = arith.addf %79, %81 : vector<16x128xf32>
    %c1_i32 = arith.constant 1 : i32
    %cst_30 = arith.constant dense<0.000000e+00> : vector<16x128xf32>
    %83 = tpu.matmul %82, %1, %cst_30 {dimension_numbers = #tpu.dot_dimension_numbers<[1], [0], [0], [1], [0, 0, 1, 1], [], []>} : vector<16x128xf32>, vector<128x128xf32>, vector<16x128xf32> -> vector<16x128xf32>
    %84 = arith.addf %83, %4 : vector<16x128xf32>
    %85 = math.tanh %84 : vector<16x128xf32>
    %cst_31 = arith.constant 0.222222224 : f32
    %86 = vector.broadcast %cst_31 : f32 to vector<16x128xf32>
    %87 = arith.mulf %86, %85 : vector<16x128xf32>
    %88 = arith.addf %82, %87 : vector<16x128xf32>
    %cst_32 = arith.constant dense<0.000000e+00> : vector<16x128xf32>
    %89 = tpu.matmul %88, %1, %cst_32 {dimension_numbers = #tpu.dot_dimension_numbers<[1], [0], [0], [1], [0, 0, 1, 1], [], []>} : vector<16x128xf32>, vector<128x128xf32>, vector<16x128xf32> -> vector<16x128xf32>
    %90 = arith.addf %89, %4 : vector<16x128xf32>
    %91 = math.tanh %90 : vector<16x128xf32>
    %cst_33 = arith.constant 0.0833333358 : f32
    %92 = vector.broadcast %cst_33 : f32 to vector<16x128xf32>
    %93 = arith.mulf %92, %85 : vector<16x128xf32>
    %94 = arith.addf %82, %93 : vector<16x128xf32>
    %cst_34 = arith.constant 2.500000e-01 : f32
    %95 = vector.broadcast %cst_34 : f32 to vector<16x128xf32>
    %96 = arith.mulf %95, %91 : vector<16x128xf32>
    %97 = arith.addf %94, %96 : vector<16x128xf32>
    %cst_35 = arith.constant dense<0.000000e+00> : vector<16x128xf32>
    %98 = tpu.matmul %97, %1, %cst_35 {dimension_numbers = #tpu.dot_dimension_numbers<[1], [0], [0], [1], [0, 0, 1, 1], [], []>} : vector<16x128xf32>, vector<128x128xf32>, vector<16x128xf32> -> vector<16x128xf32>
    %99 = arith.addf %98, %4 : vector<16x128xf32>
    %100 = math.tanh %99 : vector<16x128xf32>
    %cst_36 = arith.constant 1.0864197 : f32
    %101 = vector.broadcast %cst_36 : f32 to vector<16x128xf32>
    %102 = arith.mulf %101, %85 : vector<16x128xf32>
    %103 = arith.addf %82, %102 : vector<16x128xf32>
    %cst_37 = arith.constant -4.14814806 : f32
    %104 = vector.broadcast %cst_37 : f32 to vector<16x128xf32>
    %105 = arith.mulf %104, %91 : vector<16x128xf32>
    %106 = arith.addf %103, %105 : vector<16x128xf32>
    %cst_38 = arith.constant 3.95061731 : f32
    %107 = vector.broadcast %cst_38 : f32 to vector<16x128xf32>
    %108 = arith.mulf %107, %100 : vector<16x128xf32>
    %109 = arith.addf %106, %108 : vector<16x128xf32>
    %cst_39 = arith.constant dense<0.000000e+00> : vector<16x128xf32>
    %110 = tpu.matmul %109, %1, %cst_39 {dimension_numbers = #tpu.dot_dimension_numbers<[1], [0], [0], [1], [0, 0, 1, 1], [], []>} : vector<16x128xf32>, vector<128x128xf32>, vector<16x128xf32> -> vector<16x128xf32>
    %111 = arith.addf %110, %4 : vector<16x128xf32>
    %112 = math.tanh %111 : vector<16x128xf32>
    %cst_40 = arith.constant 3.28066516 : f32
    %113 = vector.broadcast %cst_40 : f32 to vector<16x128xf32>
    %114 = arith.mulf %113, %85 : vector<16x128xf32>
    %115 = arith.addf %82, %114 : vector<16x128xf32>
    %cst_41 = arith.constant -12.8842144 : f32
    %116 = vector.broadcast %cst_41 : f32 to vector<16x128xf32>
    %117 = arith.mulf %116, %91 : vector<16x128xf32>
    %118 = arith.addf %115, %117 : vector<16x128xf32>
    %cst_42 = arith.constant 10.9143257 : f32
    %119 = vector.broadcast %cst_42 : f32 to vector<16x128xf32>
    %120 = arith.mulf %119, %100 : vector<16x128xf32>
    %121 = arith.addf %118, %120 : vector<16x128xf32>
    %cst_43 = arith.constant -0.323121488 : f32
    %122 = vector.broadcast %cst_43 : f32 to vector<16x128xf32>
    %123 = arith.mulf %122, %112 : vector<16x128xf32>
    %124 = arith.addf %121, %123 : vector<16x128xf32>
    %cst_44 = arith.constant dense<0.000000e+00> : vector<16x128xf32>
    %125 = tpu.matmul %124, %1, %cst_44 {dimension_numbers = #tpu.dot_dimension_numbers<[1], [0], [0], [1], [0, 0, 1, 1], [], []>} : vector<16x128xf32>, vector<128x128xf32>, vector<16x128xf32> -> vector<16x128xf32>
    %126 = arith.addf %125, %4 : vector<16x128xf32>
    %127 = math.tanh %126 : vector<16x128xf32>
    %cst_45 = arith.constant 3.16252804 : f32
    %128 = vector.broadcast %cst_45 : f32 to vector<16x128xf32>
    %129 = arith.mulf %128, %85 : vector<16x128xf32>
    %130 = arith.addf %82, %129 : vector<16x128xf32>
    %cst_46 = arith.constant -11.9528618 : f32
    %131 = vector.broadcast %cst_46 : f32 to vector<16x128xf32>
    %132 = arith.mulf %131, %91 : vector<16x128xf32>
    %133 = arith.addf %130, %132 : vector<16x128xf32>
    %cst_47 = arith.constant 9.89602565 : f32
    %134 = vector.broadcast %cst_47 : f32 to vector<16x128xf32>
    %135 = arith.mulf %134, %100 : vector<16x128xf32>
    %136 = arith.addf %133, %135 : vector<16x128xf32>
    %cst_48 = arith.constant 0.309343427 : f32
    %137 = vector.broadcast %cst_48 : f32 to vector<16x128xf32>
    %138 = arith.mulf %137, %112 : vector<16x128xf32>
    %139 = arith.addf %136, %138 : vector<16x128xf32>
    %cst_49 = arith.constant -0.303923666 : f32
    %140 = vector.broadcast %cst_49 : f32 to vector<16x128xf32>
    %141 = arith.mulf %140, %127 : vector<16x128xf32>
    %142 = arith.addf %139, %141 : vector<16x128xf32>
    %cst_50 = arith.constant dense<0.000000e+00> : vector<16x128xf32>
    %143 = tpu.matmul %142, %1, %cst_50 {dimension_numbers = #tpu.dot_dimension_numbers<[1], [0], [0], [1], [0, 0, 1, 1], [], []>} : vector<16x128xf32>, vector<128x128xf32>, vector<16x128xf32> -> vector<16x128xf32>
    %144 = arith.addf %143, %4 : vector<16x128xf32>
    %145 = math.tanh %144 : vector<16x128xf32>
    %cst_51 = arith.constant 0.101273149 : f32
    %146 = vector.broadcast %cst_51 : f32 to vector<16x128xf32>
    %147 = arith.mulf %146, %85 : vector<16x128xf32>
    %148 = arith.addf %82, %147 : vector<16x128xf32>
    %cst_52 = arith.constant 0.499151438 : f32
    %149 = vector.broadcast %cst_52 : f32 to vector<16x128xf32>
    %150 = arith.mulf %149, %100 : vector<16x128xf32>
    %151 = arith.addf %148, %150 : vector<16x128xf32>
    %cst_53 = arith.constant 0.723379611 : f32
    %152 = vector.broadcast %cst_53 : f32 to vector<16x128xf32>
    %153 = arith.mulf %152, %112 : vector<16x128xf32>
    %154 = arith.addf %151, %153 : vector<16x128xf32>
    %cst_54 = arith.constant -0.358195752 : f32
    %155 = vector.broadcast %cst_54 : f32 to vector<16x128xf32>
    %156 = arith.mulf %155, %127 : vector<16x128xf32>
    %157 = arith.addf %154, %156 : vector<16x128xf32>
    %cst_55 = arith.constant 0.145502642 : f32
    %158 = vector.broadcast %cst_55 : f32 to vector<16x128xf32>
    %159 = arith.mulf %158, %145 : vector<16x128xf32>
    %160 = arith.addf %157, %159 : vector<16x128xf32>
    %c2_i32 = arith.constant 2 : i32
    %cst_56 = arith.constant dense<0.000000e+00> : vector<16x128xf32>
    %161 = tpu.matmul %160, %1, %cst_56 {dimension_numbers = #tpu.dot_dimension_numbers<[1], [0], [0], [1], [0, 0, 1, 1], [], []>} : vector<16x128xf32>, vector<128x128xf32>, vector<16x128xf32> -> vector<16x128xf32>
    %162 = arith.addf %161, %4 : vector<16x128xf32>
    %163 = math.tanh %162 : vector<16x128xf32>
    %cst_57 = arith.constant 0.222222224 : f32
    %164 = vector.broadcast %cst_57 : f32 to vector<16x128xf32>
    %165 = arith.mulf %164, %163 : vector<16x128xf32>
    %166 = arith.addf %160, %165 : vector<16x128xf32>
    %cst_58 = arith.constant dense<0.000000e+00> : vector<16x128xf32>
    %167 = tpu.matmul %166, %1, %cst_58 {dimension_numbers = #tpu.dot_dimension_numbers<[1], [0], [0], [1], [0, 0, 1, 1], [], []>} : vector<16x128xf32>, vector<128x128xf32>, vector<16x128xf32> -> vector<16x128xf32>
    %168 = arith.addf %167, %4 : vector<16x128xf32>
    %169 = math.tanh %168 : vector<16x128xf32>
    %cst_59 = arith.constant 0.0833333358 : f32
    %170 = vector.broadcast %cst_59 : f32 to vector<16x128xf32>
    %171 = arith.mulf %170, %163 : vector<16x128xf32>
    %172 = arith.addf %160, %171 : vector<16x128xf32>
    %cst_60 = arith.constant 2.500000e-01 : f32
    %173 = vector.broadcast %cst_60 : f32 to vector<16x128xf32>
    %174 = arith.mulf %173, %169 : vector<16x128xf32>
    %175 = arith.addf %172, %174 : vector<16x128xf32>
    %cst_61 = arith.constant dense<0.000000e+00> : vector<16x128xf32>
    %176 = tpu.matmul %175, %1, %cst_61 {dimension_numbers = #tpu.dot_dimension_numbers<[1], [0], [0], [1], [0, 0, 1, 1], [], []>} : vector<16x128xf32>, vector<128x128xf32>, vector<16x128xf32> -> vector<16x128xf32>
    %177 = arith.addf %176, %4 : vector<16x128xf32>
    %178 = math.tanh %177 : vector<16x128xf32>
    %cst_62 = arith.constant 1.0864197 : f32
    %179 = vector.broadcast %cst_62 : f32 to vector<16x128xf32>
    %180 = arith.mulf %179, %163 : vector<16x128xf32>
    %181 = arith.addf %160, %180 : vector<16x128xf32>
    %cst_63 = arith.constant -4.14814806 : f32
    %182 = vector.broadcast %cst_63 : f32 to vector<16x128xf32>
    %183 = arith.mulf %182, %169 : vector<16x128xf32>
    %184 = arith.addf %181, %183 : vector<16x128xf32>
    %cst_64 = arith.constant 3.95061731 : f32
    %185 = vector.broadcast %cst_64 : f32 to vector<16x128xf32>
    %186 = arith.mulf %185, %178 : vector<16x128xf32>
    %187 = arith.addf %184, %186 : vector<16x128xf32>
    %cst_65 = arith.constant dense<0.000000e+00> : vector<16x128xf32>
    %188 = tpu.matmul %187, %1, %cst_65 {dimension_numbers = #tpu.dot_dimension_numbers<[1], [0], [0], [1], [0, 0, 1, 1], [], []>} : vector<16x128xf32>, vector<128x128xf32>, vector<16x128xf32> -> vector<16x128xf32>
    %189 = arith.addf %188, %4 : vector<16x128xf32>
    %190 = math.tanh %189 : vector<16x128xf32>
    %cst_66 = arith.constant 3.28066516 : f32
    %191 = vector.broadcast %cst_66 : f32 to vector<16x128xf32>
    %192 = arith.mulf %191, %163 : vector<16x128xf32>
    %193 = arith.addf %160, %192 : vector<16x128xf32>
    %cst_67 = arith.constant -12.8842144 : f32
    %194 = vector.broadcast %cst_67 : f32 to vector<16x128xf32>
    %195 = arith.mulf %194, %169 : vector<16x128xf32>
    %196 = arith.addf %193, %195 : vector<16x128xf32>
    %cst_68 = arith.constant 10.9143257 : f32
    %197 = vector.broadcast %cst_68 : f32 to vector<16x128xf32>
    %198 = arith.mulf %197, %178 : vector<16x128xf32>
    %199 = arith.addf %196, %198 : vector<16x128xf32>
    %cst_69 = arith.constant -0.323121488 : f32
    %200 = vector.broadcast %cst_69 : f32 to vector<16x128xf32>
    %201 = arith.mulf %200, %190 : vector<16x128xf32>
    %202 = arith.addf %199, %201 : vector<16x128xf32>
    %cst_70 = arith.constant dense<0.000000e+00> : vector<16x128xf32>
    %203 = tpu.matmul %202, %1, %cst_70 {dimension_numbers = #tpu.dot_dimension_numbers<[1], [0], [0], [1], [0, 0, 1, 1], [], []>} : vector<16x128xf32>, vector<128x128xf32>, vector<16x128xf32> -> vector<16x128xf32>
    %204 = arith.addf %203, %4 : vector<16x128xf32>
    %205 = math.tanh %204 : vector<16x128xf32>
    %cst_71 = arith.constant 3.16252804 : f32
    %206 = vector.broadcast %cst_71 : f32 to vector<16x128xf32>
    %207 = arith.mulf %206, %163 : vector<16x128xf32>
    %208 = arith.addf %160, %207 : vector<16x128xf32>
    %cst_72 = arith.constant -11.9528618 : f32
    %209 = vector.broadcast %cst_72 : f32 to vector<16x128xf32>
    %210 = arith.mulf %209, %169 : vector<16x128xf32>
    %211 = arith.addf %208, %210 : vector<16x128xf32>
    %cst_73 = arith.constant 9.89602565 : f32
    %212 = vector.broadcast %cst_73 : f32 to vector<16x128xf32>
    %213 = arith.mulf %212, %178 : vector<16x128xf32>
    %214 = arith.addf %211, %213 : vector<16x128xf32>
    %cst_74 = arith.constant 0.309343427 : f32
    %215 = vector.broadcast %cst_74 : f32 to vector<16x128xf32>
    %216 = arith.mulf %215, %190 : vector<16x128xf32>
    %217 = arith.addf %214, %216 : vector<16x128xf32>
    %cst_75 = arith.constant -0.303923666 : f32
    %218 = vector.broadcast %cst_75 : f32 to vector<16x128xf32>
    %219 = arith.mulf %218, %205 : vector<16x128xf32>
    %220 = arith.addf %217, %219 : vector<16x128xf32>
    %cst_76 = arith.constant dense<0.000000e+00> : vector<16x128xf32>
    %221 = tpu.matmul %220, %1, %cst_76 {dimension_numbers = #tpu.dot_dimension_numbers<[1], [0], [0], [1], [0, 0, 1, 1], [], []>} : vector<16x128xf32>, vector<128x128xf32>, vector<16x128xf32> -> vector<16x128xf32>
    %222 = arith.addf %221, %4 : vector<16x128xf32>
    %223 = math.tanh %222 : vector<16x128xf32>
    %cst_77 = arith.constant 0.101273149 : f32
    %224 = vector.broadcast %cst_77 : f32 to vector<16x128xf32>
    %225 = arith.mulf %224, %163 : vector<16x128xf32>
    %226 = arith.addf %160, %225 : vector<16x128xf32>
    %cst_78 = arith.constant 0.499151438 : f32
    %227 = vector.broadcast %cst_78 : f32 to vector<16x128xf32>
    %228 = arith.mulf %227, %178 : vector<16x128xf32>
    %229 = arith.addf %226, %228 : vector<16x128xf32>
    %cst_79 = arith.constant 0.723379611 : f32
    %230 = vector.broadcast %cst_79 : f32 to vector<16x128xf32>
    %231 = arith.mulf %230, %190 : vector<16x128xf32>
    %232 = arith.addf %229, %231 : vector<16x128xf32>
    %cst_80 = arith.constant -0.358195752 : f32
    %233 = vector.broadcast %cst_80 : f32 to vector<16x128xf32>
    %234 = arith.mulf %233, %205 : vector<16x128xf32>
    %235 = arith.addf %232, %234 : vector<16x128xf32>
    %cst_81 = arith.constant 0.145502642 : f32
    %236 = vector.broadcast %cst_81 : f32 to vector<16x128xf32>
    %237 = arith.mulf %236, %223 : vector<16x128xf32>
    %238 = arith.addf %235, %237 : vector<16x128xf32>
    %c3_i32 = arith.constant 3 : i32
    %cst_82 = arith.constant dense<0.000000e+00> : vector<16x128xf32>
    %239 = tpu.matmul %238, %1, %cst_82 {dimension_numbers = #tpu.dot_dimension_numbers<[1], [0], [0], [1], [0, 0, 1, 1], [], []>} : vector<16x128xf32>, vector<128x128xf32>, vector<16x128xf32> -> vector<16x128xf32>
    %240 = arith.addf %239, %4 : vector<16x128xf32>
    %241 = math.tanh %240 : vector<16x128xf32>
    %cst_83 = arith.constant 0.222222224 : f32
    %242 = vector.broadcast %cst_83 : f32 to vector<16x128xf32>
    %243 = arith.mulf %242, %241 : vector<16x128xf32>
    %244 = arith.addf %238, %243 : vector<16x128xf32>
    %cst_84 = arith.constant dense<0.000000e+00> : vector<16x128xf32>
    %245 = tpu.matmul %244, %1, %cst_84 {dimension_numbers = #tpu.dot_dimension_numbers<[1], [0], [0], [1], [0, 0, 1, 1], [], []>} : vector<16x128xf32>, vector<128x128xf32>, vector<16x128xf32> -> vector<16x128xf32>
    %246 = arith.addf %245, %4 : vector<16x128xf32>
    %247 = math.tanh %246 : vector<16x128xf32>
    %cst_85 = arith.constant 0.0833333358 : f32
    %248 = vector.broadcast %cst_85 : f32 to vector<16x128xf32>
    %249 = arith.mulf %248, %241 : vector<16x128xf32>
    %250 = arith.addf %238, %249 : vector<16x128xf32>
    %cst_86 = arith.constant 2.500000e-01 : f32
    %251 = vector.broadcast %cst_86 : f32 to vector<16x128xf32>
    %252 = arith.mulf %251, %247 : vector<16x128xf32>
    %253 = arith.addf %250, %252 : vector<16x128xf32>
    %cst_87 = arith.constant dense<0.000000e+00> : vector<16x128xf32>
    %254 = tpu.matmul %253, %1, %cst_87 {dimension_numbers = #tpu.dot_dimension_numbers<[1], [0], [0], [1], [0, 0, 1, 1], [], []>} : vector<16x128xf32>, vector<128x128xf32>, vector<16x128xf32> -> vector<16x128xf32>
    %255 = arith.addf %254, %4 : vector<16x128xf32>
    %256 = math.tanh %255 : vector<16x128xf32>
    %cst_88 = arith.constant 1.0864197 : f32
    %257 = vector.broadcast %cst_88 : f32 to vector<16x128xf32>
    %258 = arith.mulf %257, %241 : vector<16x128xf32>
    %259 = arith.addf %238, %258 : vector<16x128xf32>
    %cst_89 = arith.constant -4.14814806 : f32
    %260 = vector.broadcast %cst_89 : f32 to vector<16x128xf32>
    %261 = arith.mulf %260, %247 : vector<16x128xf32>
    %262 = arith.addf %259, %261 : vector<16x128xf32>
    %cst_90 = arith.constant 3.95061731 : f32
    %263 = vector.broadcast %cst_90 : f32 to vector<16x128xf32>
    %264 = arith.mulf %263, %256 : vector<16x128xf32>
    %265 = arith.addf %262, %264 : vector<16x128xf32>
    %cst_91 = arith.constant dense<0.000000e+00> : vector<16x128xf32>
    %266 = tpu.matmul %265, %1, %cst_91 {dimension_numbers = #tpu.dot_dimension_numbers<[1], [0], [0], [1], [0, 0, 1, 1], [], []>} : vector<16x128xf32>, vector<128x128xf32>, vector<16x128xf32> -> vector<16x128xf32>
    %267 = arith.addf %266, %4 : vector<16x128xf32>
    %268 = math.tanh %267 : vector<16x128xf32>
    %cst_92 = arith.constant 3.28066516 : f32
    %269 = vector.broadcast %cst_92 : f32 to vector<16x128xf32>
    %270 = arith.mulf %269, %241 : vector<16x128xf32>
    %271 = arith.addf %238, %270 : vector<16x128xf32>
    %cst_93 = arith.constant -12.8842144 : f32
    %272 = vector.broadcast %cst_93 : f32 to vector<16x128xf32>
    %273 = arith.mulf %272, %247 : vector<16x128xf32>
    %274 = arith.addf %271, %273 : vector<16x128xf32>
    %cst_94 = arith.constant 10.9143257 : f32
    %275 = vector.broadcast %cst_94 : f32 to vector<16x128xf32>
    %276 = arith.mulf %275, %256 : vector<16x128xf32>
    %277 = arith.addf %274, %276 : vector<16x128xf32>
    %cst_95 = arith.constant -0.323121488 : f32
    %278 = vector.broadcast %cst_95 : f32 to vector<16x128xf32>
    %279 = arith.mulf %278, %268 : vector<16x128xf32>
    %280 = arith.addf %277, %279 : vector<16x128xf32>
    %cst_96 = arith.constant dense<0.000000e+00> : vector<16x128xf32>
    %281 = tpu.matmul %280, %1, %cst_96 {dimension_numbers = #tpu.dot_dimension_numbers<[1], [0], [0], [1], [0, 0, 1, 1], [], []>} : vector<16x128xf32>, vector<128x128xf32>, vector<16x128xf32> -> vector<16x128xf32>
    %282 = arith.addf %281, %4 : vector<16x128xf32>
    %283 = math.tanh %282 : vector<16x128xf32>
    %cst_97 = arith.constant 3.16252804 : f32
    %284 = vector.broadcast %cst_97 : f32 to vector<16x128xf32>
    %285 = arith.mulf %284, %241 : vector<16x128xf32>
    %286 = arith.addf %238, %285 : vector<16x128xf32>
    %cst_98 = arith.constant -11.9528618 : f32
    %287 = vector.broadcast %cst_98 : f32 to vector<16x128xf32>
    %288 = arith.mulf %287, %247 : vector<16x128xf32>
    %289 = arith.addf %286, %288 : vector<16x128xf32>
    %cst_99 = arith.constant 9.89602565 : f32
    %290 = vector.broadcast %cst_99 : f32 to vector<16x128xf32>
    %291 = arith.mulf %290, %256 : vector<16x128xf32>
    %292 = arith.addf %289, %291 : vector<16x128xf32>
    %cst_100 = arith.constant 0.309343427 : f32
    %293 = vector.broadcast %cst_100 : f32 to vector<16x128xf32>
    %294 = arith.mulf %293, %268 : vector<16x128xf32>
    %295 = arith.addf %292, %294 : vector<16x128xf32>
    %cst_101 = arith.constant -0.303923666 : f32
    %296 = vector.broadcast %cst_101 : f32 to vector<16x128xf32>
    %297 = arith.mulf %296, %283 : vector<16x128xf32>
    %298 = arith.addf %295, %297 : vector<16x128xf32>
    %cst_102 = arith.constant dense<0.000000e+00> : vector<16x128xf32>
    %299 = tpu.matmul %298, %1, %cst_102 {dimension_numbers = #tpu.dot_dimension_numbers<[1], [0], [0], [1], [0, 0, 1, 1], [], []>} : vector<16x128xf32>, vector<128x128xf32>, vector<16x128xf32> -> vector<16x128xf32>
    %300 = arith.addf %299, %4 : vector<16x128xf32>
    %301 = math.tanh %300 : vector<16x128xf32>
    %cst_103 = arith.constant 0.101273149 : f32
    %302 = vector.broadcast %cst_103 : f32 to vector<16x128xf32>
    %303 = arith.mulf %302, %241 : vector<16x128xf32>
    %304 = arith.addf %238, %303 : vector<16x128xf32>
    %cst_104 = arith.constant 0.499151438 : f32
    %305 = vector.broadcast %cst_104 : f32 to vector<16x128xf32>
    %306 = arith.mulf %305, %256 : vector<16x128xf32>
    %307 = arith.addf %304, %306 : vector<16x128xf32>
    %cst_105 = arith.constant 0.723379611 : f32
    %308 = vector.broadcast %cst_105 : f32 to vector<16x128xf32>
    %309 = arith.mulf %308, %268 : vector<16x128xf32>
    %310 = arith.addf %307, %309 : vector<16x128xf32>
    %cst_106 = arith.constant -0.358195752 : f32
    %311 = vector.broadcast %cst_106 : f32 to vector<16x128xf32>
    %312 = arith.mulf %311, %283 : vector<16x128xf32>
    %313 = arith.addf %310, %312 : vector<16x128xf32>
    %cst_107 = arith.constant 0.145502642 : f32
    %314 = vector.broadcast %cst_107 : f32 to vector<16x128xf32>
    %315 = arith.mulf %314, %301 : vector<16x128xf32>
    %316 = arith.addf %313, %315 : vector<16x128xf32>
    %c4_i32 = arith.constant 4 : i32
    %cst_108 = arith.constant dense<0.000000e+00> : vector<16x128xf32>
    %317 = tpu.matmul %316, %1, %cst_108 {dimension_numbers = #tpu.dot_dimension_numbers<[1], [0], [0], [1], [0, 0, 1, 1], [], []>} : vector<16x128xf32>, vector<128x128xf32>, vector<16x128xf32> -> vector<16x128xf32>
    %318 = arith.addf %317, %4 : vector<16x128xf32>
    %319 = math.tanh %318 : vector<16x128xf32>
    %cst_109 = arith.constant 0.222222224 : f32
    %320 = vector.broadcast %cst_109 : f32 to vector<16x128xf32>
    %321 = arith.mulf %320, %319 : vector<16x128xf32>
    %322 = arith.addf %316, %321 : vector<16x128xf32>
    %cst_110 = arith.constant dense<0.000000e+00> : vector<16x128xf32>
    %323 = tpu.matmul %322, %1, %cst_110 {dimension_numbers = #tpu.dot_dimension_numbers<[1], [0], [0], [1], [0, 0, 1, 1], [], []>} : vector<16x128xf32>, vector<128x128xf32>, vector<16x128xf32> -> vector<16x128xf32>
    %324 = arith.addf %323, %4 : vector<16x128xf32>
    %325 = math.tanh %324 : vector<16x128xf32>
    %cst_111 = arith.constant 0.0833333358 : f32
    %326 = vector.broadcast %cst_111 : f32 to vector<16x128xf32>
    %327 = arith.mulf %326, %319 : vector<16x128xf32>
    %328 = arith.addf %316, %327 : vector<16x128xf32>
    %cst_112 = arith.constant 2.500000e-01 : f32
    %329 = vector.broadcast %cst_112 : f32 to vector<16x128xf32>
    %330 = arith.mulf %329, %325 : vector<16x128xf32>
    %331 = arith.addf %328, %330 : vector<16x128xf32>
    %cst_113 = arith.constant dense<0.000000e+00> : vector<16x128xf32>
    %332 = tpu.matmul %331, %1, %cst_113 {dimension_numbers = #tpu.dot_dimension_numbers<[1], [0], [0], [1], [0, 0, 1, 1], [], []>} : vector<16x128xf32>, vector<128x128xf32>, vector<16x128xf32> -> vector<16x128xf32>
    %333 = arith.addf %332, %4 : vector<16x128xf32>
    %334 = math.tanh %333 : vector<16x128xf32>
    %cst_114 = arith.constant 1.0864197 : f32
    %335 = vector.broadcast %cst_114 : f32 to vector<16x128xf32>
    %336 = arith.mulf %335, %319 : vector<16x128xf32>
    %337 = arith.addf %316, %336 : vector<16x128xf32>
    %cst_115 = arith.constant -4.14814806 : f32
    %338 = vector.broadcast %cst_115 : f32 to vector<16x128xf32>
    %339 = arith.mulf %338, %325 : vector<16x128xf32>
    %340 = arith.addf %337, %339 : vector<16x128xf32>
    %cst_116 = arith.constant 3.95061731 : f32
    %341 = vector.broadcast %cst_116 : f32 to vector<16x128xf32>
    %342 = arith.mulf %341, %334 : vector<16x128xf32>
    %343 = arith.addf %340, %342 : vector<16x128xf32>
    %cst_117 = arith.constant dense<0.000000e+00> : vector<16x128xf32>
    %344 = tpu.matmul %343, %1, %cst_117 {dimension_numbers = #tpu.dot_dimension_numbers<[1], [0], [0], [1], [0, 0, 1, 1], [], []>} : vector<16x128xf32>, vector<128x128xf32>, vector<16x128xf32> -> vector<16x128xf32>
    %345 = arith.addf %344, %4 : vector<16x128xf32>
    %346 = math.tanh %345 : vector<16x128xf32>
    %cst_118 = arith.constant 3.28066516 : f32
    %347 = vector.broadcast %cst_118 : f32 to vector<16x128xf32>
    %348 = arith.mulf %347, %319 : vector<16x128xf32>
    %349 = arith.addf %316, %348 : vector<16x128xf32>
    %cst_119 = arith.constant -12.8842144 : f32
    %350 = vector.broadcast %cst_119 : f32 to vector<16x128xf32>
    %351 = arith.mulf %350, %325 : vector<16x128xf32>
    %352 = arith.addf %349, %351 : vector<16x128xf32>
    %cst_120 = arith.constant 10.9143257 : f32
    %353 = vector.broadcast %cst_120 : f32 to vector<16x128xf32>
    %354 = arith.mulf %353, %334 : vector<16x128xf32>
    %355 = arith.addf %352, %354 : vector<16x128xf32>
    %cst_121 = arith.constant -0.323121488 : f32
    %356 = vector.broadcast %cst_121 : f32 to vector<16x128xf32>
    %357 = arith.mulf %356, %346 : vector<16x128xf32>
    %358 = arith.addf %355, %357 : vector<16x128xf32>
    %cst_122 = arith.constant dense<0.000000e+00> : vector<16x128xf32>
    %359 = tpu.matmul %358, %1, %cst_122 {dimension_numbers = #tpu.dot_dimension_numbers<[1], [0], [0], [1], [0, 0, 1, 1], [], []>} : vector<16x128xf32>, vector<128x128xf32>, vector<16x128xf32> -> vector<16x128xf32>
    %360 = arith.addf %359, %4 : vector<16x128xf32>
    %361 = math.tanh %360 : vector<16x128xf32>
    %cst_123 = arith.constant 3.16252804 : f32
    %362 = vector.broadcast %cst_123 : f32 to vector<16x128xf32>
    %363 = arith.mulf %362, %319 : vector<16x128xf32>
    %364 = arith.addf %316, %363 : vector<16x128xf32>
    %cst_124 = arith.constant -11.9528618 : f32
    %365 = vector.broadcast %cst_124 : f32 to vector<16x128xf32>
    %366 = arith.mulf %365, %325 : vector<16x128xf32>
    %367 = arith.addf %364, %366 : vector<16x128xf32>
    %cst_125 = arith.constant 9.89602565 : f32
    %368 = vector.broadcast %cst_125 : f32 to vector<16x128xf32>
    %369 = arith.mulf %368, %334 : vector<16x128xf32>
    %370 = arith.addf %367, %369 : vector<16x128xf32>
    %cst_126 = arith.constant 0.309343427 : f32
    %371 = vector.broadcast %cst_126 : f32 to vector<16x128xf32>
    %372 = arith.mulf %371, %346 : vector<16x128xf32>
    %373 = arith.addf %370, %372 : vector<16x128xf32>
    %cst_127 = arith.constant -0.303923666 : f32
    %374 = vector.broadcast %cst_127 : f32 to vector<16x128xf32>
    %375 = arith.mulf %374, %361 : vector<16x128xf32>
    %376 = arith.addf %373, %375 : vector<16x128xf32>
    %cst_128 = arith.constant dense<0.000000e+00> : vector<16x128xf32>
    %377 = tpu.matmul %376, %1, %cst_128 {dimension_numbers = #tpu.dot_dimension_numbers<[1], [0], [0], [1], [0, 0, 1, 1], [], []>} : vector<16x128xf32>, vector<128x128xf32>, vector<16x128xf32> -> vector<16x128xf32>
    %378 = arith.addf %377, %4 : vector<16x128xf32>
    %379 = math.tanh %378 : vector<16x128xf32>
    %cst_129 = arith.constant 0.101273149 : f32
    %380 = vector.broadcast %cst_129 : f32 to vector<16x128xf32>
    %381 = arith.mulf %380, %319 : vector<16x128xf32>
    %382 = arith.addf %316, %381 : vector<16x128xf32>
    %cst_130 = arith.constant 0.499151438 : f32
    %383 = vector.broadcast %cst_130 : f32 to vector<16x128xf32>
    %384 = arith.mulf %383, %334 : vector<16x128xf32>
    %385 = arith.addf %382, %384 : vector<16x128xf32>
    %cst_131 = arith.constant 0.723379611 : f32
    %386 = vector.broadcast %cst_131 : f32 to vector<16x128xf32>
    %387 = arith.mulf %386, %346 : vector<16x128xf32>
    %388 = arith.addf %385, %387 : vector<16x128xf32>
    %cst_132 = arith.constant -0.358195752 : f32
    %389 = vector.broadcast %cst_132 : f32 to vector<16x128xf32>
    %390 = arith.mulf %389, %361 : vector<16x128xf32>
    %391 = arith.addf %388, %390 : vector<16x128xf32>
    %cst_133 = arith.constant 0.145502642 : f32
    %392 = vector.broadcast %cst_133 : f32 to vector<16x128xf32>
    %393 = arith.mulf %392, %379 : vector<16x128xf32>
    %394 = arith.addf %391, %393 : vector<16x128xf32>
    %c5_i32 = arith.constant 5 : i32
    %cst_134 = arith.constant dense<0.000000e+00> : vector<16x128xf32>
    %395 = tpu.matmul %394, %1, %cst_134 {dimension_numbers = #tpu.dot_dimension_numbers<[1], [0], [0], [1], [0, 0, 1, 1], [], []>} : vector<16x128xf32>, vector<128x128xf32>, vector<16x128xf32> -> vector<16x128xf32>
    %396 = arith.addf %395, %4 : vector<16x128xf32>
    %397 = math.tanh %396 : vector<16x128xf32>
    %cst_135 = arith.constant 0.222222224 : f32
    %398 = vector.broadcast %cst_135 : f32 to vector<16x128xf32>
    %399 = arith.mulf %398, %397 : vector<16x128xf32>
    %400 = arith.addf %394, %399 : vector<16x128xf32>
    %cst_136 = arith.constant dense<0.000000e+00> : vector<16x128xf32>
    %401 = tpu.matmul %400, %1, %cst_136 {dimension_numbers = #tpu.dot_dimension_numbers<[1], [0], [0], [1], [0, 0, 1, 1], [], []>} : vector<16x128xf32>, vector<128x128xf32>, vector<16x128xf32> -> vector<16x128xf32>
    %402 = arith.addf %401, %4 : vector<16x128xf32>
    %403 = math.tanh %402 : vector<16x128xf32>
    %cst_137 = arith.constant 0.0833333358 : f32
    %404 = vector.broadcast %cst_137 : f32 to vector<16x128xf32>
    %405 = arith.mulf %404, %397 : vector<16x128xf32>
    %406 = arith.addf %394, %405 : vector<16x128xf32>
    %cst_138 = arith.constant 2.500000e-01 : f32
    %407 = vector.broadcast %cst_138 : f32 to vector<16x128xf32>
    %408 = arith.mulf %407, %403 : vector<16x128xf32>
    %409 = arith.addf %406, %408 : vector<16x128xf32>
    %cst_139 = arith.constant dense<0.000000e+00> : vector<16x128xf32>
    %410 = tpu.matmul %409, %1, %cst_139 {dimension_numbers = #tpu.dot_dimension_numbers<[1], [0], [0], [1], [0, 0, 1, 1], [], []>} : vector<16x128xf32>, vector<128x128xf32>, vector<16x128xf32> -> vector<16x128xf32>
    %411 = arith.addf %410, %4 : vector<16x128xf32>
    %412 = math.tanh %411 : vector<16x128xf32>
    %cst_140 = arith.constant 1.0864197 : f32
    %413 = vector.broadcast %cst_140 : f32 to vector<16x128xf32>
    %414 = arith.mulf %413, %397 : vector<16x128xf32>
    %415 = arith.addf %394, %414 : vector<16x128xf32>
    %cst_141 = arith.constant -4.14814806 : f32
    %416 = vector.broadcast %cst_141 : f32 to vector<16x128xf32>
    %417 = arith.mulf %416, %403 : vector<16x128xf32>
    %418 = arith.addf %415, %417 : vector<16x128xf32>
    %cst_142 = arith.constant 3.95061731 : f32
    %419 = vector.broadcast %cst_142 : f32 to vector<16x128xf32>
    %420 = arith.mulf %419, %412 : vector<16x128xf32>
    %421 = arith.addf %418, %420 : vector<16x128xf32>
    %cst_143 = arith.constant dense<0.000000e+00> : vector<16x128xf32>
    %422 = tpu.matmul %421, %1, %cst_143 {dimension_numbers = #tpu.dot_dimension_numbers<[1], [0], [0], [1], [0, 0, 1, 1], [], []>} : vector<16x128xf32>, vector<128x128xf32>, vector<16x128xf32> -> vector<16x128xf32>
    %423 = arith.addf %422, %4 : vector<16x128xf32>
    %424 = math.tanh %423 : vector<16x128xf32>
    %cst_144 = arith.constant 3.28066516 : f32
    %425 = vector.broadcast %cst_144 : f32 to vector<16x128xf32>
    %426 = arith.mulf %425, %397 : vector<16x128xf32>
    %427 = arith.addf %394, %426 : vector<16x128xf32>
    %cst_145 = arith.constant -12.8842144 : f32
    %428 = vector.broadcast %cst_145 : f32 to vector<16x128xf32>
    %429 = arith.mulf %428, %403 : vector<16x128xf32>
    %430 = arith.addf %427, %429 : vector<16x128xf32>
    %cst_146 = arith.constant 10.9143257 : f32
    %431 = vector.broadcast %cst_146 : f32 to vector<16x128xf32>
    %432 = arith.mulf %431, %412 : vector<16x128xf32>
    %433 = arith.addf %430, %432 : vector<16x128xf32>
    %cst_147 = arith.constant -0.323121488 : f32
    %434 = vector.broadcast %cst_147 : f32 to vector<16x128xf32>
    %435 = arith.mulf %434, %424 : vector<16x128xf32>
    %436 = arith.addf %433, %435 : vector<16x128xf32>
    %cst_148 = arith.constant dense<0.000000e+00> : vector<16x128xf32>
    %437 = tpu.matmul %436, %1, %cst_148 {dimension_numbers = #tpu.dot_dimension_numbers<[1], [0], [0], [1], [0, 0, 1, 1], [], []>} : vector<16x128xf32>, vector<128x128xf32>, vector<16x128xf32> -> vector<16x128xf32>
    %438 = arith.addf %437, %4 : vector<16x128xf32>
    %439 = math.tanh %438 : vector<16x128xf32>
    %cst_149 = arith.constant 3.16252804 : f32
    %440 = vector.broadcast %cst_149 : f32 to vector<16x128xf32>
    %441 = arith.mulf %440, %397 : vector<16x128xf32>
    %442 = arith.addf %394, %441 : vector<16x128xf32>
    %cst_150 = arith.constant -11.9528618 : f32
    %443 = vector.broadcast %cst_150 : f32 to vector<16x128xf32>
    %444 = arith.mulf %443, %403 : vector<16x128xf32>
    %445 = arith.addf %442, %444 : vector<16x128xf32>
    %cst_151 = arith.constant 9.89602565 : f32
    %446 = vector.broadcast %cst_151 : f32 to vector<16x128xf32>
    %447 = arith.mulf %446, %412 : vector<16x128xf32>
    %448 = arith.addf %445, %447 : vector<16x128xf32>
    %cst_152 = arith.constant 0.309343427 : f32
    %449 = vector.broadcast %cst_152 : f32 to vector<16x128xf32>
    %450 = arith.mulf %449, %424 : vector<16x128xf32>
    %451 = arith.addf %448, %450 : vector<16x128xf32>
    %cst_153 = arith.constant -0.303923666 : f32
    %452 = vector.broadcast %cst_153 : f32 to vector<16x128xf32>
    %453 = arith.mulf %452, %439 : vector<16x128xf32>
    %454 = arith.addf %451, %453 : vector<16x128xf32>
    %cst_154 = arith.constant dense<0.000000e+00> : vector<16x128xf32>
    %455 = tpu.matmul %454, %1, %cst_154 {dimension_numbers = #tpu.dot_dimension_numbers<[1], [0], [0], [1], [0, 0, 1, 1], [], []>} : vector<16x128xf32>, vector<128x128xf32>, vector<16x128xf32> -> vector<16x128xf32>
    %456 = arith.addf %455, %4 : vector<16x128xf32>
    %457 = math.tanh %456 : vector<16x128xf32>
    %cst_155 = arith.constant 0.101273149 : f32
    %458 = vector.broadcast %cst_155 : f32 to vector<16x128xf32>
    %459 = arith.mulf %458, %397 : vector<16x128xf32>
    %460 = arith.addf %394, %459 : vector<16x128xf32>
    %cst_156 = arith.constant 0.499151438 : f32
    %461 = vector.broadcast %cst_156 : f32 to vector<16x128xf32>
    %462 = arith.mulf %461, %412 : vector<16x128xf32>
    %463 = arith.addf %460, %462 : vector<16x128xf32>
    %cst_157 = arith.constant 0.723379611 : f32
    %464 = vector.broadcast %cst_157 : f32 to vector<16x128xf32>
    %465 = arith.mulf %464, %424 : vector<16x128xf32>
    %466 = arith.addf %463, %465 : vector<16x128xf32>
    %cst_158 = arith.constant -0.358195752 : f32
    %467 = vector.broadcast %cst_158 : f32 to vector<16x128xf32>
    %468 = arith.mulf %467, %439 : vector<16x128xf32>
    %469 = arith.addf %466, %468 : vector<16x128xf32>
    %cst_159 = arith.constant 0.145502642 : f32
    %470 = vector.broadcast %cst_159 : f32 to vector<16x128xf32>
    %471 = arith.mulf %470, %457 : vector<16x128xf32>
    %472 = arith.addf %469, %471 : vector<16x128xf32>
    %c6_i32 = arith.constant 6 : i32
    %cst_160 = arith.constant dense<0.000000e+00> : vector<16x128xf32>
    %473 = tpu.matmul %472, %1, %cst_160 {dimension_numbers = #tpu.dot_dimension_numbers<[1], [0], [0], [1], [0, 0, 1, 1], [], []>} : vector<16x128xf32>, vector<128x128xf32>, vector<16x128xf32> -> vector<16x128xf32>
    %474 = arith.addf %473, %4 : vector<16x128xf32>
    %475 = math.tanh %474 : vector<16x128xf32>
    %cst_161 = arith.constant 0.222222224 : f32
    %476 = vector.broadcast %cst_161 : f32 to vector<16x128xf32>
    %477 = arith.mulf %476, %475 : vector<16x128xf32>
    %478 = arith.addf %472, %477 : vector<16x128xf32>
    %cst_162 = arith.constant dense<0.000000e+00> : vector<16x128xf32>
    %479 = tpu.matmul %478, %1, %cst_162 {dimension_numbers = #tpu.dot_dimension_numbers<[1], [0], [0], [1], [0, 0, 1, 1], [], []>} : vector<16x128xf32>, vector<128x128xf32>, vector<16x128xf32> -> vector<16x128xf32>
    %480 = arith.addf %479, %4 : vector<16x128xf32>
    %481 = math.tanh %480 : vector<16x128xf32>
    %cst_163 = arith.constant 0.0833333358 : f32
    %482 = vector.broadcast %cst_163 : f32 to vector<16x128xf32>
    %483 = arith.mulf %482, %475 : vector<16x128xf32>
    %484 = arith.addf %472, %483 : vector<16x128xf32>
    %cst_164 = arith.constant 2.500000e-01 : f32
    %485 = vector.broadcast %cst_164 : f32 to vector<16x128xf32>
    %486 = arith.mulf %485, %481 : vector<16x128xf32>
    %487 = arith.addf %484, %486 : vector<16x128xf32>
    %cst_165 = arith.constant dense<0.000000e+00> : vector<16x128xf32>
    %488 = tpu.matmul %487, %1, %cst_165 {dimension_numbers = #tpu.dot_dimension_numbers<[1], [0], [0], [1], [0, 0, 1, 1], [], []>} : vector<16x128xf32>, vector<128x128xf32>, vector<16x128xf32> -> vector<16x128xf32>
    %489 = arith.addf %488, %4 : vector<16x128xf32>
    %490 = math.tanh %489 : vector<16x128xf32>
    %cst_166 = arith.constant 1.0864197 : f32
    %491 = vector.broadcast %cst_166 : f32 to vector<16x128xf32>
    %492 = arith.mulf %491, %475 : vector<16x128xf32>
    %493 = arith.addf %472, %492 : vector<16x128xf32>
    %cst_167 = arith.constant -4.14814806 : f32
    %494 = vector.broadcast %cst_167 : f32 to vector<16x128xf32>
    %495 = arith.mulf %494, %481 : vector<16x128xf32>
    %496 = arith.addf %493, %495 : vector<16x128xf32>
    %cst_168 = arith.constant 3.95061731 : f32
    %497 = vector.broadcast %cst_168 : f32 to vector<16x128xf32>
    %498 = arith.mulf %497, %490 : vector<16x128xf32>
    %499 = arith.addf %496, %498 : vector<16x128xf32>
    %cst_169 = arith.constant dense<0.000000e+00> : vector<16x128xf32>
    %500 = tpu.matmul %499, %1, %cst_169 {dimension_numbers = #tpu.dot_dimension_numbers<[1], [0], [0], [1], [0, 0, 1, 1], [], []>} : vector<16x128xf32>, vector<128x128xf32>, vector<16x128xf32> -> vector<16x128xf32>
    %501 = arith.addf %500, %4 : vector<16x128xf32>
    %502 = math.tanh %501 : vector<16x128xf32>
    %cst_170 = arith.constant 3.28066516 : f32
    %503 = vector.broadcast %cst_170 : f32 to vector<16x128xf32>
    %504 = arith.mulf %503, %475 : vector<16x128xf32>
    %505 = arith.addf %472, %504 : vector<16x128xf32>
    %cst_171 = arith.constant -12.8842144 : f32
    %506 = vector.broadcast %cst_171 : f32 to vector<16x128xf32>
    %507 = arith.mulf %506, %481 : vector<16x128xf32>
    %508 = arith.addf %505, %507 : vector<16x128xf32>
    %cst_172 = arith.constant 10.9143257 : f32
    %509 = vector.broadcast %cst_172 : f32 to vector<16x128xf32>
    %510 = arith.mulf %509, %490 : vector<16x128xf32>
    %511 = arith.addf %508, %510 : vector<16x128xf32>
    %cst_173 = arith.constant -0.323121488 : f32
    %512 = vector.broadcast %cst_173 : f32 to vector<16x128xf32>
    %513 = arith.mulf %512, %502 : vector<16x128xf32>
    %514 = arith.addf %511, %513 : vector<16x128xf32>
    %cst_174 = arith.constant dense<0.000000e+00> : vector<16x128xf32>
    %515 = tpu.matmul %514, %1, %cst_174 {dimension_numbers = #tpu.dot_dimension_numbers<[1], [0], [0], [1], [0, 0, 1, 1], [], []>} : vector<16x128xf32>, vector<128x128xf32>, vector<16x128xf32> -> vector<16x128xf32>
    %516 = arith.addf %515, %4 : vector<16x128xf32>
    %517 = math.tanh %516 : vector<16x128xf32>
    %cst_175 = arith.constant 3.16252804 : f32
    %518 = vector.broadcast %cst_175 : f32 to vector<16x128xf32>
    %519 = arith.mulf %518, %475 : vector<16x128xf32>
    %520 = arith.addf %472, %519 : vector<16x128xf32>
    %cst_176 = arith.constant -11.9528618 : f32
    %521 = vector.broadcast %cst_176 : f32 to vector<16x128xf32>
    %522 = arith.mulf %521, %481 : vector<16x128xf32>
    %523 = arith.addf %520, %522 : vector<16x128xf32>
    %cst_177 = arith.constant 9.89602565 : f32
    %524 = vector.broadcast %cst_177 : f32 to vector<16x128xf32>
    %525 = arith.mulf %524, %490 : vector<16x128xf32>
    %526 = arith.addf %523, %525 : vector<16x128xf32>
    %cst_178 = arith.constant 0.309343427 : f32
    %527 = vector.broadcast %cst_178 : f32 to vector<16x128xf32>
    %528 = arith.mulf %527, %502 : vector<16x128xf32>
    %529 = arith.addf %526, %528 : vector<16x128xf32>
    %cst_179 = arith.constant -0.303923666 : f32
    %530 = vector.broadcast %cst_179 : f32 to vector<16x128xf32>
    %531 = arith.mulf %530, %517 : vector<16x128xf32>
    %532 = arith.addf %529, %531 : vector<16x128xf32>
    %cst_180 = arith.constant dense<0.000000e+00> : vector<16x128xf32>
    %533 = tpu.matmul %532, %1, %cst_180 {dimension_numbers = #tpu.dot_dimension_numbers<[1], [0], [0], [1], [0, 0, 1, 1], [], []>} : vector<16x128xf32>, vector<128x128xf32>, vector<16x128xf32> -> vector<16x128xf32>
    %534 = arith.addf %533, %4 : vector<16x128xf32>
    %535 = math.tanh %534 : vector<16x128xf32>
    %cst_181 = arith.constant 0.101273149 : f32
    %536 = vector.broadcast %cst_181 : f32 to vector<16x128xf32>
    %537 = arith.mulf %536, %475 : vector<16x128xf32>
    %538 = arith.addf %472, %537 : vector<16x128xf32>
    %cst_182 = arith.constant 0.499151438 : f32
    %539 = vector.broadcast %cst_182 : f32 to vector<16x128xf32>
    %540 = arith.mulf %539, %490 : vector<16x128xf32>
    %541 = arith.addf %538, %540 : vector<16x128xf32>
    %cst_183 = arith.constant 0.723379611 : f32
    %542 = vector.broadcast %cst_183 : f32 to vector<16x128xf32>
    %543 = arith.mulf %542, %502 : vector<16x128xf32>
    %544 = arith.addf %541, %543 : vector<16x128xf32>
    %cst_184 = arith.constant -0.358195752 : f32
    %545 = vector.broadcast %cst_184 : f32 to vector<16x128xf32>
    %546 = arith.mulf %545, %517 : vector<16x128xf32>
    %547 = arith.addf %544, %546 : vector<16x128xf32>
    %cst_185 = arith.constant 0.145502642 : f32
    %548 = vector.broadcast %cst_185 : f32 to vector<16x128xf32>
    %549 = arith.mulf %548, %535 : vector<16x128xf32>
    %550 = arith.addf %547, %549 : vector<16x128xf32>
    %c7_i32 = arith.constant 7 : i32
    %cst_186 = arith.constant dense<0.000000e+00> : vector<16x128xf32>
    %551 = tpu.matmul %550, %1, %cst_186 {dimension_numbers = #tpu.dot_dimension_numbers<[1], [0], [0], [1], [0, 0, 1, 1], [], []>} : vector<16x128xf32>, vector<128x128xf32>, vector<16x128xf32> -> vector<16x128xf32>
    %552 = arith.addf %551, %4 : vector<16x128xf32>
    %553 = math.tanh %552 : vector<16x128xf32>
    %cst_187 = arith.constant 0.222222224 : f32
    %554 = vector.broadcast %cst_187 : f32 to vector<16x128xf32>
    %555 = arith.mulf %554, %553 : vector<16x128xf32>
    %556 = arith.addf %550, %555 : vector<16x128xf32>
    %cst_188 = arith.constant dense<0.000000e+00> : vector<16x128xf32>
    %557 = tpu.matmul %556, %1, %cst_188 {dimension_numbers = #tpu.dot_dimension_numbers<[1], [0], [0], [1], [0, 0, 1, 1], [], []>} : vector<16x128xf32>, vector<128x128xf32>, vector<16x128xf32> -> vector<16x128xf32>
    %558 = arith.addf %557, %4 : vector<16x128xf32>
    %559 = math.tanh %558 : vector<16x128xf32>
    %cst_189 = arith.constant 0.0833333358 : f32
    %560 = vector.broadcast %cst_189 : f32 to vector<16x128xf32>
    %561 = arith.mulf %560, %553 : vector<16x128xf32>
    %562 = arith.addf %550, %561 : vector<16x128xf32>
    %cst_190 = arith.constant 2.500000e-01 : f32
    %563 = vector.broadcast %cst_190 : f32 to vector<16x128xf32>
    %564 = arith.mulf %563, %559 : vector<16x128xf32>
    %565 = arith.addf %562, %564 : vector<16x128xf32>
    %cst_191 = arith.constant dense<0.000000e+00> : vector<16x128xf32>
    %566 = tpu.matmul %565, %1, %cst_191 {dimension_numbers = #tpu.dot_dimension_numbers<[1], [0], [0], [1], [0, 0, 1, 1], [], []>} : vector<16x128xf32>, vector<128x128xf32>, vector<16x128xf32> -> vector<16x128xf32>
    %567 = arith.addf %566, %4 : vector<16x128xf32>
    %568 = math.tanh %567 : vector<16x128xf32>
    %cst_192 = arith.constant 1.0864197 : f32
    %569 = vector.broadcast %cst_192 : f32 to vector<16x128xf32>
    %570 = arith.mulf %569, %553 : vector<16x128xf32>
    %571 = arith.addf %550, %570 : vector<16x128xf32>
    %cst_193 = arith.constant -4.14814806 : f32
    %572 = vector.broadcast %cst_193 : f32 to vector<16x128xf32>
    %573 = arith.mulf %572, %559 : vector<16x128xf32>
    %574 = arith.addf %571, %573 : vector<16x128xf32>
    %cst_194 = arith.constant 3.95061731 : f32
    %575 = vector.broadcast %cst_194 : f32 to vector<16x128xf32>
    %576 = arith.mulf %575, %568 : vector<16x128xf32>
    %577 = arith.addf %574, %576 : vector<16x128xf32>
    %cst_195 = arith.constant dense<0.000000e+00> : vector<16x128xf32>
    %578 = tpu.matmul %577, %1, %cst_195 {dimension_numbers = #tpu.dot_dimension_numbers<[1], [0], [0], [1], [0, 0, 1, 1], [], []>} : vector<16x128xf32>, vector<128x128xf32>, vector<16x128xf32> -> vector<16x128xf32>
    %579 = arith.addf %578, %4 : vector<16x128xf32>
    %580 = math.tanh %579 : vector<16x128xf32>
    %cst_196 = arith.constant 3.28066516 : f32
    %581 = vector.broadcast %cst_196 : f32 to vector<16x128xf32>
    %582 = arith.mulf %581, %553 : vector<16x128xf32>
    %583 = arith.addf %550, %582 : vector<16x128xf32>
    %cst_197 = arith.constant -12.8842144 : f32
    %584 = vector.broadcast %cst_197 : f32 to vector<16x128xf32>
    %585 = arith.mulf %584, %559 : vector<16x128xf32>
    %586 = arith.addf %583, %585 : vector<16x128xf32>
    %cst_198 = arith.constant 10.9143257 : f32
    %587 = vector.broadcast %cst_198 : f32 to vector<16x128xf32>
    %588 = arith.mulf %587, %568 : vector<16x128xf32>
    %589 = arith.addf %586, %588 : vector<16x128xf32>
    %cst_199 = arith.constant -0.323121488 : f32
    %590 = vector.broadcast %cst_199 : f32 to vector<16x128xf32>
    %591 = arith.mulf %590, %580 : vector<16x128xf32>
    %592 = arith.addf %589, %591 : vector<16x128xf32>
    %cst_200 = arith.constant dense<0.000000e+00> : vector<16x128xf32>
    %593 = tpu.matmul %592, %1, %cst_200 {dimension_numbers = #tpu.dot_dimension_numbers<[1], [0], [0], [1], [0, 0, 1, 1], [], []>} : vector<16x128xf32>, vector<128x128xf32>, vector<16x128xf32> -> vector<16x128xf32>
    %594 = arith.addf %593, %4 : vector<16x128xf32>
    %595 = math.tanh %594 : vector<16x128xf32>
    %cst_201 = arith.constant 3.16252804 : f32
    %596 = vector.broadcast %cst_201 : f32 to vector<16x128xf32>
    %597 = arith.mulf %596, %553 : vector<16x128xf32>
    %598 = arith.addf %550, %597 : vector<16x128xf32>
    %cst_202 = arith.constant -11.9528618 : f32
    %599 = vector.broadcast %cst_202 : f32 to vector<16x128xf32>
    %600 = arith.mulf %599, %559 : vector<16x128xf32>
    %601 = arith.addf %598, %600 : vector<16x128xf32>
    %cst_203 = arith.constant 9.89602565 : f32
    %602 = vector.broadcast %cst_203 : f32 to vector<16x128xf32>
    %603 = arith.mulf %602, %568 : vector<16x128xf32>
    %604 = arith.addf %601, %603 : vector<16x128xf32>
    %cst_204 = arith.constant 0.309343427 : f32
    %605 = vector.broadcast %cst_204 : f32 to vector<16x128xf32>
    %606 = arith.mulf %605, %580 : vector<16x128xf32>
    %607 = arith.addf %604, %606 : vector<16x128xf32>
    %cst_205 = arith.constant -0.303923666 : f32
    %608 = vector.broadcast %cst_205 : f32 to vector<16x128xf32>
    %609 = arith.mulf %608, %595 : vector<16x128xf32>
    %610 = arith.addf %607, %609 : vector<16x128xf32>
    %cst_206 = arith.constant dense<0.000000e+00> : vector<16x128xf32>
    %611 = tpu.matmul %610, %1, %cst_206 {dimension_numbers = #tpu.dot_dimension_numbers<[1], [0], [0], [1], [0, 0, 1, 1], [], []>} : vector<16x128xf32>, vector<128x128xf32>, vector<16x128xf32> -> vector<16x128xf32>
    %612 = arith.addf %611, %4 : vector<16x128xf32>
    %613 = math.tanh %612 : vector<16x128xf32>
    %cst_207 = arith.constant 0.101273149 : f32
    %614 = vector.broadcast %cst_207 : f32 to vector<16x128xf32>
    %615 = arith.mulf %614, %553 : vector<16x128xf32>
    %616 = arith.addf %550, %615 : vector<16x128xf32>
    %cst_208 = arith.constant 0.499151438 : f32
    %617 = vector.broadcast %cst_208 : f32 to vector<16x128xf32>
    %618 = arith.mulf %617, %568 : vector<16x128xf32>
    %619 = arith.addf %616, %618 : vector<16x128xf32>
    %cst_209 = arith.constant 0.723379611 : f32
    %620 = vector.broadcast %cst_209 : f32 to vector<16x128xf32>
    %621 = arith.mulf %620, %580 : vector<16x128xf32>
    %622 = arith.addf %619, %621 : vector<16x128xf32>
    %cst_210 = arith.constant -0.358195752 : f32
    %623 = vector.broadcast %cst_210 : f32 to vector<16x128xf32>
    %624 = arith.mulf %623, %595 : vector<16x128xf32>
    %625 = arith.addf %622, %624 : vector<16x128xf32>
    %cst_211 = arith.constant 0.145502642 : f32
    %626 = vector.broadcast %cst_211 : f32 to vector<16x128xf32>
    %627 = arith.mulf %626, %613 : vector<16x128xf32>
    %628 = arith.addf %625, %627 : vector<16x128xf32>
    %c8_i32 = arith.constant 8 : i32
    %cst_212 = arith.constant dense<0.000000e+00> : vector<16x128xf32>
    %629 = tpu.matmul %628, %1, %cst_212 {dimension_numbers = #tpu.dot_dimension_numbers<[1], [0], [0], [1], [0, 0, 1, 1], [], []>} : vector<16x128xf32>, vector<128x128xf32>, vector<16x128xf32> -> vector<16x128xf32>
    %630 = arith.addf %629, %4 : vector<16x128xf32>
    %631 = math.tanh %630 : vector<16x128xf32>
    %cst_213 = arith.constant 0.222222224 : f32
    %632 = vector.broadcast %cst_213 : f32 to vector<16x128xf32>
    %633 = arith.mulf %632, %631 : vector<16x128xf32>
    %634 = arith.addf %628, %633 : vector<16x128xf32>
    %cst_214 = arith.constant dense<0.000000e+00> : vector<16x128xf32>
    %635 = tpu.matmul %634, %1, %cst_214 {dimension_numbers = #tpu.dot_dimension_numbers<[1], [0], [0], [1], [0, 0, 1, 1], [], []>} : vector<16x128xf32>, vector<128x128xf32>, vector<16x128xf32> -> vector<16x128xf32>
    %636 = arith.addf %635, %4 : vector<16x128xf32>
    %637 = math.tanh %636 : vector<16x128xf32>
    %cst_215 = arith.constant 0.0833333358 : f32
    %638 = vector.broadcast %cst_215 : f32 to vector<16x128xf32>
    %639 = arith.mulf %638, %631 : vector<16x128xf32>
    %640 = arith.addf %628, %639 : vector<16x128xf32>
    %cst_216 = arith.constant 2.500000e-01 : f32
    %641 = vector.broadcast %cst_216 : f32 to vector<16x128xf32>
    %642 = arith.mulf %641, %637 : vector<16x128xf32>
    %643 = arith.addf %640, %642 : vector<16x128xf32>
    %cst_217 = arith.constant dense<0.000000e+00> : vector<16x128xf32>
    %644 = tpu.matmul %643, %1, %cst_217 {dimension_numbers = #tpu.dot_dimension_numbers<[1], [0], [0], [1], [0, 0, 1, 1], [], []>} : vector<16x128xf32>, vector<128x128xf32>, vector<16x128xf32> -> vector<16x128xf32>
    %645 = arith.addf %644, %4 : vector<16x128xf32>
    %646 = math.tanh %645 : vector<16x128xf32>
    %cst_218 = arith.constant 1.0864197 : f32
    %647 = vector.broadcast %cst_218 : f32 to vector<16x128xf32>
    %648 = arith.mulf %647, %631 : vector<16x128xf32>
    %649 = arith.addf %628, %648 : vector<16x128xf32>
    %cst_219 = arith.constant -4.14814806 : f32
    %650 = vector.broadcast %cst_219 : f32 to vector<16x128xf32>
    %651 = arith.mulf %650, %637 : vector<16x128xf32>
    %652 = arith.addf %649, %651 : vector<16x128xf32>
    %cst_220 = arith.constant 3.95061731 : f32
    %653 = vector.broadcast %cst_220 : f32 to vector<16x128xf32>
    %654 = arith.mulf %653, %646 : vector<16x128xf32>
    %655 = arith.addf %652, %654 : vector<16x128xf32>
    %cst_221 = arith.constant dense<0.000000e+00> : vector<16x128xf32>
    %656 = tpu.matmul %655, %1, %cst_221 {dimension_numbers = #tpu.dot_dimension_numbers<[1], [0], [0], [1], [0, 0, 1, 1], [], []>} : vector<16x128xf32>, vector<128x128xf32>, vector<16x128xf32> -> vector<16x128xf32>
    %657 = arith.addf %656, %4 : vector<16x128xf32>
    %658 = math.tanh %657 : vector<16x128xf32>
    %cst_222 = arith.constant 3.28066516 : f32
    %659 = vector.broadcast %cst_222 : f32 to vector<16x128xf32>
    %660 = arith.mulf %659, %631 : vector<16x128xf32>
    %661 = arith.addf %628, %660 : vector<16x128xf32>
    %cst_223 = arith.constant -12.8842144 : f32
    %662 = vector.broadcast %cst_223 : f32 to vector<16x128xf32>
    %663 = arith.mulf %662, %637 : vector<16x128xf32>
    %664 = arith.addf %661, %663 : vector<16x128xf32>
    %cst_224 = arith.constant 10.9143257 : f32
    %665 = vector.broadcast %cst_224 : f32 to vector<16x128xf32>
    %666 = arith.mulf %665, %646 : vector<16x128xf32>
    %667 = arith.addf %664, %666 : vector<16x128xf32>
    %cst_225 = arith.constant -0.323121488 : f32
    %668 = vector.broadcast %cst_225 : f32 to vector<16x128xf32>
    %669 = arith.mulf %668, %658 : vector<16x128xf32>
    %670 = arith.addf %667, %669 : vector<16x128xf32>
    %cst_226 = arith.constant dense<0.000000e+00> : vector<16x128xf32>
    %671 = tpu.matmul %670, %1, %cst_226 {dimension_numbers = #tpu.dot_dimension_numbers<[1], [0], [0], [1], [0, 0, 1, 1], [], []>} : vector<16x128xf32>, vector<128x128xf32>, vector<16x128xf32> -> vector<16x128xf32>
    %672 = arith.addf %671, %4 : vector<16x128xf32>
    %673 = math.tanh %672 : vector<16x128xf32>
    %cst_227 = arith.constant 3.16252804 : f32
    %674 = vector.broadcast %cst_227 : f32 to vector<16x128xf32>
    %675 = arith.mulf %674, %631 : vector<16x128xf32>
    %676 = arith.addf %628, %675 : vector<16x128xf32>
    %cst_228 = arith.constant -11.9528618 : f32
    %677 = vector.broadcast %cst_228 : f32 to vector<16x128xf32>
    %678 = arith.mulf %677, %637 : vector<16x128xf32>
    %679 = arith.addf %676, %678 : vector<16x128xf32>
    %cst_229 = arith.constant 9.89602565 : f32
    %680 = vector.broadcast %cst_229 : f32 to vector<16x128xf32>
    %681 = arith.mulf %680, %646 : vector<16x128xf32>
    %682 = arith.addf %679, %681 : vector<16x128xf32>
    %cst_230 = arith.constant 0.309343427 : f32
    %683 = vector.broadcast %cst_230 : f32 to vector<16x128xf32>
    %684 = arith.mulf %683, %658 : vector<16x128xf32>
    %685 = arith.addf %682, %684 : vector<16x128xf32>
    %cst_231 = arith.constant -0.303923666 : f32
    %686 = vector.broadcast %cst_231 : f32 to vector<16x128xf32>
    %687 = arith.mulf %686, %673 : vector<16x128xf32>
    %688 = arith.addf %685, %687 : vector<16x128xf32>
    %cst_232 = arith.constant dense<0.000000e+00> : vector<16x128xf32>
    %689 = tpu.matmul %688, %1, %cst_232 {dimension_numbers = #tpu.dot_dimension_numbers<[1], [0], [0], [1], [0, 0, 1, 1], [], []>} : vector<16x128xf32>, vector<128x128xf32>, vector<16x128xf32> -> vector<16x128xf32>
    %690 = arith.addf %689, %4 : vector<16x128xf32>
    %691 = math.tanh %690 : vector<16x128xf32>
    %cst_233 = arith.constant 0.101273149 : f32
    %692 = vector.broadcast %cst_233 : f32 to vector<16x128xf32>
    %693 = arith.mulf %692, %631 : vector<16x128xf32>
    %694 = arith.addf %628, %693 : vector<16x128xf32>
    %cst_234 = arith.constant 0.499151438 : f32
    %695 = vector.broadcast %cst_234 : f32 to vector<16x128xf32>
    %696 = arith.mulf %695, %646 : vector<16x128xf32>
    %697 = arith.addf %694, %696 : vector<16x128xf32>
    %cst_235 = arith.constant 0.723379611 : f32
    %698 = vector.broadcast %cst_235 : f32 to vector<16x128xf32>
    %699 = arith.mulf %698, %658 : vector<16x128xf32>
    %700 = arith.addf %697, %699 : vector<16x128xf32>
    %cst_236 = arith.constant -0.358195752 : f32
    %701 = vector.broadcast %cst_236 : f32 to vector<16x128xf32>
    %702 = arith.mulf %701, %673 : vector<16x128xf32>
    %703 = arith.addf %700, %702 : vector<16x128xf32>
    %cst_237 = arith.constant 0.145502642 : f32
    %704 = vector.broadcast %cst_237 : f32 to vector<16x128xf32>
    %705 = arith.mulf %704, %691 : vector<16x128xf32>
    %706 = arith.addf %703, %705 : vector<16x128xf32>
    %c0_238 = arith.constant 0 : index
    %c0_239 = arith.constant 0 : index
    %707 = vector.load %arg4[%c0_238, %c0_239] : memref<16x128xf32, #tpu.memory_space<vmem>>, vector<16x128xf32>
    tpu.vector_store %arg4[%c0_238, %c0_239], %706 {strides = array<i32>} : memref<16x128xf32, #tpu.memory_space<vmem>>, vector<16x128xf32>,
    return
  }
  func.func @transform_0(%arg0: i32) -> (i32, i32) {
    %c0_i32 = arith.constant 0 : i32
    %c0_i32_0 = arith.constant 0 : i32
    return %arg0, %c0_i32 : i32, i32
  }
  func.func @transform_1(%arg0: i32) -> (i32, i32) {
    %c0_i32 = arith.constant 0 : i32
    %c0_i32_0 = arith.constant 0 : i32
    %c0_i32_1 = arith.constant 0 : i32
    return %c0_i32, %c0_i32_0 : i32, i32
  }
  func.func @transform_2(%arg0: i32) -> (i32, i32) {
    %c0_i32 = arith.constant 0 : i32
    %c0_i32_0 = arith.constant 0 : i32
    %c0_i32_1 = arith.constant 0 : i32
    return %c0_i32, %c0_i32_0 : i32, i32
  }
  func.func @transform_3(%arg0: i32) -> (i32, i32) {
    %c0_i32 = arith.constant 0 : i32
    %c0_i32_0 = arith.constant 0 : i32
    return %arg0, %c0_i32 : i32, i32
  }
}

</mosaic_0001>

<llo_original>
// kernel: tpu_custom_call.1
$region0: #{tpu_custom_call.1}
  #allocation0 [shape = 'u32[]', space=smem, size = 0x4, offset = 0x4, fixed_abs, tag = 'smem constant byte address 0x4 - core index']
  #allocation1 [shape = 'u32[144,128]{1,0:T(1,128)}', space=vmem, size = 0x12000, scoped, tag = 'internal scratch']
  %s0 = inlined_call_operand.hbm [shape: f32[16,128], index: 0, kind: input, shape index: {}]
  %s1 = inlined_call_operand.hbm [shape: f32[128,128], index: 1, kind: input, shape index: {}]
  %s2 = inlined_call_operand.vmem [shape: f32[1,128], index: 2, kind: input, shape index: {}]
  %s3 = inlined_call_operand.hbm [shape: f32[16,128], index: 3, kind: output, shape index: {}]
  %s4 = sld [smem:[#allocation0]]
  $region30: #{tpu_custom_call.1} parent=0
    _
  %s6 = ssub.s32 1, %s4
  %s7 = scalar_select 0, %s6, %s4
  $region1: #{tpu_custom_call.1} parent=0
    #allocation2 [shape = 'u8[8192]{0}', space=vmem, size = 0x2000, scoped, tag = 'input window, operand 0, single buffered']
    #allocation3 [shape = 's32[1]{0}', space=sflag, size = 0x4, scoped, tag = 'scoped memory for tpu_custom_call.1']
    #allocation4 [shape = 's32[1]{0}', space=sflag, size = 0x4, scoped, tag = 'scoped memory for tpu_custom_call.1']
    #allocation5 [shape = 'u8[65536]{0}', space=vmem, size = 0x10000, scoped, tag = 'input window, operand 1, single buffered']
    #allocation6 [shape = 's32[1]{0}', space=sflag, size = 0x4, scoped, tag = 'scoped memory for tpu_custom_call.1']
    #allocation7 [shape = 'u8[8192]{0}', space=vmem, size = 0x2000, scoped, tag = 'output window, operand 0, single buffered']
    %8 = vsyncpa [#allocation3], 0
    %9 = vsyncpa [#allocation6], 0
    %10 = vsyncpa [#allocation4], 0
    // Predicated region
    $region2: #{tpu_custom_call.1} parent=1 // pred_check
      _
    $region3: #{tpu_custom_call.1} parent=1 // pred_check_branch
      %12 = sbr.rel (0) target = $region5
    $region4: #{tpu_custom_call.1} parent=1 // pred_region
      %s14 = ssub.s32 256, 256
      %15 = vsyncadd [#allocation3], %s14
      %s16 = sshll.u32 [#allocation2], 4
      %s17 = int_to_ptr.vmem [resolvable:$true] %s16
      %22 = dma.hbm_to_vmem [thread:$0]  %s0, 256, %s17, [#allocation3], 128, 128, 8
    $region5: #{tpu_custom_call.1} parent=1 // pred_fallthru
      _
    // Predicated region
    $region6: #{tpu_custom_call.1} parent=1 // pred_check
      _
    $region7: #{tpu_custom_call.1} parent=1 // pred_check_branch
      %24 = sbr.rel (0) target = $region9
    $region8: #{tpu_custom_call.1} parent=1 // pred_region
      %s26 = ssub.s32 2048, 2048
      %27 = vsyncadd [#allocation6], %s26
      %s28 = sshll.u32 [#allocation5], 4
      %s29 = int_to_ptr.vmem [resolvable:$true] %s28
      %34 = dma.hbm_to_vmem [thread:$0]  %s1, 2048, %s29, [#allocation6], 128, 128, 8
    $region9: #{tpu_custom_call.1} parent=1 // pred_fallthru
      _
    // Predicated region
    $region10: #{tpu_custom_call.1} parent=1 // pred_check
      _
    $region11: #{tpu_custom_call.1} parent=1 // pred_check_branch
      %36 = sbr.rel (0) target = $region13
    $region12: #{tpu_custom_call.1} parent=1 // pred_region
      _
    $region13: #{tpu_custom_call.1} parent=1 // pred_fallthru
      _
    // Predicated region
    $region14: #{tpu_custom_call.1} parent=1 // pred_check
      _
    $region15: #{tpu_custom_call.1} parent=1 // pred_check_branch
      %38 = sbr.rel (0) target = $region17
    $region16: #{tpu_custom_call.1} parent=1 // pred_region
      %39 = dma.done [#allocation3], 256
    $region17: #{tpu_custom_call.1} parent=1 // pred_fallthru
      _
    // Predicated region
    $region18: #{tpu_custom_call.1} parent=1 // pred_check
      _
    $region19: #{tpu_custom_call.1} parent=1 // pred_check_branch
      %41 = sbr.rel (0) target = $region21
    $region20: #{tpu_custom_call.1} parent=1 // pred_region
      %42 = dma.done [#allocation6], 2048
    $region21: #{tpu_custom_call.1} parent=1 // pred_fallthru
      _
    %v43 = vld [vmem:[#allocation2] sm:$0xff]
    %v44 = vld [vmem:[#allocation2 + $0x8] sm:$0xff]
    %v45 = vld [vmem:[#allocation5] sm:$0xff]
    %v46 = vld [vmem:[#allocation5 + $0x8] sm:$0xff]
    %v47 = vld [vmem:[#allocation5 + $0x10] sm:$0xff]
    %v48 = vld [vmem:[#allocation5 + $0x18] sm:$0xff]
    %v49 = vld [vmem:[#allocation5 + $0x20] sm:$0xff]
    %v50 = vld [vmem:[#allocation5 + $0x28] sm:$0xff]
    %v51 = vld [vmem:[#allocation5 + $0x30] sm:$0xff]
    %v52 = vld [vmem:[#allocation5 + $0x38] sm:$0xff]
    %v53 = vld [vmem:[#allocation5 + $0x40] sm:$0xff]
    %v54 = vld [vmem:[#allocation5 + $0x48] sm:$0xff]
    %v55 = vld [vmem:[#allocation5 + $0x50] sm:$0xff]
    %v56 = vld [vmem:[#allocation5 + $0x58] sm:$0xff]
    %v57 = vld [vmem:[#allocation5 + $0x60] sm:$0xff]
    %v58 = vld [vmem:[#allocation5 + $0x68] sm:$0xff]
    %v59 = vld [vmem:[#allocation5 + $0x70] sm:$0xff]
    %v60 = vld [vmem:[#allocation5 + $0x78] sm:$0xff]
    %v61 = vld [vmem:[%s2] sm:$0x1]
    %v63 = vlaneseq
    %v64 = vshrl.u32 %v63, 7
    %v65 = vsub.s32 0, %v64
    %v66 = vrot.slane %v61, %v65
    %68 = vmatprep.subr.mxu0 0.0
    %69 = vmatpush1.msra.mxu0 %v45
    %70 = vmatprep.subr.mxu0 0.0
    %71 = vmatpush1.msra.mxu0 %v46
    %72 = vmatprep.subr.mxu0 0.0
    %73 = vmatpush1.msra.mxu0 %v47
    %74 = vmatprep.subr.mxu0 0.0
    %75 = vmatpush1.msra.mxu0 %v48
    %76 = vmatprep.subr.mxu0 0.0
    %77 = vmatpush1.msra.mxu0 %v49
    %78 = vmatprep.subr.mxu0 0.0
    %79 = vmatpush1.msra.mxu0 %v50
    %80 = vmatprep.subr.mxu0 0.0
    %81 = vmatpush1.msra.mxu0 %v51
    %82 = vmatprep.subr.mxu0 0.0
    %83 = vmatpush1.msra.mxu0 %v52
    %84 = vmatprep.subr.mxu0 0.0
    %85 = vmatpush1.msra.mxu0 %v53
    %86 = vmatprep.subr.mxu0 0.0
    %87 = vmatpush1.msra.mxu0 %v54
    %88 = vmatprep.subr.mxu0 0.0
    %89 = vmatpush1.msra.mxu0 %v55
    %90 = vmatprep.subr.mxu0 0.0
    %91 = vmatpush1.msra.mxu0 %v56
    %92 = vmatprep.subr.mxu0 0.0
    %93 = vmatpush1.msra.mxu0 %v57
    %94 = vmatprep.subr.mxu0 0.0
    %95 = vmatpush1.msra.mxu0 %v58
    %96 = vmatprep.subr.mxu0 0.0
    %97 = vmatpush1.msra.mxu0 %v59
    %98 = vmatprep.subr.mxu0 0.0
    %99 = vmatpush1.msra.mxu0 %v60
    %100 = vmatprep.subr.mxu0 0.0
    %101 = vmatpush1.msra.mxu0 0.0
    %102 = vmatprep.subr.mxu0 0.0
    %103 = vmatpush1.msra.mxu0 0.0
    %104 = vmatprep.subr.mxu0 0.0
    %105 = vmatpush1.msra.mxu0 0.0
    %106 = vmatprep.subr.mxu0 0.0
    %107 = vmatpush1.msra.mxu0 0.0
    %108 = vmatprep.subr.mxu0 0.0
    %109 = vmatpush1.msra.mxu0 0.0
    %110 = vmatprep.subr.mxu0 0.0
    %111 = vmatpush1.msra.mxu0 0.0
    %112 = vmatprep.subr.mxu0 0.0
    %113 = vmatpush1.msra.mxu0 0.0
    %114 = vmatprep.subr.mxu0 0.0
    %115 = vmatpush1.msra.mxu0 0.0
    %116 = vmatprep.subr.mxu0 0.0
    %117 = vmatpush1.msra.mxu0 0.0
    %118 = vmatprep.subr.mxu0 0.0
    %119 = vmatpush1.msra.mxu0 0.0
    %120 = vmatprep.subr.mxu0 0.0
    %121 = vmatpush1.msra.mxu0 0.0
    %122 = vmatprep.subr.mxu0 0.0
    %123 = vmatpush1.msra.mxu0 0.0
    %124 = vmatprep.subr.mxu0 0.0
    %125 = vmatpush1.msra.mxu0 0.0
    %126 = vmatprep.subr.mxu0 0.0
    %127 = vmatpush1.msra.mxu0 0.0
    %128 = vmatprep.subr.mxu0 0.0
    %129 = vmatpush1.msra.mxu0 0.0
    %130 = vmatprep.subr.mxu0 0.0
    %131 = vmatpush1.msra.mxu0 0.0
    %132 = vmatprep.mubr.f32.mxu0 0.0
    %133 = vmatmul.mubr.f32.gmra.mrb[0].mxu0 %v43
    %v134 = vpop.f32.mrb[0].mxu0
    %v135 = vadd.f32 %v66, %v134
    %v136 = vpop.f32.mrb[0].mxu0
    %137 = vmatprep.mubr.f32.mxu0 0.0
    %138 = vmatmul.mubr.f32.gmra.mrb[0].mxu0 %v44
    %v139 = vpop.f32.mrb[0].mxu0
    %v140 = vadd.f32 %v66, %v139
    %v141 = vpop.f32.mrb[0].mxu0
    %142 = vdwg.mxu0
    %v143 = vtanh.pop %v135
    %v144 = vtanh.pop %v140
    %v145 = vmul.f32 %v143, 0.22222222
    %v146 = vmul.f32 %v144, 0.22222222
    %v147 = vadd.f32 %v43, %v145
    %v148 = vadd.f32 %v44, %v146
    %149 = vmatprep.subr.mxu0 0.0
    %150 = vmatpush1.msra.mxu0 %v45
    %151 = vmatprep.subr.mxu0 0.0
    %152 = vmatpush1.msra.mxu0 %v46
    %153 = vmatprep.subr.mxu0 0.0
    %154 = vmatpush1.msra.mxu0 %v47
    %155 = vmatprep.subr.mxu0 0.0
    %156 = vmatpush1.msra.mxu0 %v48
    %157 = vmatprep.subr.mxu0 0.0
    %158 = vmatpush1.msra.mxu0 %v49
    %159 = vmatprep.subr.mxu0 0.0
    %160 = vmatpush1.msra.mxu0 %v50
    %161 = vmatprep.subr.mxu0 0.0
    %162 = vmatpush1.msra.mxu0 %v51
    %163 = vmatprep.subr.mxu0 0.0
    %164 = vmatpush1.msra.mxu0 %v52
    %165 = vmatprep.subr.mxu0 0.0
    %166 = vmatpush1.msra.mxu0 %v53
    %167 = vmatprep.subr.mxu0 0.0
    %168 = vmatpush1.msra.mxu0 %v54
    %169 = vmatprep.subr.mxu0 0.0
    %170 = vmatpush1.msra.mxu0 %v55
    %171 = vmatprep.subr.mxu0 0.0
    %172 = vmatpush1.msra.mxu0 %v56
    %173 = vmatprep.subr.mxu0 0.0
    %174 = vmatpush1.msra.mxu0 %v57
    %175 = vmatprep.subr.mxu0 0.0
    %176 = vmatpush1.msra.mxu0 %v58
    %177 = vmatprep.subr.mxu0 0.0
    %178 = vmatpush1.msra.mxu0 %v59
    %179 = vmatprep.subr.mxu0 0.0
    %180 = vmatpush1.msra.mxu0 %v60
    %181 = vmatprep.subr.mxu0 0.0
    %182 = vmatpush1.msra.mxu0 0.0
    %183 = vmatprep.subr.mxu0 0.0
    %184 = vmatpush1.msra.mxu0 0.0
    %185 = vmatprep.subr.mxu0 0.0
    %186 = vmatpush1.msra.mxu0 0.0
    %187 = vmatprep.subr.mxu0 0.0
    %188 = vmatpush1.msra.mxu0 0.0
    %189 = vmatprep.subr.mxu0 0.0
    %190 = vmatpush1.msra.mxu0 0.0
    %191 = vmatprep.subr.mxu0 0.0
    %192 = vmatpush1.msra.mxu0 0.0
    %193 = vmatprep.subr.mxu0 0.0
    %194 = vmatpush1.msra.mxu0 0.0
    %195 = vmatprep.subr.mxu0 0.0
    %196 = vmatpush1.msra.mxu0 0.0
    %197 = vmatprep.subr.mxu0 0.0
    %198 = vmatpush1.msra.mxu0 0.0
    %199 = vmatprep.subr.mxu0 0.0
    %200 = vmatpush1.msra.mxu0 0.0
    %201 = vmatprep.subr.mxu0 0.0
    %202 = vmatpush1.msra.mxu0 0.0
    %203 = vmatprep.subr.mxu0 0.0
    %204 = vmatpush1.msra.mxu0 0.0
    %205 = vmatprep.subr.mxu0 0.0
    %206 = vmatpush1.msra.mxu0 0.0
    %207 = vmatprep.subr.mxu0 0.0
    %208 = vmatpush1.msra.mxu0 0.0
    %209 = vmatprep.subr.mxu0 0.0
    %210 = vmatpush1.msra.mxu0 0.0
    %211 = vmatprep.subr.mxu0 0.0
    %212 = vmatpush1.msra.mxu0 0.0
    %213 = vmatprep.mubr.f32.mxu0 0.0
    %214 = vmatmul.mubr.f32.gmra.mrb[0].mxu0 %v147
    %v215 = vpop.f32.mrb[0].mxu0
    %v216 = vadd.f32 %v66, %v215
    %v217 = vpop.f32.mrb[0].mxu0
    %218 = vmatprep.mubr.f32.mxu0 0.0
    %219 = vmatmul.mubr.f32.gmra.mrb[0].mxu0 %v148
    %v220 = vpop.f32.mrb[0].mxu0
    %v221 = vadd.f32 %v66, %v220
    %v222 = vpop.f32.mrb[0].mxu0
    %223 = vdwg.mxu0
    %v224 = vtanh.pop %v216
    %v225 = vtanh.pop %v221
    %v226 = vmul.f32 %v143, 0.083333336
    %v227 = vmul.f32 %v144, 0.083333336
    %v228 = vadd.f32 %v43, %v226
    %v229 = vadd.f32 %v44, %v227
    %v230 = vmul.f32 %v224, 0.25
    %v231 = vmul.f32 %v225, 0.25
    %v232 = vadd.f32 %v228, %v230
    %v233 = vadd.f32 %v229, %v231
    %234 = vmatprep.subr.mxu0 0.0
    %235 = vmatpush1.msra.mxu0 %v45
    %236 = vmatprep.subr.mxu0 0.0
    %237 = vmatpush1.msra.mxu0 %v46
    %238 = vmatprep.subr.mxu0 0.0
    %239 = vmatpush1.msra.mxu0 %v47
    %240 = vmatprep.subr.mxu0 0.0
    %241 = vmatpush1.msra.mxu0 %v48
    %242 = vmatprep.subr.mxu0 0.0
    %243 = vmatpush1.msra.mxu0 %v49
    %244 = vmatprep.subr.mxu0 0.0
    %245 = vmatpush1.msra.mxu0 %v50
    %246 = vmatprep.subr.mxu0 0.0
    %247 = vmatpush1.msra.mxu0 %v51
    %248 = vmatprep.subr.mxu0 0.0
    %249 = vmatpush1.msra.mxu0 %v52
    %250 = vmatprep.subr.mxu0 0.0
    %251 = vmatpush1.msra.mxu0 %v53
    %252 = vmatprep.subr.mxu0 0.0
    %253 = vmatpush1.msra.mxu0 %v54
    %254 = vmatprep.subr.mxu0 0.0
    %255 = vmatpush1.msra.mxu0 %v55
    %256 = vmatprep.subr.mxu0 0.0
    %257 = vmatpush1.msra.mxu0 %v56
    %258 = vmatprep.subr.mxu0 0.0
    %259 = vmatpush1.msra.mxu0 %v57
    %260 = vmatprep.subr.mxu0 0.0
    %261 = vmatpush1.msra.mxu0 %v58
    %262 = vmatprep.subr.mxu0 0.0
    %263 = vmatpush1.msra.mxu0 %v59
    %264 = vmatprep.subr.mxu0 0.0
    %265 = vmatpush1.msra.mxu0 %v60
    %266 = vmatprep.subr.mxu0 0.0
    %267 = vmatpush1.msra.mxu0 0.0
    %268 = vmatprep.subr.mxu0 0.0
    %269 = vmatpush1.msra.mxu0 0.0
    %270 = vmatprep.subr.mxu0 0.0
    %271 = vmatpush1.msra.mxu0 0.0
    %272 = vmatprep.subr.mxu0 0.0
    %273 = vmatpush1.msra.mxu0 0.0
    %274 = vmatprep.subr.mxu0 0.0
    %275 = vmatpush1.msra.mxu0 0.0
    %276 = vmatprep.subr.mxu0 0.0
    %277 = vmatpush1.msra.mxu0 0.0
    %278 = vmatprep.subr.mxu0 0.0
    %279 = vmatpush1.msra.mxu0 0.0
    %280 = vmatprep.subr.mxu0 0.0
    %281 = vmatpush1.msra.mxu0 0.0
    %282 = vmatprep.subr.mxu0 0.0
    %283 = vmatpush1.msra.mxu0 0.0
    %284 = vmatprep.subr.mxu0 0.0
    %285 = vmatpush1.msra.mxu0 0.0
    %286 = vmatprep.subr.mxu0 0.0
    %287 = vmatpush1.msra.mxu0 0.0
    %288 = vmatprep.subr.mxu0 0.0
    %289 = vmatpush1.msra.mxu0 0.0
    %290 = vmatprep.subr.mxu0 0.0
    %291 = vmatpush1.msra.mxu0 0.0
    %292 = vmatprep.subr.mxu0 0.0
    %293 = vmatpush1.msra.mxu0 0.0
    %294 = vmatprep.subr.mxu0 0.0
    %295 = vmatpush1.msra.mxu0 0.0
    %296 = vmatprep.subr.mxu0 0.0
    %297 = vmatpush1.msra.mxu0 0.0
    %298 = vmatprep.mubr.f32.mxu0 0.0
    %299 = vmatmul.mubr.f32.gmra.mrb[0].mxu0 %v232
    %v300 = vpop.f32.mrb[0].mxu0
    %v301 = vadd.f32 %v66, %v300
    %v302 = vpop.f32.mrb[0].mxu0
    %303 = vmatprep.mubr.f32.mxu0 0.0
    %304 = vmatmul.mubr.f32.gmra.mrb[0].mxu0 %v233
    %v305 = vpop.f32.mrb[0].mxu0
    %v306 = vadd.f32 %v66, %v305
    %v307 = vpop.f32.mrb[0].mxu0
    %308 = vdwg.mxu0
    %v309 = vtanh.pop %v301
    %v310 = vtanh.pop %v306
    %v311 = vmul.f32 %v143, 1.0864197
    %v312 = vmul.f32 %v144, 1.0864197
    %v313 = vadd.f32 %v43, %v311
    %v314 = vadd.f32 %v44, %v312
    %v315 = vmul.f32 %v224, -4.148148
    %v316 = vmul.f32 %v225, -4.148148
    %v317 = vadd.f32 %v313, %v315
    %v318 = vadd.f32 %v314, %v316
    %v319 = vmul.f32 %v309, 3.9506173
    %v320 = vmul.f32 %v310, 3.9506173
    %v321 = vadd.f32 %v317, %v319
    %v322 = vadd.f32 %v318, %v320
    %323 = vmatprep.subr.mxu0 0.0
    %324 = vmatpush1.msra.mxu0 %v45
    %325 = vmatprep.subr.mxu0 0.0
    %326 = vmatpush1.msra.mxu0 %v46
    %327 = vmatprep.subr.mxu0 0.0
    %328 = vmatpush1.msra.mxu0 %v47
    %329 = vmatprep.subr.mxu0 0.0
    %330 = vmatpush1.msra.mxu0 %v48
    %331 = vmatprep.subr.mxu0 0.0
    %332 = vmatpush1.msra.mxu0 %v49
    %333 = vmatprep.subr.mxu0 0.0
    %334 = vmatpush1.msra.mxu0 %v50
    %335 = vmatprep.subr.mxu0 0.0
    %336 = vmatpush1.msra.mxu0 %v51
    %337 = vmatprep.subr.mxu0 0.0
    %338 = vmatpush1.msra.mxu0 %v52
    %339 = vmatprep.subr.mxu0 0.0
    %340 = vmatpush1.msra.mxu0 %v53
    %341 = vmatprep.subr.mxu0 0.0
    %342 = vmatpush1.msra.mxu0 %v54
    %343 = vmatprep.subr.mxu0 0.0
    %344 = vmatpush1.msra.mxu0 %v55
    %345 = vmatprep.subr.mxu0 0.0
    %346 = vmatpush1.msra.mxu0 %v56
    %347 = vmatprep.subr.mxu0 0.0
    %348 = vmatpush1.msra.mxu0 %v57
    %349 = vmatprep.subr.mxu0 0.0
    %350 = vmatpush1.msra.mxu0 %v58
    %351 = vmatprep.subr.mxu0 0.0
    %352 = vmatpush1.msra.mxu0 %v59
    %353 = vmatprep.subr.mxu0 0.0
    %354 = vmatpush1.msra.mxu0 %v60
    %355 = vmatprep.subr.mxu0 0.0
    %356 = vmatpush1.msra.mxu0 0.0
    %357 = vmatprep.subr.mxu0 0.0
    %358 = vmatpush1.msra.mxu0 0.0
    %359 = vmatprep.subr.mxu0 0.0
    %360 = vmatpush1.msra.mxu0 0.0
    %361 = vmatprep.subr.mxu0 0.0
    %362 = vmatpush1.msra.mxu0 0.0
    %363 = vmatprep.subr.mxu0 0.0
    %364 = vmatpush1.msra.mxu0 0.0
    %365 = vmatprep.subr.mxu0 0.0
    %366 = vmatpush1.msra.mxu0 0.0
    %367 = vmatprep.subr.mxu0 0.0
    %368 = vmatpush1.msra.mxu0 0.0
    %369 = vmatprep.subr.mxu0 0.0
    %370 = vmatpush1.msra.mxu0 0.0
    %371 = vmatprep.subr.mxu0 0.0
    %372 = vmatpush1.msra.mxu0 0.0
    %373 = vmatprep.subr.mxu0 0.0
    %374 = vmatpush1.msra.mxu0 0.0
    %375 = vmatprep.subr.mxu0 0.0
    %376 = vmatpush1.msra.mxu0 0.0
    %377 = vmatprep.subr.mxu0 0.0
    %378 = vmatpush1.msra.mxu0 0.0
    %379 = vmatprep.subr.mxu0 0.0
    %380 = vmatpush1.msra.mxu0 0.0
    %381 = vmatprep.subr.mxu0 0.0
    %382 = vmatpush1.msra.mxu0 0.0
    %383 = vmatprep.subr.mxu0 0.0
    %384 = vmatpush1.msra.mxu0 0.0
    %385 = vmatprep.subr.mxu0 0.0
    %386 = vmatpush1.msra.mxu0 0.0
    %387 = vmatprep.mubr.f32.mxu0 0.0
    %388 = vmatmul.mubr.f32.gmra.mrb[0].mxu0 %v321
    %v389 = vpop.f32.mrb[0].mxu0
    %v390 = vadd.f32 %v66, %v389
    %v391 = vpop.f32.mrb[0].mxu0
    %392 = vmatprep.mubr.f32.mxu0 0.0
    %393 = vmatmul.mubr.f32.gmra.mrb[0].mxu0 %v322
    %v394 = vpop.f32.mrb[0].mxu0
    %v395 = vadd.f32 %v66, %v394
    %v396 = vpop.f32.mrb[0].mxu0
    %397 = vdwg.mxu0
    %v398 = vtanh.pop %v390
    %v399 = vtanh.pop %v395
    %v400 = vmul.f32 %v143, 3.2806652
    %v401 = vmul.f32 %v144, 3.2806652
    %v402 = vadd.f32 %v43, %v400
    %v403 = vadd.f32 %v44, %v401
    %v404 = vmul.f32 %v224, -12.884214
    %v405 = vmul.f32 %v225, -12.884214
    %v406 = vadd.f32 %v402, %v404
    %v407 = vadd.f32 %v403, %v405
    %v408 = vmul.f32 %v309, 10.914326
    %v409 = vmul.f32 %v310, 10.914326
    %v410 = vadd.f32 %v406, %v408
    %v411 = vadd.f32 %v407, %v409
    %v412 = vmul.f32 %v398, -0.3231215
    %v413 = vmul.f32 %v399, -0.3231215
    %v414 = vadd.f32 %v410, %v412
    %v415 = vadd.f32 %v411, %v413
    %416 = vmatprep.subr.mxu0 0.0
    %417 = vmatpush1.msra.mxu0 %v45
    %418 = vmatprep.subr.mxu0 0.0
    %419 = vmatpush1.msra.mxu0 %v46
    %420 = vmatprep.subr.mxu0 0.0
    %421 = vmatpush1.msra.mxu0 %v47
    %422 = vmatprep.subr.mxu0 0.0
    %423 = vmatpush1.msra.mxu0 %v48
    %424 = vmatprep.subr.mxu0 0.0
    %425 = vmatpush1.msra.mxu0 %v49
    %426 = vmatprep.subr.mxu0 0.0
    %427 = vmatpush1.msra.mxu0 %v50
    %428 = vmatprep.subr.mxu0 0.0
    %429 = vmatpush1.msra.mxu0 %v51
    %430 = vmatprep.subr.mxu0 0.0
    %431 = vmatpush1.msra.mxu0 %v52
    %432 = vmatprep.subr.mxu0 0.0
    %433 = vmatpush1.msra.mxu0 %v53
    %434 = vmatprep.subr.mxu0 0.0
    %435 = vmatpush1.msra.mxu0 %v54
    %436 = vmatprep.subr.mxu0 0.0
    %437 = vmatpush1.msra.mxu0 %v55
    %438 = vmatprep.subr.mxu0 0.0
    %439 = vmatpush1.msra.mxu0 %v56
    %440 = vmatprep.subr.mxu0 0.0
    %441 = vmatpush1.msra.mxu0 %v57
    %442 = vmatprep.subr.mxu0 0.0
    %443 = vmatpush1.msra.mxu0 %v58
    %444 = vmatprep.subr.mxu0 0.0
    %445 = vmatpush1.msra.mxu0 %v59
    %446 = vmatprep.subr.mxu0 0.0
    %447 = vmatpush1.msra.mxu0 %v60
    %448 = vmatprep.subr.mxu0 0.0
    %449 = vmatpush1.msra.mxu0 0.0
    %450 = vmatprep.subr.mxu0 0.0
    %451 = vmatpush1.msra.mxu0 0.0
    %452 = vmatprep.subr.mxu0 0.0
    %453 = vmatpush1.msra.mxu0 0.0
    %454 = vmatprep.subr.mxu0 0.0
    %455 = vmatpush1.msra.mxu0 0.0
    %456 = vmatprep.subr.mxu0 0.0
    %457 = vmatpush1.msra.mxu0 0.0
    %458 = vmatprep.subr.mxu0 0.0
    %459 = vmatpush1.msra.mxu0 0.0
    %460 = vmatprep.subr.mxu0 0.0
    %461 = vmatpush1.msra.mxu0 0.0
    %462 = vmatprep.subr.mxu0 0.0
    %463 = vmatpush1.msra.mxu0 0.0
    %464 = vmatprep.subr.mxu0 0.0
    %465 = vmatpush1.msra.mxu0 0.0
    %466 = vmatprep.subr.mxu0 0.0
    %467 = vmatpush1.msra.mxu0 0.0
    %468 = vmatprep.subr.mxu0 0.0
    %469 = vmatpush1.msra.mxu0 0.0
    %470 = vmatprep.subr.mxu0 0.0
    %471 = vmatpush1.msra.mxu0 0.0
    %472 = vmatprep.subr.mxu0 0.0
    %473 = vmatpush1.msra.mxu0 0.0
    %474 = vmatprep.subr.mxu0 0.0
    %475 = vmatpush1.msra.mxu0 0.0
    %476 = vmatprep.subr.mxu0 0.0
    %477 = vmatpush1.msra.mxu0 0.0
    %478 = vmatprep.subr.mxu0 0.0
    %479 = vmatpush1.msra.mxu0 0.0
    %480 = vmatprep.mubr.f32.mxu0 0.0
    %481 = vmatmul.mubr.f32.gmra.mrb[0].mxu0 %v414
    %v482 = vpop.f32.mrb[0].mxu0
    %v483 = vadd.f32 %v66, %v482
    %v484 = vpop.f32.mrb[0].mxu0
    %485 = vmatprep.mubr.f32.mxu0 0.0
    %486 = vmatmul.mubr.f32.gmra.mrb[0].mxu0 %v415
    %v487 = vpop.f32.mrb[0].mxu0
    %v488 = vadd.f32 %v66, %v487
    %v489 = vpop.f32.mrb[0].mxu0
    %490 = vdwg.mxu0
    %v491 = vtanh.pop %v483
    %v492 = vtanh.pop %v488
    %v493 = vmul.f32 %v143, 3.162528
    %v494 = vmul.f32 %v144, 3.162528
    %v495 = vadd.f32 %v43, %v493
    %v496 = vadd.f32 %v44, %v494
    %v497 = vmul.f32 %v224, -11.952862
    %v498 = vmul.f32 %v225, -11.952862
    %v499 = vadd.f32 %v495, %v497
    %v500 = vadd.f32 %v496, %v498
    %v501 = vmul.f32 %v309, 9.896026
    %v502 = vmul.f32 %v310, 9.896026
    %v503 = vadd.f32 %v499, %v501
    %v504 = vadd.f32 %v500, %v502
    %v505 = vmul.f32 %v398, 0.30934343
    %v506 = vmul.f32 %v399, 0.30934343
    %v507 = vadd.f32 %v503, %v505
    %v508 = vadd.f32 %v504, %v506
    %v509 = vmul.f32 %v491, -0.30392367
    %v510 = vmul.f32 %v492, -0.30392367
    %v511 = vadd.f32 %v507, %v509
    %v512 = vadd.f32 %v508, %v510
    %513 = vmatprep.subr.mxu0 0.0
    %514 = vmatpush1.msra.mxu0 %v45
    %515 = vmatprep.subr.mxu0 0.0
    %516 = vmatpush1.msra.mxu0 %v46
    %517 = vmatprep.subr.mxu0 0.0
    %518 = vmatpush1.msra.mxu0 %v47
    %519 = vmatprep.subr.mxu0 0.0
    %520 = vmatpush1.msra.mxu0 %v48
    %521 = vmatprep.subr.mxu0 0.0
    %522 = vmatpush1.msra.mxu0 %v49
    %523 = vmatprep.subr.mxu0 0.0
    %524 = vmatpush1.msra.mxu0 %v50
    %525 = vmatprep.subr.mxu0 0.0
    %526 = vmatpush1.msra.mxu0 %v51
    %527 = vmatprep.subr.mxu0 0.0
    %528 = vmatpush1.msra.mxu0 %v52
    %529 = vmatprep.subr.mxu0 0.0
    %530 = vmatpush1.msra.mxu0 %v53
    %531 = vmatprep.subr.mxu0 0.0
    %532 = vmatpush1.msra.mxu0 %v54
    %533 = vmatprep.subr.mxu0 0.0
    %534 = vmatpush1.msra.mxu0 %v55
    %535 = vmatprep.subr.mxu0 0.0
    %536 = vmatpush1.msra.mxu0 %v56
    %537 = vmatprep.subr.mxu0 0.0
    %538 = vmatpush1.msra.mxu0 %v57
    %539 = vmatprep.subr.mxu0 0.0
    %540 = vmatpush1.msra.mxu0 %v58
    %541 = vmatprep.subr.mxu0 0.0
    %542 = vmatpush1.msra.mxu0 %v59
    %543 = vmatprep.subr.mxu0 0.0
    %544 = vmatpush1.msra.mxu0 %v60
    %545 = vmatprep.subr.mxu0 0.0
    %546 = vmatpush1.msra.mxu0 0.0
    %547 = vmatprep.subr.mxu0 0.0
    %548 = vmatpush1.msra.mxu0 0.0
    %549 = vmatprep.subr.mxu0 0.0
    %550 = vmatpush1.msra.mxu0 0.0
    %551 = vmatprep.subr.mxu0 0.0
    %552 = vmatpush1.msra.mxu0 0.0
    %553 = vmatprep.subr.mxu0 0.0
    %554 = vmatpush1.msra.mxu0 0.0
    %555 = vmatprep.subr.mxu0 0.0
    %556 = vmatpush1.msra.mxu0 0.0
    %557 = vmatprep.subr.mxu0 0.0
    %558 = vmatpush1.msra.mxu0 0.0
    %559 = vmatprep.subr.mxu0 0.0
    %560 = vmatpush1.msra.mxu0 0.0
    %561 = vmatprep.subr.mxu0 0.0
    %562 = vmatpush1.msra.mxu0 0.0
    %563 = vmatprep.subr.mxu0 0.0
    %564 = vmatpush1.msra.mxu0 0.0
    %565 = vmatprep.subr.mxu0 0.0
    %566 = vmatpush1.msra.mxu0 0.0
    %567 = vmatprep.subr.mxu0 0.0
    %568 = vmatpush1.msra.mxu0 0.0
    %569 = vmatprep.subr.mxu0 0.0
    %570 = vmatpush1.msra.mxu0 0.0
    %571 = vmatprep.subr.mxu0 0.0
    %572 = vmatpush1.msra.mxu0 0.0
    %573 = vmatprep.subr.mxu0 0.0
    %574 = vmatpush1.msra.mxu0 0.0
    %575 = vmatprep.subr.mxu0 0.0
    %576 = vmatpush1.msra.mxu0 0.0
    %577 = vmatprep.mubr.f32.mxu0 0.0
    %578 = vmatmul.mubr.f32.gmra.mrb[0].mxu0 %v511
    %v579 = vpop.f32.mrb[0].mxu0
    %v580 = vadd.f32 %v66, %v579
    %v581 = vpop.f32.mrb[0].mxu0
    %582 = vmatprep.mubr.f32.mxu0 0.0
    %583 = vmatmul.mubr.f32.gmra.mrb[0].mxu0 %v512
    %v584 = vpop.f32.mrb[0].mxu0
    %v585 = vadd.f32 %v66, %v584
    %v586 = vpop.f32.mrb[0].mxu0
    %587 = vdwg.mxu0
    %v588 = vtanh.pop %v580
    %v589 = vtanh.pop %v585
    %v590 = vmul.f32 %v143, 0.10127315
    %v591 = vmul.f32 %v144, 0.10127315
    %v592 = vadd.f32 %v43, %v590
    %v593 = vadd.f32 %v44, %v591
    %v594 = vmul.f32 %v309, 0.49915144
    %v595 = vmul.f32 %v310, 0.49915144
    %v596 = vadd.f32 %v592, %v594
    %v597 = vadd.f32 %v593, %v595
    %v598 = vmul.f32 %v398, 0.7233796
    %v599 = vmul.f32 %v399, 0.7233796
    %v600 = vadd.f32 %v596, %v598
    %v601 = vadd.f32 %v597, %v599
    %v602 = vmul.f32 %v491, -0.35819575
    %v603 = vmul.f32 %v492, -0.35819575
    %v604 = vadd.f32 %v600, %v602
    %v605 = vadd.f32 %v601, %v603
    %v606 = vmul.f32 %v588, 0.14550264
    %v607 = vmul.f32 %v589, 0.14550264
    %v608 = vadd.f32 %v604, %v606
    %v609 = vadd.f32 %v605, %v607
    %610 = vmatprep.subr.mxu0 0.0
    %611 = vmatpush1.msra.mxu0 %v45
    %612 = vmatprep.subr.mxu0 0.0
    %613 = vmatpush1.msra.mxu0 %v46
    %614 = vmatprep.subr.mxu0 0.0
    %615 = vmatpush1.msra.mxu0 %v47
    %616 = vmatprep.subr.mxu0 0.0
    %617 = vmatpush1.msra.mxu0 %v48
    %618 = vmatprep.subr.mxu0 0.0
    %619 = vmatpush1.msra.mxu0 %v49
    %620 = vmatprep.subr.mxu0 0.0
    %621 = vmatpush1.msra.mxu0 %v50
    %622 = vmatprep.subr.mxu0 0.0
    %623 = vmatpush1.msra.mxu0 %v51
    %624 = vmatprep.subr.mxu0 0.0
    %625 = vmatpush1.msra.mxu0 %v52
    %626 = vmatprep.subr.mxu0 0.0
    %627 = vmatpush1.msra.mxu0 %v53
    %628 = vmatprep.subr.mxu0 0.0
    %629 = vmatpush1.msra.mxu0 %v54
    %630 = vmatprep.subr.mxu0 0.0
    %631 = vmatpush1.msra.mxu0 %v55
    %632 = vmatprep.subr.mxu0 0.0
    %633 = vmatpush1.msra.mxu0 %v56
    %634 = vmatprep.subr.mxu0 0.0
    %635 = vmatpush1.msra.mxu0 %v57
    %636 = vmatprep.subr.mxu0 0.0
    %637 = vmatpush1.msra.mxu0 %v58
    %638 = vmatprep.subr.mxu0 0.0
    %639 = vmatpush1.msra.mxu0 %v59
    %640 = vmatprep.subr.mxu0 0.0
    %641 = vmatpush1.msra.mxu0 %v60
    %642 = vmatprep.subr.mxu0 0.0
    %643 = vmatpush1.msra.mxu0 0.0
    %644 = vmatprep.subr.mxu0 0.0
    %645 = vmatpush1.msra.mxu0 0.0
    %646 = vmatprep.subr.mxu0 0.0
    %647 = vmatpush1.msra.mxu0 0.0
    %648 = vmatprep.subr.mxu0 0.0
    %649 = vmatpush1.msra.mxu0 0.0
    %650 = vmatprep.subr.mxu0 0.0
    %651 = vmatpush1.msra.mxu0 0.0
    %652 = vmatprep.subr.mxu0 0.0
    %653 = vmatpush1.msra.mxu0 0.0
    %654 = vmatprep.subr.mxu0 0.0
    %655 = vmatpush1.msra.mxu0 0.0
    %656 = vmatprep.subr.mxu0 0.0
    %657 = vmatpush1.msra.mxu0 0.0
    %658 = vmatprep.subr.mxu0 0.0
    %659 = vmatpush1.msra.mxu0 0.0
    %660 = vmatprep.subr.mxu0 0.0
    %661 = vmatpush1.msra.mxu0 0.0
    %662 = vmatprep.subr.mxu0 0.0
    %663 = vmatpush1.msra.mxu0 0.0
    %664 = vmatprep.subr.mxu0 0.0
    %665 = vmatpush1.msra.mxu0 0.0
    %666 = vmatprep.subr.mxu0 0.0
    %667 = vmatpush1.msra.mxu0 0.0
    %668 = vmatprep.subr.mxu0 0.0
    %669 = vmatpush1.msra.mxu0 0.0
    %670 = vmatprep.subr.mxu0 0.0
    %671 = vmatpush1.msra.mxu0 0.0
    %672 = vmatprep.subr.mxu0 0.0
    %673 = vmatpush1.msra.mxu0 0.0
    %674 = vmatprep.mubr.f32.mxu0 0.0
    %675 = vmatmul.mubr.f32.gmra.mrb[0].mxu0 %v608
    %v676 = vpop.f32.mrb[0].mxu0
    %v677 = vadd.f32 %v66, %v676
    %v678 = vpop.f32.mrb[0].mxu0
    %679 = vmatprep.mubr.f32.mxu0 0.0
    %680 = vmatmul.mubr.f32.gmra.mrb[0].mxu0 %v609
    %v681 = vpop.f32.mrb[0].mxu0
    %v682 = vadd.f32 %v66, %v681
    %v683 = vpop.f32.mrb[0].mxu0
    %684 = vdwg.mxu0
    %v685 = vtanh.pop %v677
    %v686 = vtanh.pop %v682
    %v687 = vmul.f32 %v685, 0.22222222
    %v688 = vmul.f32 %v686, 0.22222222
    %v689 = vadd.f32 %v608, %v687
    %v690 = vadd.f32 %v609, %v688
    %691 = vmatprep.subr.mxu0 0.0
    %692 = vmatpush1.msra.mxu0 %v45
    %693 = vmatprep.subr.mxu0 0.0
    %694 = vmatpush1.msra.mxu0 %v46
    %695 = vmatprep.subr.mxu0 0.0
    %696 = vmatpush1.msra.mxu0 %v47
    %697 = vmatprep.subr.mxu0 0.0
    %698 = vmatpush1.msra.mxu0 %v48
    %699 = vmatprep.subr.mxu0 0.0
    %700 = vmatpush1.msra.mxu0 %v49
    %701 = vmatprep.subr.mxu0 0.0
    %702 = vmatpush1.msra.mxu0 %v50
    %703 = vmatprep.subr.mxu0 0.0
    %704 = vmatpush1.msra.mxu0 %v51
    %705 = vmatprep.subr.mxu0 0.0
    %706 = vmatpush1.msra.mxu0 %v52
    %707 = vmatprep.subr.mxu0 0.0
    %708 = vmatpush1.msra.mxu0 %v53
    %709 = vmatprep.subr.mxu0 0.0
    %710 = vmatpush1.msra.mxu0 %v54
    %711 = vmatprep.subr.mxu0 0.0
    %712 = vmatpush1.msra.mxu0 %v55
    %713 = vmatprep.subr.mxu0 0.0
    %714 = vmatpush1.msra.mxu0 %v56
    %715 = vmatprep.subr.mxu0 0.0
    %716 = vmatpush1.msra.mxu0 %v57
    %717 = vmatprep.subr.mxu0 0.0
    %718 = vmatpush1.msra.mxu0 %v58
    %719 = vmatprep.subr.mxu0 0.0
    %720 = vmatpush1.msra.mxu0 %v59
    %721 = vmatprep.subr.mxu0 0.0
    %722 = vmatpush1.msra.mxu0 %v60
    %723 = vmatprep.subr.mxu0 0.0
    %724 = vmatpush1.msra.mxu0 0.0
    %725 = vmatprep.subr.mxu0 0.0
    %726 = vmatpush1.msra.mxu0 0.0
    %727 = vmatprep.subr.mxu0 0.0
    %728 = vmatpush1.msra.mxu0 0.0
    %729 = vmatprep.subr.mxu0 0.0
    %730 = vmatpush1.msra.mxu0 0.0
    %731 = vmatprep.subr.mxu0 0.0
    %732 = vmatpush1.msra.mxu0 0.0
    %733 = vmatprep.subr.mxu0 0.0
    %734 = vmatpush1.msra.mxu0 0.0
    %735 = vmatprep.subr.mxu0 0.0
    %736 = vmatpush1.msra.mxu0 0.0
    %737 = vmatprep.subr.mxu0 0.0
    %738 = vmatpush1.msra.mxu0 0.0
    %739 = vmatprep.subr.mxu0 0.0
    %740 = vmatpush1.msra.mxu0 0.0
    %741 = vmatprep.subr.mxu0 0.0
    %742 = vmatpush1.msra.mxu0 0.0
    %743 = vmatprep.subr.mxu0 0.0
    %744 = vmatpush1.msra.mxu0 0.0
    %745 = vmatprep.subr.mxu0 0.0
    %746 = vmatpush1.msra.mxu0 0.0
    %747 = vmatprep.subr.mxu0 0.0
    %748 = vmatpush1.msra.mxu0 0.0
    %749 = vmatprep.subr.mxu0 0.0
    %750 = vmatpush1.msra.mxu0 0.0
    %751 = vmatprep.subr.mxu0 0.0
    %752 = vmatpush1.msra.mxu0 0.0
    %753 = vmatprep.subr.mxu0 0.0
    %754 = vmatpush1.msra.mxu0 0.0
    %755 = vmatprep.mubr.f32.mxu0 0.0
    %756 = vmatmul.mubr.f32.gmra.mrb[0].mxu0 %v689
    %v757 = vpop.f32.mrb[0].mxu0
    %v758 = vadd.f32 %v66, %v757
    %v759 = vpop.f32.mrb[0].mxu0
    %760 = vmatprep.mubr.f32.mxu0 0.0
    %761 = vmatmul.mubr.f32.gmra.mrb[0].mxu0 %v690
    %v762 = vpop.f32.mrb[0].mxu0
    %v763 = vadd.f32 %v66, %v762
    %v764 = vpop.f32.mrb[0].mxu0
    %765 = vdwg.mxu0
    %v766 = vtanh.pop %v758
    %v767 = vtanh.pop %v763
    %v768 = vmul.f32 %v685, 0.083333336
    %v769 = vmul.f32 %v686, 0.083333336
    %v770 = vadd.f32 %v608, %v768
    %v771 = vadd.f32 %v609, %v769
    %v772 = vmul.f32 %v766, 0.25
    %v773 = vmul.f32 %v767, 0.25
    %v774 = vadd.f32 %v770, %v772
    %v775 = vadd.f32 %v771, %v773
    %776 = vmatprep.subr.mxu0 0.0
    %777 = vmatpush1.msra.mxu0 %v45
    %778 = vmatprep.subr.mxu0 0.0
    %779 = vmatpush1.msra.mxu0 %v46
    %780 = vmatprep.subr.mxu0 0.0
    %781 = vmatpush1.msra.mxu0 %v47
    %782 = vmatprep.subr.mxu0 0.0
    %783 = vmatpush1.msra.mxu0 %v48
    %784 = vmatprep.subr.mxu0 0.0
    %785 = vmatpush1.msra.mxu0 %v49
    %786 = vmatprep.subr.mxu0 0.0
    %787 = vmatpush1.msra.mxu0 %v50
    %788 = vmatprep.subr.mxu0 0.0
    %789 = vmatpush1.msra.mxu0 %v51
    %790 = vmatprep.subr.mxu0 0.0
    %791 = vmatpush1.msra.mxu0 %v52
    %792 = vmatprep.subr.mxu0 0.0
    %793 = vmatpush1.msra.mxu0 %v53
    %794 = vmatprep.subr.mxu0 0.0
    %795 = vmatpush1.msra.mxu0 %v54
    %796 = vmatprep.subr.mxu0 0.0
    %797 = vmatpush1.msra.mxu0 %v55
    %798 = vmatprep.subr.mxu0 0.0
    %799 = vmatpush1.msra.mxu0 %v56
    %800 = vmatprep.subr.mxu0 0.0
    %801 = vmatpush1.msra.mxu0 %v57
    %802 = vmatprep.subr.mxu0 0.0
    %803 = vmatpush1.msra.mxu0 %v58
    %804 = vmatprep.subr.mxu0 0.0
    %805 = vmatpush1.msra.mxu0 %v59
    %806 = vmatprep.subr.mxu0 0.0
    %807 = vmatpush1.msra.mxu0 %v60
    %808 = vmatprep.subr.mxu0 0.0
    %809 = vmatpush1.msra.mxu0 0.0
    %810 = vmatprep.subr.mxu0 0.0
    %811 = vmatpush1.msra.mxu0 0.0
    %812 = vmatprep.subr.mxu0 0.0
    %813 = vmatpush1.msra.mxu0 0.0
    %814 = vmatprep.subr.mxu0 0.0
    %815 = vmatpush1.msra.mxu0 0.0
    %816 = vmatprep.subr.mxu0 0.0
    %817 = vmatpush1.msra.mxu0 0.0
    %818 = vmatprep.subr.mxu0 0.0
    %819 = vmatpush1.msra.mxu0 0.0
    %820 = vmatprep.subr.mxu0 0.0
    %821 = vmatpush1.msra.mxu0 0.0
    %822 = vmatprep.subr.mxu0 0.0
    %823 = vmatpush1.msra.mxu0 0.0
    %824 = vmatprep.subr.mxu0 0.0
    %825 = vmatpush1.msra.mxu0 0.0
    %826 = vmatprep.subr.mxu0 0.0
    %827 = vmatpush1.msra.mxu0 0.0
    %828 = vmatprep.subr.mxu0 0.0
    %829 = vmatpush1.msra.mxu0 0.0
    %830 = vmatprep.subr.mxu0 0.0
    %831 = vmatpush1.msra.mxu0 0.0
    %832 = vmatprep.subr.mxu0 0.0
    %833 = vmatpush1.msra.mxu0 0.0
    %834 = vmatprep.subr.mxu0 0.0
    %835 = vmatpush1.msra.mxu0 0.0
    %836 = vmatprep.subr.mxu0 0.0
    %837 = vmatpush1.msra.mxu0 0.0
    %838 = vmatprep.subr.mxu0 0.0
    %839 = vmatpush1.msra.mxu0 0.0
    %840 = vmatprep.mubr.f32.mxu0 0.0
    %841 = vmatmul.mubr.f32.gmra.mrb[0].mxu0 %v774
    %v842 = vpop.f32.mrb[0].mxu0
    %v843 = vadd.f32 %v66, %v842
    %v844 = vpop.f32.mrb[0].mxu0
    %845 = vmatprep.mubr.f32.mxu0 0.0
    %846 = vmatmul.mubr.f32.gmra.mrb[0].mxu0 %v775
    %v847 = vpop.f32.mrb[0].mxu0
    %v848 = vadd.f32 %v66, %v847
    %v849 = vpop.f32.mrb[0].mxu0
    %850 = vdwg.mxu0
    %v851 = vtanh.pop %v843
    %v852 = vtanh.pop %v848
    %v853 = vmul.f32 %v685, 1.0864197
    %v854 = vmul.f32 %v686, 1.0864197
    %v855 = vadd.f32 %v608, %v853
    %v856 = vadd.f32 %v609, %v854
    %v857 = vmul.f32 %v766, -4.148148
    %v858 = vmul.f32 %v767, -4.148148
    %v859 = vadd.f32 %v855, %v857
    %v860 = vadd.f32 %v856, %v858
    %v861 = vmul.f32 %v851, 3.9506173
    %v862 = vmul.f32 %v852, 3.9506173
    %v863 = vadd.f32 %v859, %v861
    %v864 = vadd.f32 %v860, %v862
    %865 = vmatprep.subr.mxu0 0.0
    %866 = vmatpush1.msra.mxu0 %v45
    %867 = vmatprep.subr.mxu0 0.0
    %868 = vmatpush1.msra.mxu0 %v46
    %869 = vmatprep.subr.mxu0 0.0
    %870 = vmatpush1.msra.mxu0 %v47
    %871 = vmatprep.subr.mxu0 0.0
    %872 = vmatpush1.msra.mxu0 %v48
    %873 = vmatprep.subr.mxu0 0.0
    %874 = vmatpush1.msra.mxu0 %v49
    %875 = vmatprep.subr.mxu0 0.0
    %876 = vmatpush1.msra.mxu0 %v50
    %877 = vmatprep.subr.mxu0 0.0
    %878 = vmatpush1.msra.mxu0 %v51
    %879 = vmatprep.subr.mxu0 0.0
    %880 = vmatpush1.msra.mxu0 %v52
    %881 = vmatprep.subr.mxu0 0.0
    %882 = vmatpush1.msra.mxu0 %v53
    %883 = vmatprep.subr.mxu0 0.0
    %884 = vmatpush1.msra.mxu0 %v54
    %885 = vmatprep.subr.mxu0 0.0
    %886 = vmatpush1.msra.mxu0 %v55
    %887 = vmatprep.subr.mxu0 0.0
    %888 = vmatpush1.msra.mxu0 %v56
    %889 = vmatprep.subr.mxu0 0.0
    %890 = vmatpush1.msra.mxu0 %v57
    %891 = vmatprep.subr.mxu0 0.0
    %892 = vmatpush1.msra.mxu0 %v58
    %893 = vmatprep.subr.mxu0 0.0
    %894 = vmatpush1.msra.mxu0 %v59
    %895 = vmatprep.subr.mxu0 0.0
    %896 = vmatpush1.msra.mxu0 %v60
    %897 = vmatprep.subr.mxu0 0.0
    %898 = vmatpush1.msra.mxu0 0.0
    %899 = vmatprep.subr.mxu0 0.0
    %900 = vmatpush1.msra.mxu0 0.0
    %901 = vmatprep.subr.mxu0 0.0
    %902 = vmatpush1.msra.mxu0 0.0
    %903 = vmatprep.subr.mxu0 0.0
    %904 = vmatpush1.msra.mxu0 0.0
    %905 = vmatprep.subr.mxu0 0.0
    %906 = vmatpush1.msra.mxu0 0.0
    %907 = vmatprep.subr.mxu0 0.0
    %908 = vmatpush1.msra.mxu0 0.0
    %909 = vmatprep.subr.mxu0 0.0
    %910 = vmatpush1.msra.mxu0 0.0
    %911 = vmatprep.subr.mxu0 0.0
    %912 = vmatpush1.msra.mxu0 0.0
    %913 = vmatprep.subr.mxu0 0.0
    %914 = vmatpush1.msra.mxu0 0.0
    %915 = vmatprep.subr.mxu0 0.0
    %916 = vmatpush1.msra.mxu0 0.0
    %917 = vmatprep.subr.mxu0 0.0
    %918 = vmatpush1.msra.mxu0 0.0
    %919 = vmatprep.subr.mxu0 0.0
    %920 = vmatpush1.msra.mxu0 0.0
    %921 = vmatprep.subr.mxu0 0.0
    %922 = vmatpush1.msra.mxu0 0.0
    %923 = vmatprep.subr.mxu0 0.0
    %924 = vmatpush1.msra.mxu0 0.0
    %925 = vmatprep.subr.mxu0 0.0
    %926 = vmatpush1.msra.mxu0 0.0
    %927 = vmatprep.subr.mxu0 0.0
    %928 = vmatpush1.msra.mxu0 0.0
    %929 = vmatprep.mubr.f32.mxu0 0.0
    %930 = vmatmul.mubr.f32.gmra.mrb[0].mxu0 %v863
    %v931 = vpop.f32.mrb[0].mxu0
    %v932 = vadd.f32 %v66, %v931
    %v933 = vpop.f32.mrb[0].mxu0
    %934 = vmatprep.mubr.f32.mxu0 0.0
    %935 = vmatmul.mubr.f32.gmra.mrb[0].mxu0 %v864
    %v936 = vpop.f32.mrb[0].mxu0
    %v937 = vadd.f32 %v66, %v936
    %v938 = vpop.f32.mrb[0].mxu0
    %939 = vdwg.mxu0
    %v940 = vtanh.pop %v932
    %v941 = vtanh.pop %v937
    %v942 = vmul.f32 %v685, 3.2806652
    %v943 = vmul.f32 %v686, 3.2806652
    %v944 = vadd.f32 %v608, %v942
    %v945 = vadd.f32 %v609, %v943
    %v946 = vmul.f32 %v766, -12.884214
    %v947 = vmul.f32 %v767, -12.884214
    %v948 = vadd.f32 %v944, %v946
    %v949 = vadd.f32 %v945, %v947
    %v950 = vmul.f32 %v851, 10.914326
    %v951 = vmul.f32 %v852, 10.914326
    %v952 = vadd.f32 %v948, %v950
    %v953 = vadd.f32 %v949, %v951
    %v954 = vmul.f32 %v940, -0.3231215
    %v955 = vmul.f32 %v941, -0.3231215
    %v956 = vadd.f32 %v952, %v954
    %v957 = vadd.f32 %v953, %v955
    %958 = vmatprep.subr.mxu0 0.0
    %959 = vmatpush1.msra.mxu0 %v45
    %960 = vmatprep.subr.mxu0 0.0
    %961 = vmatpush1.msra.mxu0 %v46
    %962 = vmatprep.subr.mxu0 0.0
    %963 = vmatpush1.msra.mxu0 %v47
    %964 = vmatprep.subr.mxu0 0.0
    %965 = vmatpush1.msra.mxu0 %v48
    %966 = vmatprep.subr.mxu0 0.0
    %967 = vmatpush1.msra.mxu0 %v49
    %968 = vmatprep.subr.mxu0 0.0
    %969 = vmatpush1.msra.mxu0 %v50
    %970 = vmatprep.subr.mxu0 0.0
    %971 = vmatpush1.msra.mxu0 %v51
    %972 = vmatprep.subr.mxu0 0.0
    %973 = vmatpush1.msra.mxu0 %v52
    %974 = vmatprep.subr.mxu0 0.0
    %975 = vmatpush1.msra.mxu0 %v53
    %976 = vmatprep.subr.mxu0 0.0
    %977 = vmatpush1.msra.mxu0 %v54
    %978 = vmatprep.subr.mxu0 0.0
    %979 = vmatpush1.msra.mxu0 %v55
    %980 = vmatprep.subr.mxu0 0.0
    %981 = vmatpush1.msra.mxu0 %v56
    %982 = vmatprep.subr.mxu0 0.0
    %983 = vmatpush1.msra.mxu0 %v57
    %984 = vmatprep.subr.mxu0 0.0
    %985 = vmatpush1.msra.mxu0 %v58
    %986 = vmatprep.subr.mxu0 0.0
    %987 = vmatpush1.msra.mxu0 %v59
    %988 = vmatprep.subr.mxu0 0.0
    %989 = vmatpush1.msra.mxu0 %v60
    %990 = vmatprep.subr.mxu0 0.0
    %991 = vmatpush1.msra.mxu0 0.0
    %992 = vmatprep.subr.mxu0 0.0
    %993 = vmatpush1.msra.mxu0 0.0
    %994 = vmatprep.subr.mxu0 0.0
    %995 = vmatpush1.msra.mxu0 0.0
    %996 = vmatprep.subr.mxu0 0.0
    %997 = vmatpush1.msra.mxu0 0.0
    %998 = vmatprep.subr.mxu0 0.0
    %999 = vmatpush1.msra.mxu0 0.0
    %1000 = vmatprep.subr.mxu0 0.0
    %1001 = vmatpush1.msra.mxu0 0.0
    %1002 = vmatprep.subr.mxu0 0.0
    %1003 = vmatpush1.msra.mxu0 0.0
    %1004 = vmatprep.subr.mxu0 0.0
    %1005 = vmatpush1.msra.mxu0 0.0
    %1006 = vmatprep.subr.mxu0 0.0
    %1007 = vmatpush1.msra.mxu0 0.0
    %1008 = vmatprep.subr.mxu0 0.0
    %1009 = vmatpush1.msra.mxu0 0.0
    %1010 = vmatprep.subr.mxu0 0.0
    %1011 = vmatpush1.msra.mxu0 0.0
    %1012 = vmatprep.subr.mxu0 0.0
    %1013 = vmatpush1.msra.mxu0 0.0
    %1014 = vmatprep.subr.mxu0 0.0
    %1015 = vmatpush1.msra.mxu0 0.0
    %1016 = vmatprep.subr.mxu0 0.0
    %1017 = vmatpush1.msra.mxu0 0.0
    %1018 = vmatprep.subr.mxu0 0.0
    %1019 = vmatpush1.msra.mxu0 0.0
    %1020 = vmatprep.subr.mxu0 0.0
    %1021 = vmatpush1.msra.mxu0 0.0
    %1022 = vmatprep.mubr.f32.mxu0 0.0
    %1023 = vmatmul.mubr.f32.gmra.mrb[0].mxu0 %v956
    %v1024 = vpop.f32.mrb[0].mxu0
    %v1025 = vadd.f32 %v66, %v1024
    %v1026 = vpop.f32.mrb[0].mxu0
    %1027 = vmatprep.mubr.f32.mxu0 0.0
    %1028 = vmatmul.mubr.f32.gmra.mrb[0].mxu0 %v957
    %v1029 = vpop.f32.mrb[0].mxu0
    %v1030 = vadd.f32 %v66, %v1029
    %v1031 = vpop.f32.mrb[0].mxu0
    %1032 = vdwg.mxu0
    %v1033 = vtanh.pop %v1025
    %v1034 = vtanh.pop %v1030
    %v1035 = vmul.f32 %v685, 3.162528
    %v1036 = vmul.f32 %v686, 3.162528
    %v1037 = vadd.f32 %v608, %v1035
    %v1038 = vadd.f32 %v609, %v1036
    %v1039 = vmul.f32 %v766, -11.952862
    %v1040 = vmul.f32 %v767, -11.952862
    %v1041 = vadd.f32 %v1037, %v1039
    %v1042 = vadd.f32 %v1038, %v1040
    %v1043 = vmul.f32 %v851, 9.896026
    %v1044 = vmul.f32 %v852, 9.896026
    %v1045 = vadd.f32 %v1041, %v1043
    %v1046 = vadd.f32 %v1042, %v1044
    %v1047 = vmul.f32 %v940, 0.30934343
    %v1048 = vmul.f32 %v941, 0.30934343
    %v1049 = vadd.f32 %v1045, %v1047
    %v1050 = vadd.f32 %v1046, %v1048
    %v1051 = vmul.f32 %v1033, -0.30392367
    %v1052 = vmul.f32 %v1034, -0.30392367
    %v1053 = vadd.f32 %v1049, %v1051
    %v1054 = vadd.f32 %v1050, %v1052
    %1055 = vmatprep.subr.mxu0 0.0
    %1056 = vmatpush1.msra.mxu0 %v45
    %1057 = vmatprep.subr.mxu0 0.0
    %1058 = vmatpush1.msra.mxu0 %v46
    %1059 = vmatprep.subr.mxu0 0.0
    %1060 = vmatpush1.msra.mxu0 %v47
    %1061 = vmatprep.subr.mxu0 0.0
    %1062 = vmatpush1.msra.mxu0 %v48
    %1063 = vmatprep.subr.mxu0 0.0
    %1064 = vmatpush1.msra.mxu0 %v49
    %1065 = vmatprep.subr.mxu0 0.0
    %1066 = vmatpush1.msra.mxu0 %v50
    %1067 = vmatprep.subr.mxu0 0.0
    %1068 = vmatpush1.msra.mxu0 %v51
    %1069 = vmatprep.subr.mxu0 0.0
    %1070 = vmatpush1.msra.mxu0 %v52
    %1071 = vmatprep.subr.mxu0 0.0
    %1072 = vmatpush1.msra.mxu0 %v53
    %1073 = vmatprep.subr.mxu0 0.0
    %1074 = vmatpush1.msra.mxu0 %v54
    %1075 = vmatprep.subr.mxu0 0.0
    %1076 = vmatpush1.msra.mxu0 %v55
    %1077 = vmatprep.subr.mxu0 0.0
    %1078 = vmatpush1.msra.mxu0 %v56
    %1079 = vmatprep.subr.mxu0 0.0
    %1080 = vmatpush1.msra.mxu0 %v57
    %1081 = vmatprep.subr.mxu0 0.0
    %1082 = vmatpush1.msra.mxu0 %v58
    %1083 = vmatprep.subr.mxu0 0.0
    %1084 = vmatpush1.msra.mxu0 %v59
    %1085 = vmatprep.subr.mxu0 0.0
    %1086 = vmatpush1.msra.mxu0 %v60
    %1087 = vmatprep.subr.mxu0 0.0
    %1088 = vmatpush1.msra.mxu0 0.0
    %1089 = vmatprep.subr.mxu0 0.0
    %1090 = vmatpush1.msra.mxu0 0.0
    %1091 = vmatprep.subr.mxu0 0.0
    %1092 = vmatpush1.msra.mxu0 0.0
    %1093 = vmatprep.subr.mxu0 0.0
    %1094 = vmatpush1.msra.mxu0 0.0
    %1095 = vmatprep.subr.mxu0 0.0
    %1096 = vmatpush1.msra.mxu0 0.0
    %1097 = vmatprep.subr.mxu0 0.0
    %1098 = vmatpush1.msra.mxu0 0.0
    %1099 = vmatprep.subr.mxu0 0.0
    %1100 = vmatpush1.msra.mxu0 0.0
    %1101 = vmatprep.subr.mxu0 0.0
    %1102 = vmatpush1.msra.mxu0 0.0
    %1103 = vmatprep.subr.mxu0 0.0
    %1104 = vmatpush1.msra.mxu0 0.0
    %1105 = vmatprep.subr.mxu0 0.0
    %1106 = vmatpush1.msra.mxu0 0.0
    %1107 = vmatprep.subr.mxu0 0.0
    %1108 = vmatpush1.msra.mxu0 0.0
    %1109 = vmatprep.subr.mxu0 0.0
    %1110 = vmatpush1.msra.mxu0 0.0
    %1111 = vmatprep.subr.mxu0 0.0
    %1112 = vmatpush1.msra.mxu0 0.0
    %1113 = vmatprep.subr.mxu0 0.0
    %1114 = vmatpush1.msra.mxu0 0.0
    %1115 = vmatprep.subr.mxu0 0.0
    %1116 = vmatpush1.msra.mxu0 0.0
    %1117 = vmatprep.subr.mxu0 0.0
    %1118 = vmatpush1.msra.mxu0 0.0
    %1119 = vmatprep.mubr.f32.mxu0 0.0
    %1120 = vmatmul.mubr.f32.gmra.mrb[0].mxu0 %v1053
    %v1121 = vpop.f32.mrb[0].mxu0
    %v1122 = vadd.f32 %v66, %v1121
    %v1123 = vpop.f32.mrb[0].mxu0
    %1124 = vmatprep.mubr.f32.mxu0 0.0
    %1125 = vmatmul.mubr.f32.gmra.mrb[0].mxu0 %v1054
    %v1126 = vpop.f32.mrb[0].mxu0
    %v1127 = vadd.f32 %v66, %v1126
    %v1128 = vpop.f32.mrb[0].mxu0
    %1129 = vdwg.mxu0
    %v1130 = vtanh.pop %v1122
    %v1131 = vtanh.pop %v1127
    %v1132 = vmul.f32 %v685, 0.10127315
    %v1133 = vmul.f32 %v686, 0.10127315
    %v1134 = vadd.f32 %v608, %v1132
    %v1135 = vadd.f32 %v609, %v1133
    %v1136 = vmul.f32 %v851, 0.49915144
    %v1137 = vmul.f32 %v852, 0.49915144
    %v1138 = vadd.f32 %v1134, %v1136
    %v1139 = vadd.f32 %v1135, %v1137
    %v1140 = vmul.f32 %v940, 0.7233796
    %v1141 = vmul.f32 %v941, 0.7233796
    %v1142 = vadd.f32 %v1138, %v1140
    %v1143 = vadd.f32 %v1139, %v1141
    %v1144 = vmul.f32 %v1033, -0.35819575
    %v1145 = vmul.f32 %v1034, -0.35819575
    %v1146 = vadd.f32 %v1142, %v1144
    %v1147 = vadd.f32 %v1143, %v1145
    %v1148 = vmul.f32 %v1130, 0.14550264
    %v1149 = vmul.f32 %v1131, 0.14550264
    %v1150 = vadd.f32 %v1146, %v1148
    %v1151 = vadd.f32 %v1147, %v1149
    %1152 = vmatprep.subr.mxu0 0.0
    %1153 = vmatpush1.msra.mxu0 %v45
    %1154 = vmatprep.subr.mxu0 0.0
    %1155 = vmatpush1.msra.mxu0 %v46
    %1156 = vmatprep.subr.mxu0 0.0
    %1157 = vmatpush1.msra.mxu0 %v47
    %1158 = vmatprep.subr.mxu0 0.0
    %1159 = vmatpush1.msra.mxu0 %v48
    %1160 = vmatprep.subr.mxu0 0.0
    %1161 = vmatpush1.msra.mxu0 %v49
    %1162 = vmatprep.subr.mxu0 0.0
    %1163 = vmatpush1.msra.mxu0 %v50
    %1164 = vmatprep.subr.mxu0 0.0
    %1165 = vmatpush1.msra.mxu0 %v51
    %1166 = vmatprep.subr.mxu0 0.0
    %1167 = vmatpush1.msra.mxu0 %v52
    %1168 = vmatprep.subr.mxu0 0.0
    %1169 = vmatpush1.msra.mxu0 %v53
    %1170 = vmatprep.subr.mxu0 0.0
    %1171 = vmatpush1.msra.mxu0 %v54
    %1172 = vmatprep.subr.mxu0 0.0
    %1173 = vmatpush1.msra.mxu0 %v55
    %1174 = vmatprep.subr.mxu0 0.0
    %1175 = vmatpush1.msra.mxu0 %v56
    %1176 = vmatprep.subr.mxu0 0.0
    %1177 = vmatpush1.msra.mxu0 %v57
    %1178 = vmatprep.subr.mxu0 0.0
    %1179 = vmatpush1.msra.mxu0 %v58
    %1180 = vmatprep.subr.mxu0 0.0
    %1181 = vmatpush1.msra.mxu0 %v59
    %1182 = vmatprep.subr.mxu0 0.0
    %1183 = vmatpush1.msra.mxu0 %v60
    %1184 = vmatprep.subr.mxu0 0.0
    %1185 = vmatpush1.msra.mxu0 0.0
    %1186 = vmatprep.subr.mxu0 0.0
    %1187 = vmatpush1.msra.mxu0 0.0
    %1188 = vmatprep.subr.mxu0 0.0
    %1189 = vmatpush1.msra.mxu0 0.0
    %1190 = vmatprep.subr.mxu0 0.0
    %1191 = vmatpush1.msra.mxu0 0.0
    %1192 = vmatprep.subr.mxu0 0.0
    %1193 = vmatpush1.msra.mxu0 0.0
    %1194 = vmatprep.subr.mxu0 0.0
    %1195 = vmatpush1.msra.mxu0 0.0
    %1196 = vmatprep.subr.mxu0 0.0
    %1197 = vmatpush1.msra.mxu0 0.0
    %1198 = vmatprep.subr.mxu0 0.0
    %1199 = vmatpush1.msra.mxu0 0.0
    %1200 = vmatprep.subr.mxu0 0.0
    %1201 = vmatpush1.msra.mxu0 0.0
    %1202 = vmatprep.subr.mxu0 0.0
    %1203 = vmatpush1.msra.mxu0 0.0
    %1204 = vmatprep.subr.mxu0 0.0
    %1205 = vmatpush1.msra.mxu0 0.0
    %1206 = vmatprep.subr.mxu0 0.0
    %1207 = vmatpush1.msra.mxu0 0.0
    %1208 = vmatprep.subr.mxu0 0.0
    %1209 = vmatpush1.msra.mxu0 0.0
    %1210 = vmatprep.subr.mxu0 0.0
    %1211 = vmatpush1.msra.mxu0 0.0
    %1212 = vmatprep.subr.mxu0 0.0
    %1213 = vmatpush1.msra.mxu0 0.0
    %1214 = vmatprep.subr.mxu0 0.0
    %1215 = vmatpush1.msra.mxu0 0.0
    %1216 = vmatprep.mubr.f32.mxu0 0.0
    %1217 = vmatmul.mubr.f32.gmra.mrb[0].mxu0 %v1150
    %v1218 = vpop.f32.mrb[0].mxu0
    %v1219 = vadd.f32 %v66, %v1218
    %v1220 = vpop.f32.mrb[0].mxu0
    %1221 = vmatprep.mubr.f32.mxu0 0.0
    %1222 = vmatmul.mubr.f32.gmra.mrb[0].mxu0 %v1151
    %v1223 = vpop.f32.mrb[0].mxu0
    %v1224 = vadd.f32 %v66, %v1223
    %v1225 = vpop.f32.mrb[0].mxu0
    %1226 = vdwg.mxu0
    %v1227 = vtanh.pop %v1219
    %v1228 = vtanh.pop %v1224
    %v1229 = vmul.f32 %v1227, 0.22222222
    %v1230 = vmul.f32 %v1228, 0.22222222
    %v1231 = vadd.f32 %v1150, %v1229
    %v1232 = vadd.f32 %v1151, %v1230
    %1233 = vmatprep.subr.mxu0 0.0
    %1234 = vmatpush1.msra.mxu0 %v45
    %1235 = vmatprep.subr.mxu0 0.0
    %1236 = vmatpush1.msra.mxu0 %v46
    %1237 = vmatprep.subr.mxu0 0.0
    %1238 = vmatpush1.msra.mxu0 %v47
    %1239 = vmatprep.subr.mxu0 0.0
    %1240 = vmatpush1.msra.mxu0 %v48
    %1241 = vmatprep.subr.mxu0 0.0
    %1242 = vmatpush1.msra.mxu0 %v49
    %1243 = vmatprep.subr.mxu0 0.0
    %1244 = vmatpush1.msra.mxu0 %v50
    %1245 = vmatprep.subr.mxu0 0.0
    %1246 = vmatpush1.msra.mxu0 %v51
    %1247 = vmatprep.subr.mxu0 0.0
    %1248 = vmatpush1.msra.mxu0 %v52
    %1249 = vmatprep.subr.mxu0 0.0
    %1250 = vmatpush1.msra.mxu0 %v53
    %1251 = vmatprep.subr.mxu0 0.0
    %1252 = vmatpush1.msra.mxu0 %v54
    %1253 = vmatprep.subr.mxu0 0.0
    %1254 = vmatpush1.msra.mxu0 %v55
    %1255 = vmatprep.subr.mxu0 0.0
    %1256 = vmatpush1.msra.mxu0 %v56
    %1257 = vmatprep.subr.mxu0 0.0
    %1258 = vmatpush1.msra.mxu0 %v57
    %1259 = vmatprep.subr.mxu0 0.0
    %1260 = vmatpush1.msra.mxu0 %v58
    %1261 = vmatprep.subr.mxu0 0.0
    %1262 = vmatpush1.msra.mxu0 %v59
    %1263 = vmatprep.subr.mxu0 0.0
    %1264 = vmatpush1.msra.mxu0 %v60
    %1265 = vmatprep.subr.mxu0 0.0
    %1266 = vmatpush1.msra.mxu0 0.0
    %1267 = vmatprep.subr.mxu0 0.0
    %1268 = vmatpush1.msra.mxu0 0.0
    %1269 = vmatprep.subr.mxu0 0.0
    %1270 = vmatpush1.msra.mxu0 0.0
    %1271 = vmatprep.subr.mxu0 0.0
    %1272 = vmatpush1.msra.mxu0 0.0
    %1273 = vmatprep.subr.mxu0 0.0
    %1274 = vmatpush1.msra.mxu0 0.0
    %1275 = vmatprep.subr.mxu0 0.0
    %1276 = vmatpush1.msra.mxu0 0.0
    %1277 = vmatprep.subr.mxu0 0.0
    %1278 = vmatpush1.msra.mxu0 0.0
    %1279 = vmatprep.subr.mxu0 0.0
    %1280 = vmatpush1.msra.mxu0 0.0
    %1281 = vmatprep.subr.mxu0 0.0
    %1282 = vmatpush1.msra.mxu0 0.0
    %1283 = vmatprep.subr.mxu0 0.0
    %1284 = vmatpush1.msra.mxu0 0.0
    %1285 = vmatprep.subr.mxu0 0.0
    %1286 = vmatpush1.msra.mxu0 0.0
    %1287 = vmatprep.subr.mxu0 0.0
    %1288 = vmatpush1.msra.mxu0 0.0
    %1289 = vmatprep.subr.mxu0 0.0
    %1290 = vmatpush1.msra.mxu0 0.0
    %1291 = vmatprep.subr.mxu0 0.0
    %1292 = vmatpush1.msra.mxu0 0.0
    %1293 = vmatprep.subr.mxu0 0.0
    %1294 = vmatpush1.msra.mxu0 0.0
    %1295 = vmatprep.subr.mxu0 0.0
    %1296 = vmatpush1.msra.mxu0 0.0
    %1297 = vmatprep.mubr.f32.mxu0 0.0
    %1298 = vmatmul.mubr.f32.gmra.mrb[0].mxu0 %v1231
    %v1299 = vpop.f32.mrb[0].mxu0
    %v1300 = vadd.f32 %v66, %v1299
    %v1301 = vpop.f32.mrb[0].mxu0
    %1302 = vmatprep.mubr.f32.mxu0 0.0
    %1303 = vmatmul.mubr.f32.gmra.mrb[0].mxu0 %v1232
    %v1304 = vpop.f32.mrb[0].mxu0
    %v1305 = vadd.f32 %v66, %v1304
    %v1306 = vpop.f32.mrb[0].mxu0
    %1307 = vdwg.mxu0
    %v1308 = vtanh.pop %v1300
    %v1309 = vtanh.pop %v1305
    %v1310 = vmul.f32 %v1227, 0.083333336
    %v1311 = vmul.f32 %v1228, 0.083333336
    %v1312 = vadd.f32 %v1150, %v1310
    %v1313 = vadd.f32 %v1151, %v1311
    %v1314 = vmul.f32 %v1308, 0.25
    %v1315 = vmul.f32 %v1309, 0.25
    %v1316 = vadd.f32 %v1312, %v1314
    %v1317 = vadd.f32 %v1313, %v1315
    %1318 = vmatprep.subr.mxu0 0.0
    %1319 = vmatpush1.msra.mxu0 %v45
    %1320 = vmatprep.subr.mxu0 0.0
    %1321 = vmatpush1.msra.mxu0 %v46
    %1322 = vmatprep.subr.mxu0 0.0
    %1323 = vmatpush1.msra.mxu0 %v47
    %1324 = vmatprep.subr.mxu0 0.0
    %1325 = vmatpush1.msra.mxu0 %v48
    %1326 = vmatprep.subr.mxu0 0.0
    %1327 = vmatpush1.msra.mxu0 %v49
    %1328 = vmatprep.subr.mxu0 0.0
    %1329 = vmatpush1.msra.mxu0 %v50
    %1330 = vmatprep.subr.mxu0 0.0
    %1331 = vmatpush1.msra.mxu0 %v51
    %1332 = vmatprep.subr.mxu0 0.0
    %1333 = vmatpush1.msra.mxu0 %v52
    %1334 = vmatprep.subr.mxu0 0.0
    %1335 = vmatpush1.msra.mxu0 %v53
    %1336 = vmatprep.subr.mxu0 0.0
    %1337 = vmatpush1.msra.mxu0 %v54
    %1338 = vmatprep.subr.mxu0 0.0
    %1339 = vmatpush1.msra.mxu0 %v55
    %1340 = vmatprep.subr.mxu0 0.0
    %1341 = vmatpush1.msra.mxu0 %v56
    %1342 = vmatprep.subr.mxu0 0.0
    %1343 = vmatpush1.msra.mxu0 %v57
    %1344 = vmatprep.subr.mxu0 0.0
    %1345 = vmatpush1.msra.mxu0 %v58
    %1346 = vmatprep.subr.mxu0 0.0
    %1347 = vmatpush1.msra.mxu0 %v59
    %1348 = vmatprep.subr.mxu0 0.0
    %1349 = vmatpush1.msra.mxu0 %v60
    %1350 = vmatprep.subr.mxu0 0.0
    %1351 = vmatpush1.msra.mxu0 0.0
    %1352 = vmatprep.subr.mxu0 0.0
    %1353 = vmatpush1.msra.mxu0 0.0
    %1354 = vmatprep.subr.mxu0 0.0
    %1355 = vmatpush1.msra.mxu0 0.0
    %1356 = vmatprep.subr.mxu0 0.0
    %1357 = vmatpush1.msra.mxu0 0.0
    %1358 = vmatprep.subr.mxu0 0.0
    %1359 = vmatpush1.msra.mxu0 0.0
    %1360 = vmatprep.subr.mxu0 0.0
    %1361 = vmatpush1.msra.mxu0 0.0
    %1362 = vmatprep.subr.mxu0 0.0
    %1363 = vmatpush1.msra.mxu0 0.0
    %1364 = vmatprep.subr.mxu0 0.0
    %1365 = vmatpush1.msra.mxu0 0.0
    %1366 = vmatprep.subr.mxu0 0.0
    %1367 = vmatpush1.msra.mxu0 0.0
    %1368 = vmatprep.subr.mxu0 0.0
    %1369 = vmatpush1.msra.mxu0 0.0
    %1370 = vmatprep.subr.mxu0 0.0
    %1371 = vmatpush1.msra.mxu0 0.0
    %1372 = vmatprep.subr.mxu0 0.0
    %1373 = vmatpush1.msra.mxu0 0.0
    %1374 = vmatprep.subr.mxu0 0.0
    %1375 = vmatpush1.msra.mxu0 0.0
    %1376 = vmatprep.subr.mxu0 0.0
    %1377 = vmatpush1.msra.mxu0 0.0
    %1378 = vmatprep.subr.mxu0 0.0
    %1379 = vmatpush1.msra.mxu0 0.0
    %1380 = vmatprep.subr.mxu0 0.0
    %1381 = vmatpush1.msra.mxu0 0.0
    %1382 = vmatprep.mubr.f32.mxu0 0.0
    %1383 = vmatmul.mubr.f32.gmra.mrb[0].mxu0 %v1316
    %v1384 = vpop.f32.mrb[0].mxu0
    %v1385 = vadd.f32 %v66, %v1384
    %v1386 = vpop.f32.mrb[0].mxu0
    %1387 = vmatprep.mubr.f32.mxu0 0.0
    %1388 = vmatmul.mubr.f32.gmra.mrb[0].mxu0 %v1317
    %v1389 = vpop.f32.mrb[0].mxu0
    %v1390 = vadd.f32 %v66, %v1389
    %v1391 = vpop.f32.mrb[0].mxu0
    %1392 = vdwg.mxu0
    %v1393 = vtanh.pop %v1385
    %v1394 = vtanh.pop %v1390
    %v1395 = vmul.f32 %v1227, 1.0864197
    %v1396 = vmul.f32 %v1228, 1.0864197
    %v1397 = vadd.f32 %v1150, %v1395
    %v1398 = vadd.f32 %v1151, %v1396
    %v1399 = vmul.f32 %v1308, -4.148148
    %v1400 = vmul.f32 %v1309, -4.148148
    %v1401 = vadd.f32 %v1397, %v1399
    %v1402 = vadd.f32 %v1398, %v1400
    %v1403 = vmul.f32 %v1393, 3.9506173
    %v1404 = vmul.f32 %v1394, 3.9506173
    %v1405 = vadd.f32 %v1401, %v1403
    %v1406 = vadd.f32 %v1402, %v1404
    %1407 = vmatprep.subr.mxu0 0.0
    %1408 = vmatpush1.msra.mxu0 %v45
    %1409 = vmatprep.subr.mxu0 0.0
    %1410 = vmatpush1.msra.mxu0 %v46
    %1411 = vmatprep.subr.mxu0 0.0
    %1412 = vmatpush1.msra.mxu0 %v47
    %1413 = vmatprep.subr.mxu0 0.0
    %1414 = vmatpush1.msra.mxu0 %v48
    %1415 = vmatprep.subr.mxu0 0.0
    %1416 = vmatpush1.msra.mxu0 %v49
    %1417 = vmatprep.subr.mxu0 0.0
    %1418 = vmatpush1.msra.mxu0 %v50
    %1419 = vmatprep.subr.mxu0 0.0
    %1420 = vmatpush1.msra.mxu0 %v51
    %1421 = vmatprep.subr.mxu0 0.0
    %1422 = vmatpush1.msra.mxu0 %v52
    %1423 = vmatprep.subr.mxu0 0.0
    %1424 = vmatpush1.msra.mxu0 %v53
    %1425 = vmatprep.subr.mxu0 0.0
    %1426 = vmatpush1.msra.mxu0 %v54
    %1427 = vmatprep.subr.mxu0 0.0
    %1428 = vmatpush1.msra.mxu0 %v55
    %1429 = vmatprep.subr.mxu0 0.0
    %1430 = vmatpush1.msra.mxu0 %v56
    %1431 = vmatprep.subr.mxu0 0.0
    %1432 = vmatpush1.msra.mxu0 %v57
    %1433 = vmatprep.subr.mxu0 0.0
    %1434 = vmatpush1.msra.mxu0 %v58
    %1435 = vmatprep.subr.mxu0 0.0
    %1436 = vmatpush1.msra.mxu0 %v59
    %1437 = vmatprep.subr.mxu0 0.0
    %1438 = vmatpush1.msra.mxu0 %v60
    %1439 = vmatprep.subr.mxu0 0.0
    %1440 = vmatpush1.msra.mxu0 0.0
    %1441 = vmatprep.subr.mxu0 0.0
    %1442 = vmatpush1.msra.mxu0 0.0
    %1443 = vmatprep.subr.mxu0 0.0
    %1444 = vmatpush1.msra.mxu0 0.0
    %1445 = vmatprep.subr.mxu0 0.0
    %1446 = vmatpush1.msra.mxu0 0.0
    %1447 = vmatprep.subr.mxu0 0.0
    %1448 = vmatpush1.msra.mxu0 0.0
    %1449 = vmatprep.subr.mxu0 0.0
    %1450 = vmatpush1.msra.mxu0 0.0
    %1451 = vmatprep.subr.mxu0 0.0
    %1452 = vmatpush1.msra.mxu0 0.0
    %1453 = vmatprep.subr.mxu0 0.0
    %1454 = vmatpush1.msra.mxu0 0.0
    %1455 = vmatprep.subr.mxu0 0.0
    %1456 = vmatpush1.msra.mxu0 0.0
    %1457 = vmatprep.subr.mxu0 0.0
    %1458 = vmatpush1.msra.mxu0 0.0
    %1459 = vmatprep.subr.mxu0 0.0
    %1460 = vmatpush1.msra.mxu0 0.0
    %1461 = vmatprep.subr.mxu0 0.0
    %1462 = vmatpush1.msra.mxu0 0.0
    %1463 = vmatprep.subr.mxu0 0.0
    %1464 = vmatpush1.msra.mxu0 0.0
    %1465 = vmatprep.subr.mxu0 0.0
    %1466 = vmatpush1.msra.mxu0 0.0
    %1467 = vmatprep.subr.mxu0 0.0
    %1468 = vmatpush1.msra.mxu0 0.0
    %1469 = vmatprep.subr.mxu0 0.0
    %1470 = vmatpush1.msra.mxu0 0.0
    %1471 = vmatprep.mubr.f32.mxu0 0.0
    %1472 = vmatmul.mubr.f32.gmra.mrb[0].mxu0 %v1405
    %v1473 = vpop.f32.mrb[0].mxu0
    %v1474 = vadd.f32 %v66, %v1473
    %v1475 = vpop.f32.mrb[0].mxu0
    %1476 = vmatprep.mubr.f32.mxu0 0.0
    %1477 = vmatmul.mubr.f32.gmra.mrb[0].mxu0 %v1406
    %v1478 = vpop.f32.mrb[0].mxu0
    %v1479 = vadd.f32 %v66, %v1478
    %v1480 = vpop.f32.mrb[0].mxu0
    %1481 = vdwg.mxu0
    %v1482 = vtanh.pop %v1474
    %v1483 = vtanh.pop %v1479
    %v1484 = vmul.f32 %v1227, 3.2806652
    %v1485 = vmul.f32 %v1228, 3.2806652
    %v1486 = vadd.f32 %v1150, %v1484
    %v1487 = vadd.f32 %v1151, %v1485
    %v1488 = vmul.f32 %v1308, -12.884214
    %v1489 = vmul.f32 %v1309, -12.884214
    %v1490 = vadd.f32 %v1486, %v1488
    %v1491 = vadd.f32 %v1487, %v1489
    %v1492 = vmul.f32 %v1393, 10.914326
    %v1493 = vmul.f32 %v1394, 10.914326
    %v1494 = vadd.f32 %v1490, %v1492
    %v1495 = vadd.f32 %v1491, %v1493
    %v1496 = vmul.f32 %v1482, -0.3231215
    %v1497 = vmul.f32 %v1483, -0.3231215
    %v1498 = vadd.f32 %v1494, %v1496
    %v1499 = vadd.f32 %v1495, %v1497
    %1500 = vmatprep.subr.mxu0 0.0
    %1501 = vmatpush1.msra.mxu0 %v45
    %1502 = vmatprep.subr.mxu0 0.0
    %1503 = vmatpush1.msra.mxu0 %v46
    %1504 = vmatprep.subr.mxu0 0.0
    %1505 = vmatpush1.msra.mxu0 %v47
    %1506 = vmatprep.subr.mxu0 0.0
    %1507 = vmatpush1.msra.mxu0 %v48
    %1508 = vmatprep.subr.mxu0 0.0
    %1509 = vmatpush1.msra.mxu0 %v49
    %1510 = vmatprep.subr.mxu0 0.0
    %1511 = vmatpush1.msra.mxu0 %v50
    %1512 = vmatprep.subr.mxu0 0.0
    %1513 = vmatpush1.msra.mxu0 %v51
    %1514 = vmatprep.subr.mxu0 0.0
    %1515 = vmatpush1.msra.mxu0 %v52
    %1516 = vmatprep.subr.mxu0 0.0
    %1517 = vmatpush1.msra.mxu0 %v53
    %1518 = vmatprep.subr.mxu0 0.0
    %1519 = vmatpush1.msra.mxu0 %v54
    %1520 = vmatprep.subr.mxu0 0.0
    %1521 = vmatpush1.msra.mxu0 %v55
    %1522 = vmatprep.subr.mxu0 0.0
    %1523 = vmatpush1.msra.mxu0 %v56
    %1524 = vmatprep.subr.mxu0 0.0
    %1525 = vmatpush1.msra.mxu0 %v57
    %1526 = vmatprep.subr.mxu0 0.0
    %1527 = vmatpush1.msra.mxu0 %v58
    %1528 = vmatprep.subr.mxu0 0.0
    %1529 = vmatpush1.msra.mxu0 %v59
    %1530 = vmatprep.subr.mxu0 0.0
    %1531 = vmatpush1.msra.mxu0 %v60
    %1532 = vmatprep.subr.mxu0 0.0
    %1533 = vmatpush1.msra.mxu0 0.0
    %1534 = vmatprep.subr.mxu0 0.0
    %1535 = vmatpush1.msra.mxu0 0.0
    %1536 = vmatprep.subr.mxu0 0.0
    %1537 = vmatpush1.msra.mxu0 0.0
    %1538 = vmatprep.subr.mxu0 0.0
    %1539 = vmatpush1.msra.mxu0 0.0
    %1540 = vmatprep.subr.mxu0 0.0
    %1541 = vmatpush1.msra.mxu0 0.0
    %1542 = vmatprep.subr.mxu0 0.0
    %1543 = vmatpush1.msra.mxu0 0.0
    %1544 = vmatprep.subr.mxu0 0.0
    %1545 = vmatpush1.msra.mxu0 0.0
    %1546 = vmatprep.subr.mxu0 0.0
    %1547 = vmatpush1.msra.mxu0 0.0
    %1548 = vmatprep.subr.mxu0 0.0
    %1549 = vmatpush1.msra.mxu0 0.0
    %1550 = vmatprep.subr.mxu0 0.0
    %1551 = vmatpush1.msra.mxu0 0.0
    %1552 = vmatprep.subr.mxu0 0.0
    %1553 = vmatpush1.msra.mxu0 0.0
    %1554 = vmatprep.subr.mxu0 0.0
    %1555 = vmatpush1.msra.mxu0 0.0
    %1556 = vmatprep.subr.mxu0 0.0
    %1557 = vmatpush1.msra.mxu0 0.0
    %1558 = vmatprep.subr.mxu0 0.0
    %1559 = vmatpush1.msra.mxu0 0.0
    %1560 = vmatprep.subr.mxu0 0.0
    %1561 = vmatpush1.msra.mxu0 0.0
    %1562 = vmatprep.subr.mxu0 0.0
    %1563 = vmatpush1.msra.mxu0 0.0
    %1564 = vmatprep.mubr.f32.mxu0 0.0
    %1565 = vmatmul.mubr.f32.gmra.mrb[0].mxu0 %v1498
    %v1566 = vpop.f32.mrb[0].mxu0
    %v1567 = vadd.f32 %v66, %v1566
    %v1568 = vpop.f32.mrb[0].mxu0
    %1569 = vmatprep.mubr.f32.mxu0 0.0
    %1570 = vmatmul.mubr.f32.gmra.mrb[0].mxu0 %v1499
    %v1571 = vpop.f32.mrb[0].mxu0
    %v1572 = vadd.f32 %v66, %v1571
    %v1573 = vpop.f32.mrb[0].mxu0
    %1574 = vdwg.mxu0
    %v1575 = vtanh.pop %v1567
    %v1576 = vtanh.pop %v1572
    %v1577 = vmul.f32 %v1227, 3.162528
    %v1578 = vmul.f32 %v1228, 3.162528
    %v1579 = vadd.f32 %v1150, %v1577
    %v1580 = vadd.f32 %v1151, %v1578
    %v1581 = vmul.f32 %v1308, -11.952862
    %v1582 = vmul.f32 %v1309, -11.952862
    %v1583 = vadd.f32 %v1579, %v1581
    %v1584 = vadd.f32 %v1580, %v1582
    %v1585 = vmul.f32 %v1393, 9.896026
    %v1586 = vmul.f32 %v1394, 9.896026
    %v1587 = vadd.f32 %v1583, %v1585
    %v1588 = vadd.f32 %v1584, %v1586
    %v1589 = vmul.f32 %v1482, 0.30934343
    %v1590 = vmul.f32 %v1483, 0.30934343
    %v1591 = vadd.f32 %v1587, %v1589
    %v1592 = vadd.f32 %v1588, %v1590
    %v1593 = vmul.f32 %v1575, -0.30392367
    %v1594 = vmul.f32 %v1576, -0.30392367
    %v1595 = vadd.f32 %v1591, %v1593
    %v1596 = vadd.f32 %v1592, %v1594
    %1597 = vmatprep.subr.mxu0 0.0
    %1598 = vmatpush1.msra.mxu0 %v45
    %1599 = vmatprep.subr.mxu0 0.0
    %1600 = vmatpush1.msra.mxu0 %v46
    %1601 = vmatprep.subr.mxu0 0.0
    %1602 = vmatpush1.msra.mxu0 %v47
    %1603 = vmatprep.subr.mxu0 0.0
    %1604 = vmatpush1.msra.mxu0 %v48
    %1605 = vmatprep.subr.mxu0 0.0
    %1606 = vmatpush1.msra.mxu0 %v49
    %1607 = vmatprep.subr.mxu0 0.0
    %1608 = vmatpush1.msra.mxu0 %v50
    %1609 = vmatprep.subr.mxu0 0.0
    %1610 = vmatpush1.msra.mxu0 %v51
    %1611 = vmatprep.subr.mxu0 0.0
    %1612 = vmatpush1.msra.mxu0 %v52
    %1613 = vmatprep.subr.mxu0 0.0
    %1614 = vmatpush1.msra.mxu0 %v53
    %1615 = vmatprep.subr.mxu0 0.0
    %1616 = vmatpush1.msra.mxu0 %v54
    %1617 = vmatprep.subr.mxu0 0.0
    %1618 = vmatpush1.msra.mxu0 %v55
    %1619 = vmatprep.subr.mxu0 0.0
    %1620 = vmatpush1.msra.mxu0 %v56
    %1621 = vmatprep.subr.mxu0 0.0
    %1622 = vmatpush1.msra.mxu0 %v57
    %1623 = vmatprep.subr.mxu0 0.0
    %1624 = vmatpush1.msra.mxu0 %v58
    %1625 = vmatprep.subr.mxu0 0.0
    %1626 = vmatpush1.msra.mxu0 %v59
    %1627 = vmatprep.subr.mxu0 0.0
    %1628 = vmatpush1.msra.mxu0 %v60
    %1629 = vmatprep.subr.mxu0 0.0
    %1630 = vmatpush1.msra.mxu0 0.0
    %1631 = vmatprep.subr.mxu0 0.0
    %1632 = vmatpush1.msra.mxu0 0.0
    %1633 = vmatprep.subr.mxu0 0.0
    %1634 = vmatpush1.msra.mxu0 0.0
    %1635 = vmatprep.subr.mxu0 0.0
    %1636 = vmatpush1.msra.mxu0 0.0
    %1637 = vmatprep.subr.mxu0 0.0
    %1638 = vmatpush1.msra.mxu0 0.0
    %1639 = vmatprep.subr.mxu0 0.0
    %1640 = vmatpush1.msra.mxu0 0.0
    %1641 = vmatprep.subr.mxu0 0.0
    %1642 = vmatpush1.msra.mxu0 0.0
    %1643 = vmatprep.subr.mxu0 0.0
    %1644 = vmatpush1.msra.mxu0 0.0
    %1645 = vmatprep.subr.mxu0 0.0
    %1646 = vmatpush1.msra.mxu0 0.0
    %1647 = vmatprep.subr.mxu0 0.0
    %1648 = vmatpush1.msra.mxu0 0.0
    %1649 = vmatprep.subr.mxu0 0.0
    %1650 = vmatpush1.msra.mxu0 0.0
    %1651 = vmatprep.subr.mxu0 0.0
    %1652 = vmatpush1.msra.mxu0 0.0
    %1653 = vmatprep.subr.mxu0 0.0
    %1654 = vmatpush1.msra.mxu0 0.0
    %1655 = vmatprep.subr.mxu0 0.0
    %1656 = vmatpush1.msra.mxu0 0.0
    %1657 = vmatprep.subr.mxu0 0.0
    %1658 = vmatpush1.msra.mxu0 0.0
    %1659 = vmatprep.subr.mxu0 0.0
    %1660 = vmatpush1.msra.mxu0 0.0
    %1661 = vmatprep.mubr.f32.mxu0 0.0
    %1662 = vmatmul.mubr.f32.gmra.mrb[0].mxu0 %v1595
    %v1663 = vpop.f32.mrb[0].mxu0
    %v1664 = vadd.f32 %v66, %v1663
    %v1665 = vpop.f32.mrb[0].mxu0
    %1666 = vmatprep.mubr.f32.mxu0 0.0
    %1667 = vmatmul.mubr.f32.gmra.mrb[0].mxu0 %v1596
    %v1668 = vpop.f32.mrb[0].mxu0
    %v1669 = vadd.f32 %v66, %v1668
    %v1670 = vpop.f32.mrb[0].mxu0
    %1671 = vdwg.mxu0
    %v1672 = vtanh.pop %v1664
    %v1673 = vtanh.pop %v1669
    %v1674 = vmul.f32 %v1227, 0.10127315
    %v1675 = vmul.f32 %v1228, 0.10127315
    %v1676 = vadd.f32 %v1150, %v1674
    %v1677 = vadd.f32 %v1151, %v1675
    %v1678 = vmul.f32 %v1393, 0.49915144
    %v1679 = vmul.f32 %v1394, 0.49915144
    %v1680 = vadd.f32 %v1676, %v1678
    %v1681 = vadd.f32 %v1677, %v1679
    %v1682 = vmul.f32 %v1482, 0.7233796
    %v1683 = vmul.f32 %v1483, 0.7233796
    %v1684 = vadd.f32 %v1680, %v1682
    %v1685 = vadd.f32 %v1681, %v1683
    %v1686 = vmul.f32 %v1575, -0.35819575
    %v1687 = vmul.f32 %v1576, -0.35819575
    %v1688 = vadd.f32 %v1684, %v1686
    %v1689 = vadd.f32 %v1685, %v1687
    %v1690 = vmul.f32 %v1672, 0.14550264
    %v1691 = vmul.f32 %v1673, 0.14550264
    %v1692 = vadd.f32 %v1688, %v1690
    %v1693 = vadd.f32 %v1689, %v1691
    %1694 = vmatprep.subr.mxu0 0.0
    %1695 = vmatpush1.msra.mxu0 %v45
    %1696 = vmatprep.subr.mxu0 0.0
    %1697 = vmatpush1.msra.mxu0 %v46
    %1698 = vmatprep.subr.mxu0 0.0
    %1699 = vmatpush1.msra.mxu0 %v47
    %1700 = vmatprep.subr.mxu0 0.0
    %1701 = vmatpush1.msra.mxu0 %v48
    %1702 = vmatprep.subr.mxu0 0.0
    %1703 = vmatpush1.msra.mxu0 %v49
    %1704 = vmatprep.subr.mxu0 0.0
    %1705 = vmatpush1.msra.mxu0 %v50
    %1706 = vmatprep.subr.mxu0 0.0
    %1707 = vmatpush1.msra.mxu0 %v51
    %1708 = vmatprep.subr.mxu0 0.0
    %1709 = vmatpush1.msra.mxu0 %v52
    %1710 = vmatprep.subr.mxu0 0.0
    %1711 = vmatpush1.msra.mxu0 %v53
    %1712 = vmatprep.subr.mxu0 0.0
    %1713 = vmatpush1.msra.mxu0 %v54
    %1714 = vmatprep.subr.mxu0 0.0
    %1715 = vmatpush1.msra.mxu0 %v55
    %1716 = vmatprep.subr.mxu0 0.0
    %1717 = vmatpush1.msra.mxu0 %v56
    %1718 = vmatprep.subr.mxu0 0.0
    %1719 = vmatpush1.msra.mxu0 %v57
    %1720 = vmatprep.subr.mxu0 0.0
    %1721 = vmatpush1.msra.mxu0 %v58
    %1722 = vmatprep.subr.mxu0 0.0
    %1723 = vmatpush1.msra.mxu0 %v59
    %1724 = vmatprep.subr.mxu0 0.0
    %1725 = vmatpush1.msra.mxu0 %v60
    %1726 = vmatprep.subr.mxu0 0.0
    %1727 = vmatpush1.msra.mxu0 0.0
    %1728 = vmatprep.subr.mxu0 0.0
    %1729 = vmatpush1.msra.mxu0 0.0
    %1730 = vmatprep.subr.mxu0 0.0
    %1731 = vmatpush1.msra.mxu0 0.0
    %1732 = vmatprep.subr.mxu0 0.0
    %1733 = vmatpush1.msra.mxu0 0.0
    %1734 = vmatprep.subr.mxu0 0.0
    %1735 = vmatpush1.msra.mxu0 0.0
    %1736 = vmatprep.subr.mxu0 0.0
    %1737 = vmatpush1.msra.mxu0 0.0
    %1738 = vmatprep.subr.mxu0 0.0
    %1739 = vmatpush1.msra.mxu0 0.0
    %1740 = vmatprep.subr.mxu0 0.0
    %1741 = vmatpush1.msra.mxu0 0.0
    %1742 = vmatprep.subr.mxu0 0.0
    %1743 = vmatpush1.msra.mxu0 0.0
    %1744 = vmatprep.subr.mxu0 0.0
    %1745 = vmatpush1.msra.mxu0 0.0
    %1746 = vmatprep.subr.mxu0 0.0
    %1747 = vmatpush1.msra.mxu0 0.0
    %1748 = vmatprep.subr.mxu0 0.0
    %1749 = vmatpush1.msra.mxu0 0.0
    %1750 = vmatprep.subr.mxu0 0.0
    %1751 = vmatpush1.msra.mxu0 0.0
    %1752 = vmatprep.subr.mxu0 0.0
    %1753 = vmatpush1.msra.mxu0 0.0
    %1754 = vmatprep.subr.mxu0 0.0
    %1755 = vmatpush1.msra.mxu0 0.0
    %1756 = vmatprep.subr.mxu0 0.0
    %1757 = vmatpush1.msra.mxu0 0.0
    %1758 = vmatprep.mubr.f32.mxu0 0.0
    %1759 = vmatmul.mubr.f32.gmra.mrb[0].mxu0 %v1692
    %v1760 = vpop.f32.mrb[0].mxu0
    %v1761 = vadd.f32 %v66, %v1760
    %v1762 = vpop.f32.mrb[0].mxu0
    %1763 = vmatprep.mubr.f32.mxu0 0.0
    %1764 = vmatmul.mubr.f32.gmra.mrb[0].mxu0 %v1693
    %v1765 = vpop.f32.mrb[0].mxu0
    %v1766 = vadd.f32 %v66, %v1765
    %v1767 = vpop.f32.mrb[0].mxu0
    %1768 = vdwg.mxu0
    %v1769 = vtanh.pop %v1761
    %v1770 = vtanh.pop %v1766
    %v1771 = vmul.f32 %v1769, 0.22222222
    %v1772 = vmul.f32 %v1770, 0.22222222
    %v1773 = vadd.f32 %v1692, %v1771
    %v1774 = vadd.f32 %v1693, %v1772
    %1775 = vmatprep.subr.mxu0 0.0
    %1776 = vmatpush1.msra.mxu0 %v45
    %1777 = vmatprep.subr.mxu0 0.0
    %1778 = vmatpush1.msra.mxu0 %v46
    %1779 = vmatprep.subr.mxu0 0.0
    %1780 = vmatpush1.msra.mxu0 %v47
    %1781 = vmatprep.subr.mxu0 0.0
    %1782 = vmatpush1.msra.mxu0 %v48
    %1783 = vmatprep.subr.mxu0 0.0
    %1784 = vmatpush1.msra.mxu0 %v49
    %1785 = vmatprep.subr.mxu0 0.0
    %1786 = vmatpush1.msra.mxu0 %v50
    %1787 = vmatprep.subr.mxu0 0.0
    %1788 = vmatpush1.msra.mxu0 %v51
    %1789 = vmatprep.subr.mxu0 0.0
    %1790 = vmatpush1.msra.mxu0 %v52
    %1791 = vmatprep.subr.mxu0 0.0
    %1792 = vmatpush1.msra.mxu0 %v53
    %1793 = vmatprep.subr.mxu0 0.0
    %1794 = vmatpush1.msra.mxu0 %v54
    %1795 = vmatprep.subr.mxu0 0.0
    %1796 = vmatpush1.msra.mxu0 %v55
    %1797 = vmatprep.subr.mxu0 0.0
    %1798 = vmatpush1.msra.mxu0 %v56
    %1799 = vmatprep.subr.mxu0 0.0
    %1800 = vmatpush1.msra.mxu0 %v57
    %1801 = vmatprep.subr.mxu0 0.0
    %1802 = vmatpush1.msra.mxu0 %v58
    %1803 = vmatprep.subr.mxu0 0.0
    %1804 = vmatpush1.msra.mxu0 %v59
    %1805 = vmatprep.subr.mxu0 0.0
    %1806 = vmatpush1.msra.mxu0 %v60
    %1807 = vmatprep.subr.mxu0 0.0
    %1808 = vmatpush1.msra.mxu0 0.0
    %1809 = vmatprep.subr.mxu0 0.0
    %1810 = vmatpush1.msra.mxu0 0.0
    %1811 = vmatprep.subr.mxu0 0.0
    %1812 = vmatpush1.msra.mxu0 0.0
    %1813 = vmatprep.subr.mxu0 0.0
    %1814 = vmatpush1.msra.mxu0 0.0
    %1815 = vmatprep.subr.mxu0 0.0
    %1816 = vmatpush1.msra.mxu0 0.0
    %1817 = vmatprep.subr.mxu0 0.0
    %1818 = vmatpush1.msra.mxu0 0.0
    %1819 = vmatprep.subr.mxu0 0.0
    %1820 = vmatpush1.msra.mxu0 0.0
    %1821 = vmatprep.subr.mxu0 0.0
    %1822 = vmatpush1.msra.mxu0 0.0
    %1823 = vmatprep.subr.mxu0 0.0
    %1824 = vmatpush1.msra.mxu0 0.0
    %1825 = vmatprep.subr.mxu0 0.0
    %1826 = vmatpush1.msra.mxu0 0.0
    %1827 = vmatprep.subr.mxu0 0.0
    %1828 = vmatpush1.msra.mxu0 0.0
    %1829 = vmatprep.subr.mxu0 0.0
    %1830 = vmatpush1.msra.mxu0 0.0
    %1831 = vmatprep.subr.mxu0 0.0
    %1832 = vmatpush1.msra.mxu0 0.0
    %1833 = vmatprep.subr.mxu0 0.0
    %1834 = vmatpush1.msra.mxu0 0.0
    %1835 = vmatprep.subr.mxu0 0.0
    %1836 = vmatpush1.msra.mxu0 0.0
    %1837 = vmatprep.subr.mxu0 0.0
    %1838 = vmatpush1.msra.mxu0 0.0
    %1839 = vmatprep.mubr.f32.mxu0 0.0
    %1840 = vmatmul.mubr.f32.gmra.mrb[0].mxu0 %v1773
    %v1841 = vpop.f32.mrb[0].mxu0
    %v1842 = vadd.f32 %v66, %v1841
    %v1843 = vpop.f32.mrb[0].mxu0
    %1844 = vmatprep.mubr.f32.mxu0 0.0
    %1845 = vmatmul.mubr.f32.gmra.mrb[0].mxu0 %v1774
    %v1846 = vpop.f32.mrb[0].mxu0
    %v1847 = vadd.f32 %v66, %v1846
    %v1848 = vpop.f32.mrb[0].mxu0
    %1849 = vdwg.mxu0
    %v1850 = vtanh.pop %v1842
    %v1851 = vtanh.pop %v1847
    %v1852 = vmul.f32 %v1769, 0.083333336
    %v1853 = vmul.f32 %v1770, 0.083333336
    %v1854 = vadd.f32 %v1692, %v1852
    %v1855 = vadd.f32 %v1693, %v1853
    %v1856 = vmul.f32 %v1850, 0.25
    %v1857 = vmul.f32 %v1851, 0.25
    %v1858 = vadd.f32 %v1854, %v1856
    %v1859 = vadd.f32 %v1855, %v1857
    %1860 = vmatprep.subr.mxu0 0.0
    %1861 = vmatpush1.msra.mxu0 %v45
    %1862 = vmatprep.subr.mxu0 0.0
    %1863 = vmatpush1.msra.mxu0 %v46
    %1864 = vmatprep.subr.mxu0 0.0
    %1865 = vmatpush1.msra.mxu0 %v47
    %1866 = vmatprep.subr.mxu0 0.0
    %1867 = vmatpush1.msra.mxu0 %v48
    %1868 = vmatprep.subr.mxu0 0.0
    %1869 = vmatpush1.msra.mxu0 %v49
    %1870 = vmatprep.subr.mxu0 0.0
    %1871 = vmatpush1.msra.mxu0 %v50
    %1872 = vmatprep.subr.mxu0 0.0
    %1873 = vmatpush1.msra.mxu0 %v51
    %1874 = vmatprep.subr.mxu0 0.0
    %1875 = vmatpush1.msra.mxu0 %v52
    %1876 = vmatprep.subr.mxu0 0.0
    %1877 = vmatpush1.msra.mxu0 %v53
    %1878 = vmatprep.subr.mxu0 0.0
    %1879 = vmatpush1.msra.mxu0 %v54
    %1880 = vmatprep.subr.mxu0 0.0
    %1881 = vmatpush1.msra.mxu0 %v55
    %1882 = vmatprep.subr.mxu0 0.0
    %1883 = vmatpush1.msra.mxu0 %v56
    %1884 = vmatprep.subr.mxu0 0.0
    %1885 = vmatpush1.msra.mxu0 %v57
    %1886 = vmatprep.subr.mxu0 0.0
    %1887 = vmatpush1.msra.mxu0 %v58
    %1888 = vmatprep.subr.mxu0 0.0
    %1889 = vmatpush1.msra.mxu0 %v59
    %1890 = vmatprep.subr.mxu0 0.0
    %1891 = vmatpush1.msra.mxu0 %v60
    %1892 = vmatprep.subr.mxu0 0.0
    %1893 = vmatpush1.msra.mxu0 0.0
    %1894 = vmatprep.subr.mxu0 0.0
    %1895 = vmatpush1.msra.mxu0 0.0
    %1896 = vmatprep.subr.mxu0 0.0
    %1897 = vmatpush1.msra.mxu0 0.0
    %1898 = vmatprep.subr.mxu0 0.0
    %1899 = vmatpush1.msra.mxu0 0.0
    %1900 = vmatprep.subr.mxu0 0.0
    %1901 = vmatpush1.msra.mxu0 0.0
    %1902 = vmatprep.subr.mxu0 0.0
    %1903 = vmatpush1.msra.mxu0 0.0
    %1904 = vmatprep.subr.mxu0 0.0
    %1905 = vmatpush1.msra.mxu0 0.0
    %1906 = vmatprep.subr.mxu0 0.0
    %1907 = vmatpush1.msra.mxu0 0.0
    %1908 = vmatprep.subr.mxu0 0.0
    %1909 = vmatpush1.msra.mxu0 0.0
    %1910 = vmatprep.subr.mxu0 0.0
    %1911 = vmatpush1.msra.mxu0 0.0
    %1912 = vmatprep.subr.mxu0 0.0
    %1913 = vmatpush1.msra.mxu0 0.0
    %1914 = vmatprep.subr.mxu0 0.0
    %1915 = vmatpush1.msra.mxu0 0.0
    %1916 = vmatprep.subr.mxu0 0.0
    %1917 = vmatpush1.msra.mxu0 0.0
    %1918 = vmatprep.subr.mxu0 0.0
    %1919 = vmatpush1.msra.mxu0 0.0
    %1920 = vmatprep.subr.mxu0 0.0
    %1921 = vmatpush1.msra.mxu0 0.0
    %1922 = vmatprep.subr.mxu0 0.0
    %1923 = vmatpush1.msra.mxu0 0.0
    %1924 = vmatprep.mubr.f32.mxu0 0.0
    %1925 = vmatmul.mubr.f32.gmra.mrb[0].mxu0 %v1858
    %v1926 = vpop.f32.mrb[0].mxu0
    %v1927 = vadd.f32 %v66, %v1926
    %v1928 = vpop.f32.mrb[0].mxu0
    %1929 = vmatprep.mubr.f32.mxu0 0.0
    %1930 = vmatmul.mubr.f32.gmra.mrb[0].mxu0 %v1859
    %v1931 = vpop.f32.mrb[0].mxu0
    %v1932 = vadd.f32 %v66, %v1931
    %v1933 = vpop.f32.mrb[0].mxu0
    %1934 = vdwg.mxu0
    %v1935 = vtanh.pop %v1927
    %v1936 = vtanh.pop %v1932
    %v1937 = vmul.f32 %v1769, 1.0864197
    %v1938 = vmul.f32 %v1770, 1.0864197
    %v1939 = vadd.f32 %v1692, %v1937
    %v1940 = vadd.f32 %v1693, %v1938
    %v1941 = vmul.f32 %v1850, -4.148148
    %v1942 = vmul.f32 %v1851, -4.148148
    %v1943 = vadd.f32 %v1939, %v1941
    %v1944 = vadd.f32 %v1940, %v1942
    %v1945 = vmul.f32 %v1935, 3.9506173
    %v1946 = vmul.f32 %v1936, 3.9506173
    %v1947 = vadd.f32 %v1943, %v1945
    %v1948 = vadd.f32 %v1944, %v1946
    %1949 = vmatprep.subr.mxu0 0.0
    %1950 = vmatpush1.msra.mxu0 %v45
    %1951 = vmatprep.subr.mxu0 0.0
    %1952 = vmatpush1.msra.mxu0 %v46
    %1953 = vmatprep.subr.mxu0 0.0
    %1954 = vmatpush1.msra.mxu0 %v47
    %1955 = vmatprep.subr.mxu0 0.0
    %1956 = vmatpush1.msra.mxu0 %v48
    %1957 = vmatprep.subr.mxu0 0.0
    %1958 = vmatpush1.msra.mxu0 %v49
    %1959 = vmatprep.subr.mxu0 0.0
    %1960 = vmatpush1.msra.mxu0 %v50
    %1961 = vmatprep.subr.mxu0 0.0
    %1962 = vmatpush1.msra.mxu0 %v51
    %1963 = vmatprep.subr.mxu0 0.0
    %1964 = vmatpush1.msra.mxu0 %v52
    %1965 = vmatprep.subr.mxu0 0.0
    %1966 = vmatpush1.msra.mxu0 %v53
    %1967 = vmatprep.subr.mxu0 0.0
    %1968 = vmatpush1.msra.mxu0 %v54
    %1969 = vmatprep.subr.mxu0 0.0
    %1970 = vmatpush1.msra.mxu0 %v55
    %1971 = vmatprep.subr.mxu0 0.0
    %1972 = vmatpush1.msra.mxu0 %v56
    %1973 = vmatprep.subr.mxu0 0.0
    %1974 = vmatpush1.msra.mxu0 %v57
    %1975 = vmatprep.subr.mxu0 0.0
    %1976 = vmatpush1.msra.mxu0 %v58
    %1977 = vmatprep.subr.mxu0 0.0
    %1978 = vmatpush1.msra.mxu0 %v59
    %1979 = vmatprep.subr.mxu0 0.0
    %1980 = vmatpush1.msra.mxu0 %v60
    %1981 = vmatprep.subr.mxu0 0.0
    %1982 = vmatpush1.msra.mxu0 0.0
    %1983 = vmatprep.subr.mxu0 0.0
    %1984 = vmatpush1.msra.mxu0 0.0
    %1985 = vmatprep.subr.mxu0 0.0
    %1986 = vmatpush1.msra.mxu0 0.0
    %1987 = vmatprep.subr.mxu0 0.0
    %1988 = vmatpush1.msra.mxu0 0.0
    %1989 = vmatprep.subr.mxu0 0.0
    %1990 = vmatpush1.msra.mxu0 0.0
    %1991 = vmatprep.subr.mxu0 0.0
    %1992 = vmatpush1.msra.mxu0 0.0
    %1993 = vmatprep.subr.mxu0 0.0
    %1994 = vmatpush1.msra.mxu0 0.0
    %1995 = vmatprep.subr.mxu0 0.0
    %1996 = vmatpush1.msra.mxu0 0.0
    %1997 = vmatprep.subr.mxu0 0.0
    %1998 = vmatpush1.msra.mxu0 0.0
    %1999 = vmatprep.subr.mxu0 0.0
    %2000 = vmatpush1.msra.mxu0 0.0
    %2001 = vmatprep.subr.mxu0 0.0
    %2002 = vmatpush1.msra.mxu0 0.0
    %2003 = vmatprep.subr.mxu0 0.0
    %2004 = vmatpush1.msra.mxu0 0.0
    %2005 = vmatprep.subr.mxu0 0.0
    %2006 = vmatpush1.msra.mxu0 0.0
    %2007 = vmatprep.subr.mxu0 0.0
    %2008 = vmatpush1.msra.mxu0 0.0
    %2009 = vmatprep.subr.mxu0 0.0
    %2010 = vmatpush1.msra.mxu0 0.0
    %2011 = vmatprep.subr.mxu0 0.0
    %2012 = vmatpush1.msra.mxu0 0.0
    %2013 = vmatprep.mubr.f32.mxu0 0.0
    %2014 = vmatmul.mubr.f32.gmra.mrb[0].mxu0 %v1947
    %v2015 = vpop.f32.mrb[0].mxu0
    %v2016 = vadd.f32 %v66, %v2015
    %v2017 = vpop.f32.mrb[0].mxu0
    %2018 = vmatprep.mubr.f32.mxu0 0.0
    %2019 = vmatmul.mubr.f32.gmra.mrb[0].mxu0 %v1948
    %v2020 = vpop.f32.mrb[0].mxu0
    %v2021 = vadd.f32 %v66, %v2020
    %v2022 = vpop.f32.mrb[0].mxu0
    %2023 = vdwg.mxu0
    %v2024 = vtanh.pop %v2016
    %v2025 = vtanh.pop %v2021
    %v2026 = vmul.f32 %v1769, 3.2806652
    %v2027 = vmul.f32 %v1770, 3.2806652
    %v2028 = vadd.f32 %v1692, %v2026
    %v2029 = vadd.f32 %v1693, %v2027
    %v2030 = vmul.f32 %v1850, -12.884214
    %v2031 = vmul.f32 %v1851, -12.884214
    %v2032 = vadd.f32 %v2028, %v2030
    %v2033 = vadd.f32 %v2029, %v2031
    %v2034 = vmul.f32 %v1935, 10.914326
    %v2035 = vmul.f32 %v1936, 10.914326
    %v2036 = vadd.f32 %v2032, %v2034
    %v2037 = vadd.f32 %v2033, %v2035
    %v2038 = vmul.f32 %v2024, -0.3231215
    %v2039 = vmul.f32 %v2025, -0.3231215
    %v2040 = vadd.f32 %v2036, %v2038
    %v2041 = vadd.f32 %v2037, %v2039
    %2042 = vmatprep.subr.mxu0 0.0
    %2043 = vmatpush1.msra.mxu0 %v45
    %2044 = vmatprep.subr.mxu0 0.0
    %2045 = vmatpush1.msra.mxu0 %v46
    %2046 = vmatprep.subr.mxu0 0.0
    %2047 = vmatpush1.msra.mxu0 %v47
    %2048 = vmatprep.subr.mxu0 0.0
    %2049 = vmatpush1.msra.mxu0 %v48
    %2050 = vmatprep.subr.mxu0 0.0
    %2051 = vmatpush1.msra.mxu0 %v49
    %2052 = vmatprep.subr.mxu0 0.0
    %2053 = vmatpush1.msra.mxu0 %v50
    %2054 = vmatprep.subr.mxu0 0.0
    %2055 = vmatpush1.msra.mxu0 %v51
    %2056 = vmatprep.subr.mxu0 0.0
    %2057 = vmatpush1.msra.mxu0 %v52
    %2058 = vmatprep.subr.mxu0 0.0
    %2059 = vmatpush1.msra.mxu0 %v53
    %2060 = vmatprep.subr.mxu0 0.0
    %2061 = vmatpush1.msra.mxu0 %v54
    %2062 = vmatprep.subr.mxu0 0.0
    %2063 = vmatpush1.msra.mxu0 %v55
    %2064 = vmatprep.subr.mxu0 0.0
    %2065 = vmatpush1.msra.mxu0 %v56
    %2066 = vmatprep.subr.mxu0 0.0
    %2067 = vmatpush1.msra.mxu0 %v57
    %2068 = vmatprep.subr.mxu0 0.0
    %2069 = vmatpush1.msra.mxu0 %v58
    %2070 = vmatprep.subr.mxu0 0.0
    %2071 = vmatpush1.msra.mxu0 %v59
    %2072 = vmatprep.subr.mxu0 0.0
    %2073 = vmatpush1.msra.mxu0 %v60
    %2074 = vmatprep.subr.mxu0 0.0
    %2075 = vmatpush1.msra.mxu0 0.0
    %2076 = vmatprep.subr.mxu0 0.0
    %2077 = vmatpush1.msra.mxu0 0.0
    %2078 = vmatprep.subr.mxu0 0.0
    %2079 = vmatpush1.msra.mxu0 0.0
    %2080 = vmatprep.subr.mxu0 0.0
    %2081 = vmatpush1.msra.mxu0 0.0
    %2082 = vmatprep.subr.mxu0 0.0
    %2083 = vmatpush1.msra.mxu0 0.0
    %2084 = vmatprep.subr.mxu0 0.0
    %2085 = vmatpush1.msra.mxu0 0.0
    %2086 = vmatprep.subr.mxu0 0.0
    %2087 = vmatpush1.msra.mxu0 0.0
    %2088 = vmatprep.subr.mxu0 0.0
    %2089 = vmatpush1.msra.mxu0 0.0
    %2090 = vmatprep.subr.mxu0 0.0
    %2091 = vmatpush1.msra.mxu0 0.0
    %2092 = vmatprep.subr.mxu0 0.0
    %2093 = vmatpush1.msra.mxu0 0.0
    %2094 = vmatprep.subr.mxu0 0.0
    %2095 = vmatpush1.msra.mxu0 0.0
    %2096 = vmatprep.subr.mxu0 0.0
    %2097 = vmatpush1.msra.mxu0 0.0
    %2098 = vmatprep.subr.mxu0 0.0
    %2099 = vmatpush1.msra.mxu0 0.0
    %2100 = vmatprep.subr.mxu0 0.0
    %2101 = vmatpush1.msra.mxu0 0.0
    %2102 = vmatprep.subr.mxu0 0.0
    %2103 = vmatpush1.msra.mxu0 0.0
    %2104 = vmatprep.subr.mxu0 0.0
    %2105 = vmatpush1.msra.mxu0 0.0
    %2106 = vmatprep.mubr.f32.mxu0 0.0
    %2107 = vmatmul.mubr.f32.gmra.mrb[0].mxu0 %v2040
    %v2108 = vpop.f32.mrb[0].mxu0
    %v2109 = vadd.f32 %v66, %v2108
    %v2110 = vpop.f32.mrb[0].mxu0
    %2111 = vmatprep.mubr.f32.mxu0 0.0
    %2112 = vmatmul.mubr.f32.gmra.mrb[0].mxu0 %v2041
    %v2113 = vpop.f32.mrb[0].mxu0
    %v2114 = vadd.f32 %v66, %v2113
    %v2115 = vpop.f32.mrb[0].mxu0
    %2116 = vdwg.mxu0
    %v2117 = vtanh.pop %v2109
    %v2118 = vtanh.pop %v2114
    %v2119 = vmul.f32 %v1769, 3.162528
    %v2120 = vmul.f32 %v1770, 3.162528
    %v2121 = vadd.f32 %v1692, %v2119
    %v2122 = vadd.f32 %v1693, %v2120
    %v2123 = vmul.f32 %v1850, -11.952862
    %v2124 = vmul.f32 %v1851, -11.952862
    %v2125 = vadd.f32 %v2121, %v2123
    %v2126 = vadd.f32 %v2122, %v2124
    %v2127 = vmul.f32 %v1935, 9.896026
    %v2128 = vmul.f32 %v1936, 9.896026
    %v2129 = vadd.f32 %v2125, %v2127
    %v2130 = vadd.f32 %v2126, %v2128
    %v2131 = vmul.f32 %v2024, 0.30934343
    %v2132 = vmul.f32 %v2025, 0.30934343
    %v2133 = vadd.f32 %v2129, %v2131
    %v2134 = vadd.f32 %v2130, %v2132
    %v2135 = vmul.f32 %v2117, -0.30392367
    %v2136 = vmul.f32 %v2118, -0.30392367
    %v2137 = vadd.f32 %v2133, %v2135
    %v2138 = vadd.f32 %v2134, %v2136
    %2139 = vmatprep.subr.mxu0 0.0
    %2140 = vmatpush1.msra.mxu0 %v45
    %2141 = vmatprep.subr.mxu0 0.0
    %2142 = vmatpush1.msra.mxu0 %v46
    %2143 = vmatprep.subr.mxu0 0.0
    %2144 = vmatpush1.msra.mxu0 %v47
    %2145 = vmatprep.subr.mxu0 0.0
    %2146 = vmatpush1.msra.mxu0 %v48
    %2147 = vmatprep.subr.mxu0 0.0
    %2148 = vmatpush1.msra.mxu0 %v49
    %2149 = vmatprep.subr.mxu0 0.0
    %2150 = vmatpush1.msra.mxu0 %v50
    %2151 = vmatprep.subr.mxu0 0.0
    %2152 = vmatpush1.msra.mxu0 %v51
    %2153 = vmatprep.subr.mxu0 0.0
    %2154 = vmatpush1.msra.mxu0 %v52
    %2155 = vmatprep.subr.mxu0 0.0
    %2156 = vmatpush1.msra.mxu0 %v53
    %2157 = vmatprep.subr.mxu0 0.0
    %2158 = vmatpush1.msra.mxu0 %v54
    %2159 = vmatprep.subr.mxu0 0.0
    %2160 = vmatpush1.msra.mxu0 %v55
    %2161 = vmatprep.subr.mxu0 0.0
    %2162 = vmatpush1.msra.mxu0 %v56
    %2163 = vmatprep.subr.mxu0 0.0
    %2164 = vmatpush1.msra.mxu0 %v57
    %2165 = vmatprep.subr.mxu0 0.0
    %2166 = vmatpush1.msra.mxu0 %v58
    %2167 = vmatprep.subr.mxu0 0.0
    %2168 = vmatpush1.msra.mxu0 %v59
    %2169 = vmatprep.subr.mxu0 0.0
    %2170 = vmatpush1.msra.mxu0 %v60
    %2171 = vmatprep.subr.mxu0 0.0
    %2172 = vmatpush1.msra.mxu0 0.0
    %2173 = vmatprep.subr.mxu0 0.0
    %2174 = vmatpush1.msra.mxu0 0.0
    %2175 = vmatprep.subr.mxu0 0.0
    %2176 = vmatpush1.msra.mxu0 0.0
    %2177 = vmatprep.subr.mxu0 0.0
    %2178 = vmatpush1.msra.mxu0 0.0
    %2179 = vmatprep.subr.mxu0 0.0
    %2180 = vmatpush1.msra.mxu0 0.0
    %2181 = vmatprep.subr.mxu0 0.0
    %2182 = vmatpush1.msra.mxu0 0.0
    %2183 = vmatprep.subr.mxu0 0.0
    %2184 = vmatpush1.msra.mxu0 0.0
    %2185 = vmatprep.subr.mxu0 0.0
    %2186 = vmatpush1.msra.mxu0 0.0
    %2187 = vmatprep.subr.mxu0 0.0
    %2188 = vmatpush1.msra.mxu0 0.0
    %2189 = vmatprep.subr.mxu0 0.0
    %2190 = vmatpush1.msra.mxu0 0.0
    %2191 = vmatprep.subr.mxu0 0.0
    %2192 = vmatpush1.msra.mxu0 0.0
    %2193 = vmatprep.subr.mxu0 0.0
    %2194 = vmatpush1.msra.mxu0 0.0
    %2195 = vmatprep.subr.mxu0 0.0
    %2196 = vmatpush1.msra.mxu0 0.0
    %2197 = vmatprep.subr.mxu0 0.0
    %2198 = vmatpush1.msra.mxu0 0.0
    %2199 = vmatprep.subr.mxu0 0.0
    %2200 = vmatpush1.msra.mxu0 0.0
    %2201 = vmatprep.subr.mxu0 0.0
    %2202 = vmatpush1.msra.mxu0 0.0
    %2203 = vmatprep.mubr.f32.mxu0 0.0
    %2204 = vmatmul.mubr.f32.gmra.mrb[0].mxu0 %v2137
    %v2205 = vpop.f32.mrb[0].mxu0
    %v2206 = vadd.f32 %v66, %v2205
    %v2207 = vpop.f32.mrb[0].mxu0
    %2208 = vmatprep.mubr.f32.mxu0 0.0
    %2209 = vmatmul.mubr.f32.gmra.mrb[0].mxu0 %v2138
    %v2210 = vpop.f32.mrb[0].mxu0
    %v2211 = vadd.f32 %v66, %v2210
    %v2212 = vpop.f32.mrb[0].mxu0
    %2213 = vdwg.mxu0
    %v2214 = vtanh.pop %v2206
    %v2215 = vtanh.pop %v2211
    %v2216 = vmul.f32 %v1769, 0.10127315
    %v2217 = vmul.f32 %v1770, 0.10127315
    %v2218 = vadd.f32 %v1692, %v2216
    %v2219 = vadd.f32 %v1693, %v2217
    %v2220 = vmul.f32 %v1935, 0.49915144
    %v2221 = vmul.f32 %v1936, 0.49915144
    %v2222 = vadd.f32 %v2218, %v2220
    %v2223 = vadd.f32 %v2219, %v2221
    %v2224 = vmul.f32 %v2024, 0.7233796
    %v2225 = vmul.f32 %v2025, 0.7233796
    %v2226 = vadd.f32 %v2222, %v2224
    %v2227 = vadd.f32 %v2223, %v2225
    %v2228 = vmul.f32 %v2117, -0.35819575
    %v2229 = vmul.f32 %v2118, -0.35819575
    %v2230 = vadd.f32 %v2226, %v2228
    %v2231 = vadd.f32 %v2227, %v2229
    %v2232 = vmul.f32 %v2214, 0.14550264
    %v2233 = vmul.f32 %v2215, 0.14550264
    %v2234 = vadd.f32 %v2230, %v2232
    %v2235 = vadd.f32 %v2231, %v2233
    %2236 = vmatprep.subr.mxu0 0.0
    %2237 = vmatpush1.msra.mxu0 %v45
    %2238 = vmatprep.subr.mxu0 0.0
    %2239 = vmatpush1.msra.mxu0 %v46
    %2240 = vmatprep.subr.mxu0 0.0
    %2241 = vmatpush1.msra.mxu0 %v47
    %2242 = vmatprep.subr.mxu0 0.0
    %2243 = vmatpush1.msra.mxu0 %v48
    %2244 = vmatprep.subr.mxu0 0.0
    %2245 = vmatpush1.msra.mxu0 %v49
    %2246 = vmatprep.subr.mxu0 0.0
    %2247 = vmatpush1.msra.mxu0 %v50
    %2248 = vmatprep.subr.mxu0 0.0
    %2249 = vmatpush1.msra.mxu0 %v51
    %2250 = vmatprep.subr.mxu0 0.0
    %2251 = vmatpush1.msra.mxu0 %v52
    %2252 = vmatprep.subr.mxu0 0.0
    %2253 = vmatpush1.msra.mxu0 %v53
    %2254 = vmatprep.subr.mxu0 0.0
    %2255 = vmatpush1.msra.mxu0 %v54
    %2256 = vmatprep.subr.mxu0 0.0
    %2257 = vmatpush1.msra.mxu0 %v55
    %2258 = vmatprep.subr.mxu0 0.0
    %2259 = vmatpush1.msra.mxu0 %v56
    %2260 = vmatprep.subr.mxu0 0.0
    %2261 = vmatpush1.msra.mxu0 %v57
    %2262 = vmatprep.subr.mxu0 0.0
    %2263 = vmatpush1.msra.mxu0 %v58
    %2264 = vmatprep.subr.mxu0 0.0
    %2265 = vmatpush1.msra.mxu0 %v59
    %2266 = vmatprep.subr.mxu0 0.0
    %2267 = vmatpush1.msra.mxu0 %v60
    %2268 = vmatprep.subr.mxu0 0.0
    %2269 = vmatpush1.msra.mxu0 0.0
    %2270 = vmatprep.subr.mxu0 0.0
    %2271 = vmatpush1.msra.mxu0 0.0
    %2272 = vmatprep.subr.mxu0 0.0
    %2273 = vmatpush1.msra.mxu0 0.0
    %2274 = vmatprep.subr.mxu0 0.0
    %2275 = vmatpush1.msra.mxu0 0.0
    %2276 = vmatprep.subr.mxu0 0.0
    %2277 = vmatpush1.msra.mxu0 0.0
    %2278 = vmatprep.subr.mxu0 0.0
    %2279 = vmatpush1.msra.mxu0 0.0
    %2280 = vmatprep.subr.mxu0 0.0
    %2281 = vmatpush1.msra.mxu0 0.0
    %2282 = vmatprep.subr.mxu0 0.0
    %2283 = vmatpush1.msra.mxu0 0.0
    %2284 = vmatprep.subr.mxu0 0.0
    %2285 = vmatpush1.msra.mxu0 0.0
    %2286 = vmatprep.subr.mxu0 0.0
    %2287 = vmatpush1.msra.mxu0 0.0
    %2288 = vmatprep.subr.mxu0 0.0
    %2289 = vmatpush1.msra.mxu0 0.0
    %2290 = vmatprep.subr.mxu0 0.0
    %2291 = vmatpush1.msra.mxu0 0.0
    %2292 = vmatprep.subr.mxu0 0.0
    %2293 = vmatpush1.msra.mxu0 0.0
    %2294 = vmatprep.subr.mxu0 0.0
    %2295 = vmatpush1.msra.mxu0 0.0
    %2296 = vmatprep.subr.mxu0 0.0
    %2297 = vmatpush1.msra.mxu0 0.0
    %2298 = vmatprep.subr.mxu0 0.0
    %2299 = vmatpush1.msra.mxu0 0.0
    %2300 = vmatprep.mubr.f32.mxu0 0.0
    %2301 = vmatmul.mubr.f32.gmra.mrb[0].mxu0 %v2234
    %v2302 = vpop.f32.mrb[0].mxu0
    %v2303 = vadd.f32 %v66, %v2302
    %v2304 = vpop.f32.mrb[0].mxu0
    %2305 = vmatprep.mubr.f32.mxu0 0.0
    %2306 = vmatmul.mubr.f32.gmra.mrb[0].mxu0 %v2235
    %v2307 = vpop.f32.mrb[0].mxu0
    %v2308 = vadd.f32 %v66, %v2307
    %v2309 = vpop.f32.mrb[0].mxu0
    %2310 = vdwg.mxu0
    %v2311 = vtanh.pop %v2303
    %v2312 = vtanh.pop %v2308
    %v2313 = vmul.f32 %v2311, 0.22222222
    %v2314 = vmul.f32 %v2312, 0.22222222
    %v2315 = vadd.f32 %v2234, %v2313
    %v2316 = vadd.f32 %v2235, %v2314
    %2317 = vmatprep.subr.mxu0 0.0
    %2318 = vmatpush1.msra.mxu0 %v45
    %2319 = vmatprep.subr.mxu0 0.0
    %2320 = vmatpush1.msra.mxu0 %v46
    %2321 = vmatprep.subr.mxu0 0.0
    %2322 = vmatpush1.msra.mxu0 %v47
    %2323 = vmatprep.subr.mxu0 0.0
    %2324 = vmatpush1.msra.mxu0 %v48
    %2325 = vmatprep.subr.mxu0 0.0
    %2326 = vmatpush1.msra.mxu0 %v49
    %2327 = vmatprep.subr.mxu0 0.0
    %2328 = vmatpush1.msra.mxu0 %v50
    %2329 = vmatprep.subr.mxu0 0.0
    %2330 = vmatpush1.msra.mxu0 %v51
    %2331 = vmatprep.subr.mxu0 0.0
    %2332 = vmatpush1.msra.mxu0 %v52
    %2333 = vmatprep.subr.mxu0 0.0
    %2334 = vmatpush1.msra.mxu0 %v53
    %2335 = vmatprep.subr.mxu0 0.0
    %2336 = vmatpush1.msra.mxu0 %v54
    %2337 = vmatprep.subr.mxu0 0.0
    %2338 = vmatpush1.msra.mxu0 %v55
    %2339 = vmatprep.subr.mxu0 0.0
    %2340 = vmatpush1.msra.mxu0 %v56
    %2341 = vmatprep.subr.mxu0 0.0
    %2342 = vmatpush1.msra.mxu0 %v57
    %2343 = vmatprep.subr.mxu0 0.0
    %2344 = vmatpush1.msra.mxu0 %v58
    %2345 = vmatprep.subr.mxu0 0.0
    %2346 = vmatpush1.msra.mxu0 %v59
    %2347 = vmatprep.subr.mxu0 0.0
    %2348 = vmatpush1.msra.mxu0 %v60
    %2349 = vmatprep.subr.mxu0 0.0
    %2350 = vmatpush1.msra.mxu0 0.0
    %2351 = vmatprep.subr.mxu0 0.0
    %2352 = vmatpush1.msra.mxu0 0.0
    %2353 = vmatprep.subr.mxu0 0.0
    %2354 = vmatpush1.msra.mxu0 0.0
    %2355 = vmatprep.subr.mxu0 0.0
    %2356 = vmatpush1.msra.mxu0 0.0
    %2357 = vmatprep.subr.mxu0 0.0
    %2358 = vmatpush1.msra.mxu0 0.0
    %2359 = vmatprep.subr.mxu0 0.0
    %2360 = vmatpush1.msra.mxu0 0.0
    %2361 = vmatprep.subr.mxu0 0.0
    %2362 = vmatpush1.msra.mxu0 0.0
    %2363 = vmatprep.subr.mxu0 0.0
    %2364 = vmatpush1.msra.mxu0 0.0
    %2365 = vmatprep.subr.mxu0 0.0
    %2366 = vmatpush1.msra.mxu0 0.0
    %2367 = vmatprep.subr.mxu0 0.0
    %2368 = vmatpush1.msra.mxu0 0.0
    %2369 = vmatprep.subr.mxu0 0.0
    %2370 = vmatpush1.msra.mxu0 0.0
    %2371 = vmatprep.subr.mxu0 0.0
    %2372 = vmatpush1.msra.mxu0 0.0
    %2373 = vmatprep.subr.mxu0 0.0
    %2374 = vmatpush1.msra.mxu0 0.0
    %2375 = vmatprep.subr.mxu0 0.0
    %2376 = vmatpush1.msra.mxu0 0.0
    %2377 = vmatprep.subr.mxu0 0.0
    %2378 = vmatpush1.msra.mxu0 0.0
    %2379 = vmatprep.subr.mxu0 0.0
    %2380 = vmatpush1.msra.mxu0 0.0
    %2381 = vmatprep.mubr.f32.mxu0 0.0
    %2382 = vmatmul.mubr.f32.gmra.mrb[0].mxu0 %v2315
    %v2383 = vpop.f32.mrb[0].mxu0
    %v2384 = vadd.f32 %v66, %v2383
    %v2385 = vpop.f32.mrb[0].mxu0
    %2386 = vmatprep.mubr.f32.mxu0 0.0
    %2387 = vmatmul.mubr.f32.gmra.mrb[0].mxu0 %v2316
    %v2388 = vpop.f32.mrb[0].mxu0
    %v2389 = vadd.f32 %v66, %v2388
    %v2390 = vpop.f32.mrb[0].mxu0
    %2391 = vdwg.mxu0
    %v2392 = vtanh.pop %v2384
    %v2393 = vtanh.pop %v2389
    %v2394 = vmul.f32 %v2311, 0.083333336
    %v2395 = vmul.f32 %v2312, 0.083333336
    %v2396 = vadd.f32 %v2234, %v2394
    %v2397 = vadd.f32 %v2235, %v2395
    %v2398 = vmul.f32 %v2392, 0.25
    %v2399 = vmul.f32 %v2393, 0.25
    %v2400 = vadd.f32 %v2396, %v2398
    %v2401 = vadd.f32 %v2397, %v2399
    %2402 = vmatprep.subr.mxu0 0.0
    %2403 = vmatpush1.msra.mxu0 %v45
    %2404 = vmatprep.subr.mxu0 0.0
    %2405 = vmatpush1.msra.mxu0 %v46
    %2406 = vmatprep.subr.mxu0 0.0
    %2407 = vmatpush1.msra.mxu0 %v47
    %2408 = vmatprep.subr.mxu0 0.0
    %2409 = vmatpush1.msra.mxu0 %v48
    %2410 = vmatprep.subr.mxu0 0.0
    %2411 = vmatpush1.msra.mxu0 %v49
    %2412 = vmatprep.subr.mxu0 0.0
    %2413 = vmatpush1.msra.mxu0 %v50
    %2414 = vmatprep.subr.mxu0 0.0
    %2415 = vmatpush1.msra.mxu0 %v51
    %2416 = vmatprep.subr.mxu0 0.0
    %2417 = vmatpush1.msra.mxu0 %v52
    %2418 = vmatprep.subr.mxu0 0.0
    %2419 = vmatpush1.msra.mxu0 %v53
    %2420 = vmatprep.subr.mxu0 0.0
    %2421 = vmatpush1.msra.mxu0 %v54
    %2422 = vmatprep.subr.mxu0 0.0
    %2423 = vmatpush1.msra.mxu0 %v55
    %2424 = vmatprep.subr.mxu0 0.0
    %2425 = vmatpush1.msra.mxu0 %v56
    %2426 = vmatprep.subr.mxu0 0.0
    %2427 = vmatpush1.msra.mxu0 %v57
    %2428 = vmatprep.subr.mxu0 0.0
    %2429 = vmatpush1.msra.mxu0 %v58
    %2430 = vmatprep.subr.mxu0 0.0
    %2431 = vmatpush1.msra.mxu0 %v59
    %2432 = vmatprep.subr.mxu0 0.0
    %2433 = vmatpush1.msra.mxu0 %v60
    %2434 = vmatprep.subr.mxu0 0.0
    %2435 = vmatpush1.msra.mxu0 0.0
    %2436 = vmatprep.subr.mxu0 0.0
    %2437 = vmatpush1.msra.mxu0 0.0
    %2438 = vmatprep.subr.mxu0 0.0
    %2439 = vmatpush1.msra.mxu0 0.0
    %2440 = vmatprep.subr.mxu0 0.0
    %2441 = vmatpush1.msra.mxu0 0.0
    %2442 = vmatprep.subr.mxu0 0.0
    %2443 = vmatpush1.msra.mxu0 0.0
    %2444 = vmatprep.subr.mxu0 0.0
    %2445 = vmatpush1.msra.mxu0 0.0
    %2446 = vmatprep.subr.mxu0 0.0
    %2447 = vmatpush1.msra.mxu0 0.0
    %2448 = vmatprep.subr.mxu0 0.0
    %2449 = vmatpush1.msra.mxu0 0.0
    %2450 = vmatprep.subr.mxu0 0.0
    %2451 = vmatpush1.msra.mxu0 0.0
    %2452 = vmatprep.subr.mxu0 0.0
    %2453 = vmatpush1.msra.mxu0 0.0
    %2454 = vmatprep.subr.mxu0 0.0
    %2455 = vmatpush1.msra.mxu0 0.0
    %2456 = vmatprep.subr.mxu0 0.0
    %2457 = vmatpush1.msra.mxu0 0.0
    %2458 = vmatprep.subr.mxu0 0.0
    %2459 = vmatpush1.msra.mxu0 0.0
    %2460 = vmatprep.subr.mxu0 0.0
    %2461 = vmatpush1.msra.mxu0 0.0
    %2462 = vmatprep.subr.mxu0 0.0
    %2463 = vmatpush1.msra.mxu0 0.0
    %2464 = vmatprep.subr.mxu0 0.0
    %2465 = vmatpush1.msra.mxu0 0.0
    %2466 = vmatprep.mubr.f32.mxu0 0.0
    %2467 = vmatmul.mubr.f32.gmra.mrb[0].mxu0 %v2400
    %v2468 = vpop.f32.mrb[0].mxu0
    %v2469 = vadd.f32 %v66, %v2468
    %v2470 = vpop.f32.mrb[0].mxu0
    %2471 = vmatprep.mubr.f32.mxu0 0.0
    %2472 = vmatmul.mubr.f32.gmra.mrb[0].mxu0 %v2401
    %v2473 = vpop.f32.mrb[0].mxu0
    %v2474 = vadd.f32 %v66, %v2473
    %v2475 = vpop.f32.mrb[0].mxu0
    %2476 = vdwg.mxu0
    %v2477 = vtanh.pop %v2469
    %v2478 = vtanh.pop %v2474
    %v2479 = vmul.f32 %v2311, 1.0864197
    %v2480 = vmul.f32 %v2312, 1.0864197
    %v2481 = vadd.f32 %v2234, %v2479
    %v2482 = vadd.f32 %v2235, %v2480
    %v2483 = vmul.f32 %v2392, -4.148148
    %v2484 = vmul.f32 %v2393, -4.148148
    %v2485 = vadd.f32 %v2481, %v2483
    %v2486 = vadd.f32 %v2482, %v2484
    %v2487 = vmul.f32 %v2477, 3.9506173
    %v2488 = vmul.f32 %v2478, 3.9506173
    %v2489 = vadd.f32 %v2485, %v2487
    %v2490 = vadd.f32 %v2486, %v2488
    %2491 = vmatprep.subr.mxu0 0.0
    %2492 = vmatpush1.msra.mxu0 %v45
    %2493 = vmatprep.subr.mxu0 0.0
    %2494 = vmatpush1.msra.mxu0 %v46
    %2495 = vmatprep.subr.mxu0 0.0
    %2496 = vmatpush1.msra.mxu0 %v47
    %2497 = vmatprep.subr.mxu0 0.0
    %2498 = vmatpush1.msra.mxu0 %v48
    %2499 = vmatprep.subr.mxu0 0.0
    %2500 = vmatpush1.msra.mxu0 %v49
    %2501 = vmatprep.subr.mxu0 0.0
    %2502 = vmatpush1.msra.mxu0 %v50
    %2503 = vmatprep.subr.mxu0 0.0
    %2504 = vmatpush1.msra.mxu0 %v51
    %2505 = vmatprep.subr.mxu0 0.0
    %2506 = vmatpush1.msra.mxu0 %v52
    %2507 = vmatprep.subr.mxu0 0.0
    %2508 = vmatpush1.msra.mxu0 %v53
    %2509 = vmatprep.subr.mxu0 0.0
    %2510 = vmatpush1.msra.mxu0 %v54
    %2511 = vmatprep.subr.mxu0 0.0
    %2512 = vmatpush1.msra.mxu0 %v55
    %2513 = vmatprep.subr.mxu0 0.0
    %2514 = vmatpush1.msra.mxu0 %v56
    %2515 = vmatprep.subr.mxu0 0.0
    %2516 = vmatpush1.msra.mxu0 %v57
    %2517 = vmatprep.subr.mxu0 0.0
    %2518 = vmatpush1.msra.mxu0 %v58
    %2519 = vmatprep.subr.mxu0 0.0
    %2520 = vmatpush1.msra.mxu0 %v59
    %2521 = vmatprep.subr.mxu0 0.0
    %2522 = vmatpush1.msra.mxu0 %v60
    %2523 = vmatprep.subr.mxu0 0.0
    %2524 = vmatpush1.msra.mxu0 0.0
    %2525 = vmatprep.subr.mxu0 0.0
    %2526 = vmatpush1.msra.mxu0 0.0
    %2527 = vmatprep.subr.mxu0 0.0
    %2528 = vmatpush1.msra.mxu0 0.0
    %2529 = vmatprep.subr.mxu0 0.0
    %2530 = vmatpush1.msra.mxu0 0.0
    %2531 = vmatprep.subr.mxu0 0.0
    %2532 = vmatpush1.msra.mxu0 0.0
    %2533 = vmatprep.subr.mxu0 0.0
    %2534 = vmatpush1.msra.mxu0 0.0
    %2535 = vmatprep.subr.mxu0 0.0
    %2536 = vmatpush1.msra.mxu0 0.0
    %2537 = vmatprep.subr.mxu0 0.0
    %2538 = vmatpush1.msra.mxu0 0.0
    %2539 = vmatprep.subr.mxu0 0.0
    %2540 = vmatpush1.msra.mxu0 0.0
    %2541 = vmatprep.subr.mxu0 0.0
    %2542 = vmatpush1.msra.mxu0 0.0
    %2543 = vmatprep.subr.mxu0 0.0
    %2544 = vmatpush1.msra.mxu0 0.0
    %2545 = vmatprep.subr.mxu0 0.0
    %2546 = vmatpush1.msra.mxu0 0.0
    %2547 = vmatprep.subr.mxu0 0.0
    %2548 = vmatpush1.msra.mxu0 0.0
    %2549 = vmatprep.subr.mxu0 0.0
    %2550 = vmatpush1.msra.mxu0 0.0
    %2551 = vmatprep.subr.mxu0 0.0
    %2552 = vmatpush1.msra.mxu0 0.0
    %2553 = vmatprep.subr.mxu0 0.0
    %2554 = vmatpush1.msra.mxu0 0.0
    %2555 = vmatprep.mubr.f32.mxu0 0.0
    %2556 = vmatmul.mubr.f32.gmra.mrb[0].mxu0 %v2489
    %v2557 = vpop.f32.mrb[0].mxu0
    %v2558 = vadd.f32 %v66, %v2557
    %v2559 = vpop.f32.mrb[0].mxu0
    %2560 = vmatprep.mubr.f32.mxu0 0.0
    %2561 = vmatmul.mubr.f32.gmra.mrb[0].mxu0 %v2490
    %v2562 = vpop.f32.mrb[0].mxu0
    %v2563 = vadd.f32 %v66, %v2562
    %v2564 = vpop.f32.mrb[0].mxu0
    %2565 = vdwg.mxu0
    %v2566 = vtanh.pop %v2558
    %v2567 = vtanh.pop %v2563
    %v2568 = vmul.f32 %v2311, 3.2806652
    %v2569 = vmul.f32 %v2312, 3.2806652
    %v2570 = vadd.f32 %v2234, %v2568
    %v2571 = vadd.f32 %v2235, %v2569
    %v2572 = vmul.f32 %v2392, -12.884214
    %v2573 = vmul.f32 %v2393, -12.884214
    %v2574 = vadd.f32 %v2570, %v2572
    %v2575 = vadd.f32 %v2571, %v2573
    %v2576 = vmul.f32 %v2477, 10.914326
    %v2577 = vmul.f32 %v2478, 10.914326
    %v2578 = vadd.f32 %v2574, %v2576
    %v2579 = vadd.f32 %v2575, %v2577
    %v2580 = vmul.f32 %v2566, -0.3231215
    %v2581 = vmul.f32 %v2567, -0.3231215
    %v2582 = vadd.f32 %v2578, %v2580
    %v2583 = vadd.f32 %v2579, %v2581
    %2584 = vmatprep.subr.mxu0 0.0
    %2585 = vmatpush1.msra.mxu0 %v45
    %2586 = vmatprep.subr.mxu0 0.0
    %2587 = vmatpush1.msra.mxu0 %v46
    %2588 = vmatprep.subr.mxu0 0.0
    %2589 = vmatpush1.msra.mxu0 %v47
    %2590 = vmatprep.subr.mxu0 0.0
    %2591 = vmatpush1.msra.mxu0 %v48
    %2592 = vmatprep.subr.mxu0 0.0
    %2593 = vmatpush1.msra.mxu0 %v49
    %2594 = vmatprep.subr.mxu0 0.0
    %2595 = vmatpush1.msra.mxu0 %v50
    %2596 = vmatprep.subr.mxu0 0.0
    %2597 = vmatpush1.msra.mxu0 %v51
    %2598 = vmatprep.subr.mxu0 0.0
    %2599 = vmatpush1.msra.mxu0 %v52
    %2600 = vmatprep.subr.mxu0 0.0
    %2601 = vmatpush1.msra.mxu0 %v53
    %2602 = vmatprep.subr.mxu0 0.0
    %2603 = vmatpush1.msra.mxu0 %v54
    %2604 = vmatprep.subr.mxu0 0.0
    %2605 = vmatpush1.msra.mxu0 %v55
    %2606 = vmatprep.subr.mxu0 0.0
    %2607 = vmatpush1.msra.mxu0 %v56
    %2608 = vmatprep.subr.mxu0 0.0
    %2609 = vmatpush1.msra.mxu0 %v57
    %2610 = vmatprep.subr.mxu0 0.0
    %2611 = vmatpush1.msra.mxu0 %v58
    %2612 = vmatprep.subr.mxu0 0.0
    %2613 = vmatpush1.msra.mxu0 %v59
    %2614 = vmatprep.subr.mxu0 0.0
    %2615 = vmatpush1.msra.mxu0 %v60
    %2616 = vmatprep.subr.mxu0 0.0
    %2617 = vmatpush1.msra.mxu0 0.0
    %2618 = vmatprep.subr.mxu0 0.0
    %2619 = vmatpush1.msra.mxu0 0.0
    %2620 = vmatprep.subr.mxu0 0.0
    %2621 = vmatpush1.msra.mxu0 0.0
    %2622 = vmatprep.subr.mxu0 0.0
    %2623 = vmatpush1.msra.mxu0 0.0
    %2624 = vmatprep.subr.mxu0 0.0
    %2625 = vmatpush1.msra.mxu0 0.0
    %2626 = vmatprep.subr.mxu0 0.0
    %2627 = vmatpush1.msra.mxu0 0.0
    %2628 = vmatprep.subr.mxu0 0.0
    %2629 = vmatpush1.msra.mxu0 0.0
    %2630 = vmatprep.subr.mxu0 0.0
    %2631 = vmatpush1.msra.mxu0 0.0
    %2632 = vmatprep.subr.mxu0 0.0
    %2633 = vmatpush1.msra.mxu0 0.0
    %2634 = vmatprep.subr.mxu0 0.0
    %2635 = vmatpush1.msra.mxu0 0.0
    %2636 = vmatprep.subr.mxu0 0.0
    %2637 = vmatpush1.msra.mxu0 0.0
    %2638 = vmatprep.subr.mxu0 0.0
    %2639 = vmatpush1.msra.mxu0 0.0
    %2640 = vmatprep.subr.mxu0 0.0
    %2641 = vmatpush1.msra.mxu0 0.0
    %2642 = vmatprep.subr.mxu0 0.0
    %2643 = vmatpush1.msra.mxu0 0.0
    %2644 = vmatprep.subr.mxu0 0.0
    %2645 = vmatpush1.msra.mxu0 0.0
    %2646 = vmatprep.subr.mxu0 0.0
    %2647 = vmatpush1.msra.mxu0 0.0
    %2648 = vmatprep.mubr.f32.mxu0 0.0
    %2649 = vmatmul.mubr.f32.gmra.mrb[0].mxu0 %v2582
    %v2650 = vpop.f32.mrb[0].mxu0
    %v2651 = vadd.f32 %v66, %v2650
    %v2652 = vpop.f32.mrb[0].mxu0
    %2653 = vmatprep.mubr.f32.mxu0 0.0
    %2654 = vmatmul.mubr.f32.gmra.mrb[0].mxu0 %v2583
    %v2655 = vpop.f32.mrb[0].mxu0
    %v2656 = vadd.f32 %v66, %v2655
    %v2657 = vpop.f32.mrb[0].mxu0
    %2658 = vdwg.mxu0
    %v2659 = vtanh.pop %v2651
    %v2660 = vtanh.pop %v2656
    %v2661 = vmul.f32 %v2311, 3.162528
    %v2662 = vmul.f32 %v2312, 3.162528
    %v2663 = vadd.f32 %v2234, %v2661
    %v2664 = vadd.f32 %v2235, %v2662
    %v2665 = vmul.f32 %v2392, -11.952862
    %v2666 = vmul.f32 %v2393, -11.952862
    %v2667 = vadd.f32 %v2663, %v2665
    %v2668 = vadd.f32 %v2664, %v2666
    %v2669 = vmul.f32 %v2477, 9.896026
    %v2670 = vmul.f32 %v2478, 9.896026
    %v2671 = vadd.f32 %v2667, %v2669
    %v2672 = vadd.f32 %v2668, %v2670
    %v2673 = vmul.f32 %v2566, 0.30934343
    %v2674 = vmul.f32 %v2567, 0.30934343
    %v2675 = vadd.f32 %v2671, %v2673
    %v2676 = vadd.f32 %v2672, %v2674
    %v2677 = vmul.f32 %v2659, -0.30392367
    %v2678 = vmul.f32 %v2660, -0.30392367
    %v2679 = vadd.f32 %v2675, %v2677
    %v2680 = vadd.f32 %v2676, %v2678
    %2681 = vmatprep.subr.mxu0 0.0
    %2682 = vmatpush1.msra.mxu0 %v45
    %2683 = vmatprep.subr.mxu0 0.0
    %2684 = vmatpush1.msra.mxu0 %v46
    %2685 = vmatprep.subr.mxu0 0.0
    %2686 = vmatpush1.msra.mxu0 %v47
    %2687 = vmatprep.subr.mxu0 0.0
    %2688 = vmatpush1.msra.mxu0 %v48
    %2689 = vmatprep.subr.mxu0 0.0
    %2690 = vmatpush1.msra.mxu0 %v49
    %2691 = vmatprep.subr.mxu0 0.0
    %2692 = vmatpush1.msra.mxu0 %v50
    %2693 = vmatprep.subr.mxu0 0.0
    %2694 = vmatpush1.msra.mxu0 %v51
    %2695 = vmatprep.subr.mxu0 0.0
    %2696 = vmatpush1.msra.mxu0 %v52
    %2697 = vmatprep.subr.mxu0 0.0
    %2698 = vmatpush1.msra.mxu0 %v53
    %2699 = vmatprep.subr.mxu0 0.0
    %2700 = vmatpush1.msra.mxu0 %v54
    %2701 = vmatprep.subr.mxu0 0.0
    %2702 = vmatpush1.msra.mxu0 %v55
    %2703 = vmatprep.subr.mxu0 0.0
    %2704 = vmatpush1.msra.mxu0 %v56
    %2705 = vmatprep.subr.mxu0 0.0
    %2706 = vmatpush1.msra.mxu0 %v57
    %2707 = vmatprep.subr.mxu0 0.0
    %2708 = vmatpush1.msra.mxu0 %v58
    %2709 = vmatprep.subr.mxu0 0.0
    %2710 = vmatpush1.msra.mxu0 %v59
    %2711 = vmatprep.subr.mxu0 0.0
    %2712 = vmatpush1.msra.mxu0 %v60
    %2713 = vmatprep.subr.mxu0 0.0
    %2714 = vmatpush1.msra.mxu0 0.0
    %2715 = vmatprep.subr.mxu0 0.0
    %2716 = vmatpush1.msra.mxu0 0.0
    %2717 = vmatprep.subr.mxu0 0.0
    %2718 = vmatpush1.msra.mxu0 0.0
    %2719 = vmatprep.subr.mxu0 0.0
    %2720 = vmatpush1.msra.mxu0 0.0
    %2721 = vmatprep.subr.mxu0 0.0
    %2722 = vmatpush1.msra.mxu0 0.0
    %2723 = vmatprep.subr.mxu0 0.0
    %2724 = vmatpush1.msra.mxu0 0.0
    %2725 = vmatprep.subr.mxu0 0.0
    %2726 = vmatpush1.msra.mxu0 0.0
    %2727 = vmatprep.subr.mxu0 0.0
    %2728 = vmatpush1.msra.mxu0 0.0
    %2729 = vmatprep.subr.mxu0 0.0
    %2730 = vmatpush1.msra.mxu0 0.0
    %2731 = vmatprep.subr.mxu0 0.0
    %2732 = vmatpush1.msra.mxu0 0.0
    %2733 = vmatprep.subr.mxu0 0.0
    %2734 = vmatpush1.msra.mxu0 0.0
    %2735 = vmatprep.subr.mxu0 0.0
    %2736 = vmatpush1.msra.mxu0 0.0
    %2737 = vmatprep.subr.mxu0 0.0
    %2738 = vmatpush1.msra.mxu0 0.0
    %2739 = vmatprep.subr.mxu0 0.0
    %2740 = vmatpush1.msra.mxu0 0.0
    %2741 = vmatprep.subr.mxu0 0.0
    %2742 = vmatpush1.msra.mxu0 0.0
    %2743 = vmatprep.subr.mxu0 0.0
    %2744 = vmatpush1.msra.mxu0 0.0
    %2745 = vmatprep.mubr.f32.mxu0 0.0
    %2746 = vmatmul.mubr.f32.gmra.mrb[0].mxu0 %v2679
    %v2747 = vpop.f32.mrb[0].mxu0
    %v2748 = vadd.f32 %v66, %v2747
    %v2749 = vpop.f32.mrb[0].mxu0
    %2750 = vmatprep.mubr.f32.mxu0 0.0
    %2751 = vmatmul.mubr.f32.gmra.mrb[0].mxu0 %v2680
    %v2752 = vpop.f32.mrb[0].mxu0
    %v2753 = vadd.f32 %v66, %v2752
    %v2754 = vpop.f32.mrb[0].mxu0
    %2755 = vdwg.mxu0
    %v2756 = vtanh.pop %v2748
    %v2757 = vtanh.pop %v2753
    %v2758 = vmul.f32 %v2311, 0.10127315
    %v2759 = vmul.f32 %v2312, 0.10127315
    %v2760 = vadd.f32 %v2234, %v2758
    %v2761 = vadd.f32 %v2235, %v2759
    %v2762 = vmul.f32 %v2477, 0.49915144
    %v2763 = vmul.f32 %v2478, 0.49915144
    %v2764 = vadd.f32 %v2760, %v2762
    %v2765 = vadd.f32 %v2761, %v2763
    %v2766 = vmul.f32 %v2566, 0.7233796
    %v2767 = vmul.f32 %v2567, 0.7233796
    %v2768 = vadd.f32 %v2764, %v2766
    %v2769 = vadd.f32 %v2765, %v2767
    %v2770 = vmul.f32 %v2659, -0.35819575
    %v2771 = vmul.f32 %v2660, -0.35819575
    %v2772 = vadd.f32 %v2768, %v2770
    %v2773 = vadd.f32 %v2769, %v2771
    %v2774 = vmul.f32 %v2756, 0.14550264
    %v2775 = vmul.f32 %v2757, 0.14550264
    %v2776 = vadd.f32 %v2772, %v2774
    %v2777 = vadd.f32 %v2773, %v2775
    %2778 = vmatprep.subr.mxu0 0.0
    %2779 = vmatpush1.msra.mxu0 %v45
    %2780 = vmatprep.subr.mxu0 0.0
    %2781 = vmatpush1.msra.mxu0 %v46
    %2782 = vmatprep.subr.mxu0 0.0
    %2783 = vmatpush1.msra.mxu0 %v47
    %2784 = vmatprep.subr.mxu0 0.0
    %2785 = vmatpush1.msra.mxu0 %v48
    %2786 = vmatprep.subr.mxu0 0.0
    %2787 = vmatpush1.msra.mxu0 %v49
    %2788 = vmatprep.subr.mxu0 0.0
    %2789 = vmatpush1.msra.mxu0 %v50
    %2790 = vmatprep.subr.mxu0 0.0
    %2791 = vmatpush1.msra.mxu0 %v51
    %2792 = vmatprep.subr.mxu0 0.0
    %2793 = vmatpush1.msra.mxu0 %v52
    %2794 = vmatprep.subr.mxu0 0.0
    %2795 = vmatpush1.msra.mxu0 %v53
    %2796 = vmatprep.subr.mxu0 0.0
    %2797 = vmatpush1.msra.mxu0 %v54
    %2798 = vmatprep.subr.mxu0 0.0
    %2799 = vmatpush1.msra.mxu0 %v55
    %2800 = vmatprep.subr.mxu0 0.0
    %2801 = vmatpush1.msra.mxu0 %v56
    %2802 = vmatprep.subr.mxu0 0.0
    %2803 = vmatpush1.msra.mxu0 %v57
    %2804 = vmatprep.subr.mxu0 0.0
    %2805 = vmatpush1.msra.mxu0 %v58
    %2806 = vmatprep.subr.mxu0 0.0
    %2807 = vmatpush1.msra.mxu0 %v59
    %2808 = vmatprep.subr.mxu0 0.0
    %2809 = vmatpush1.msra.mxu0 %v60
    %2810 = vmatprep.subr.mxu0 0.0
    %2811 = vmatpush1.msra.mxu0 0.0
    %2812 = vmatprep.subr.mxu0 0.0
    %2813 = vmatpush1.msra.mxu0 0.0
    %2814 = vmatprep.subr.mxu0 0.0
    %2815 = vmatpush1.msra.mxu0 0.0
    %2816 = vmatprep.subr.mxu0 0.0
    %2817 = vmatpush1.msra.mxu0 0.0
    %2818 = vmatprep.subr.mxu0 0.0
    %2819 = vmatpush1.msra.mxu0 0.0
    %2820 = vmatprep.subr.mxu0 0.0
    %2821 = vmatpush1.msra.mxu0 0.0
    %2822 = vmatprep.subr.mxu0 0.0
    %2823 = vmatpush1.msra.mxu0 0.0
    %2824 = vmatprep.subr.mxu0 0.0
    %2825 = vmatpush1.msra.mxu0 0.0
    %2826 = vmatprep.subr.mxu0 0.0
    %2827 = vmatpush1.msra.mxu0 0.0
    %2828 = vmatprep.subr.mxu0 0.0
    %2829 = vmatpush1.msra.mxu0 0.0
    %2830 = vmatprep.subr.mxu0 0.0
    %2831 = vmatpush1.msra.mxu0 0.0
    %2832 = vmatprep.subr.mxu0 0.0
    %2833 = vmatpush1.msra.mxu0 0.0
    %2834 = vmatprep.subr.mxu0 0.0
    %2835 = vmatpush1.msra.mxu0 0.0
    %2836 = vmatprep.subr.mxu0 0.0
    %2837 = vmatpush1.msra.mxu0 0.0
    %2838 = vmatprep.subr.mxu0 0.0
    %2839 = vmatpush1.msra.mxu0 0.0
    %2840 = vmatprep.subr.mxu0 0.0
    %2841 = vmatpush1.msra.mxu0 0.0
    %2842 = vmatprep.mubr.f32.mxu0 0.0
    %2843 = vmatmul.mubr.f32.gmra.mrb[0].mxu0 %v2776
    %v2844 = vpop.f32.mrb[0].mxu0
    %v2845 = vadd.f32 %v66, %v2844
    %v2846 = vpop.f32.mrb[0].mxu0
    %2847 = vmatprep.mubr.f32.mxu0 0.0
    %2848 = vmatmul.mubr.f32.gmra.mrb[0].mxu0 %v2777
    %v2849 = vpop.f32.mrb[0].mxu0
    %v2850 = vadd.f32 %v66, %v2849
    %v2851 = vpop.f32.mrb[0].mxu0
    %2852 = vdwg.mxu0
    %v2853 = vtanh.pop %v2845
    %v2854 = vtanh.pop %v2850
    %v2855 = vmul.f32 %v2853, 0.22222222
    %v2856 = vmul.f32 %v2854, 0.22222222
    %v2857 = vadd.f32 %v2776, %v2855
    %v2858 = vadd.f32 %v2777, %v2856
    %2859 = vmatprep.subr.mxu0 0.0
    %2860 = vmatpush1.msra.mxu0 %v45
    %2861 = vmatprep.subr.mxu0 0.0
    %2862 = vmatpush1.msra.mxu0 %v46
    %2863 = vmatprep.subr.mxu0 0.0
    %2864 = vmatpush1.msra.mxu0 %v47
    %2865 = vmatprep.subr.mxu0 0.0
    %2866 = vmatpush1.msra.mxu0 %v48
    %2867 = vmatprep.subr.mxu0 0.0
    %2868 = vmatpush1.msra.mxu0 %v49
    %2869 = vmatprep.subr.mxu0 0.0
    %2870 = vmatpush1.msra.mxu0 %v50
    %2871 = vmatprep.subr.mxu0 0.0
    %2872 = vmatpush1.msra.mxu0 %v51
    %2873 = vmatprep.subr.mxu0 0.0
    %2874 = vmatpush1.msra.mxu0 %v52
    %2875 = vmatprep.subr.mxu0 0.0
    %2876 = vmatpush1.msra.mxu0 %v53
    %2877 = vmatprep.subr.mxu0 0.0
    %2878 = vmatpush1.msra.mxu0 %v54
    %2879 = vmatprep.subr.mxu0 0.0
    %2880 = vmatpush1.msra.mxu0 %v55
    %2881 = vmatprep.subr.mxu0 0.0
    %2882 = vmatpush1.msra.mxu0 %v56
    %2883 = vmatprep.subr.mxu0 0.0
    %2884 = vmatpush1.msra.mxu0 %v57
    %2885 = vmatprep.subr.mxu0 0.0
    %2886 = vmatpush1.msra.mxu0 %v58
    %2887 = vmatprep.subr.mxu0 0.0
    %2888 = vmatpush1.msra.mxu0 %v59
    %2889 = vmatprep.subr.mxu0 0.0
    %2890 = vmatpush1.msra.mxu0 %v60
    %2891 = vmatprep.subr.mxu0 0.0
    %2892 = vmatpush1.msra.mxu0 0.0
    %2893 = vmatprep.subr.mxu0 0.0
    %2894 = vmatpush1.msra.mxu0 0.0
    %2895 = vmatprep.subr.mxu0 0.0
    %2896 = vmatpush1.msra.mxu0 0.0
    %2897 = vmatprep.subr.mxu0 0.0
    %2898 = vmatpush1.msra.mxu0 0.0
    %2899 = vmatprep.subr.mxu0 0.0
    %2900 = vmatpush1.msra.mxu0 0.0
    %2901 = vmatprep.subr.mxu0 0.0
    %2902 = vmatpush1.msra.mxu0 0.0
    %2903 = vmatprep.subr.mxu0 0.0
    %2904 = vmatpush1.msra.mxu0 0.0
    %2905 = vmatprep.subr.mxu0 0.0
    %2906 = vmatpush1.msra.mxu0 0.0
    %2907 = vmatprep.subr.mxu0 0.0
    %2908 = vmatpush1.msra.mxu0 0.0
    %2909 = vmatprep.subr.mxu0 0.0
    %2910 = vmatpush1.msra.mxu0 0.0
    %2911 = vmatprep.subr.mxu0 0.0
    %2912 = vmatpush1.msra.mxu0 0.0
    %2913 = vmatprep.subr.mxu0 0.0
    %2914 = vmatpush1.msra.mxu0 0.0
    %2915 = vmatprep.subr.mxu0 0.0
    %2916 = vmatpush1.msra.mxu0 0.0
    %2917 = vmatprep.subr.mxu0 0.0
    %2918 = vmatpush1.msra.mxu0 0.0
    %2919 = vmatprep.subr.mxu0 0.0
    %2920 = vmatpush1.msra.mxu0 0.0
    %2921 = vmatprep.subr.mxu0 0.0
    %2922 = vmatpush1.msra.mxu0 0.0
    %2923 = vmatprep.mubr.f32.mxu0 0.0
    %2924 = vmatmul.mubr.f32.gmra.mrb[0].mxu0 %v2857
    %v2925 = vpop.f32.mrb[0].mxu0
    %v2926 = vadd.f32 %v66, %v2925
    %v2927 = vpop.f32.mrb[0].mxu0
    %2928 = vmatprep.mubr.f32.mxu0 0.0
    %2929 = vmatmul.mubr.f32.gmra.mrb[0].mxu0 %v2858
    %v2930 = vpop.f32.mrb[0].mxu0
    %v2931 = vadd.f32 %v66, %v2930
    %v2932 = vpop.f32.mrb[0].mxu0
    %2933 = vdwg.mxu0
    %v2934 = vtanh.pop %v2926
    %v2935 = vtanh.pop %v2931
    %v2936 = vmul.f32 %v2853, 0.083333336
    %v2937 = vmul.f32 %v2854, 0.083333336
    %v2938 = vadd.f32 %v2776, %v2936
    %v2939 = vadd.f32 %v2777, %v2937
    %v2940 = vmul.f32 %v2934, 0.25
    %v2941 = vmul.f32 %v2935, 0.25
    %v2942 = vadd.f32 %v2938, %v2940
    %v2943 = vadd.f32 %v2939, %v2941
    %2944 = vmatprep.subr.mxu0 0.0
    %2945 = vmatpush1.msra.mxu0 %v45
    %2946 = vmatprep.subr.mxu0 0.0
    %2947 = vmatpush1.msra.mxu0 %v46
    %2948 = vmatprep.subr.mxu0 0.0
    %2949 = vmatpush1.msra.mxu0 %v47
    %2950 = vmatprep.subr.mxu0 0.0
    %2951 = vmatpush1.msra.mxu0 %v48
    %2952 = vmatprep.subr.mxu0 0.0
    %2953 = vmatpush1.msra.mxu0 %v49
    %2954 = vmatprep.subr.mxu0 0.0
    %2955 = vmatpush1.msra.mxu0 %v50
    %2956 = vmatprep.subr.mxu0 0.0
    %2957 = vmatpush1.msra.mxu0 %v51
    %2958 = vmatprep.subr.mxu0 0.0
    %2959 = vmatpush1.msra.mxu0 %v52
    %2960 = vmatprep.subr.mxu0 0.0
    %2961 = vmatpush1.msra.mxu0 %v53
    %2962 = vmatprep.subr.mxu0 0.0
    %2963 = vmatpush1.msra.mxu0 %v54
    %2964 = vmatprep.subr.mxu0 0.0
    %2965 = vmatpush1.msra.mxu0 %v55
    %2966 = vmatprep.subr.mxu0 0.0
    %2967 = vmatpush1.msra.mxu0 %v56
    %2968 = vmatprep.subr.mxu0 0.0
    %2969 = vmatpush1.msra.mxu0 %v57
    %2970 = vmatprep.subr.mxu0 0.0
    %2971 = vmatpush1.msra.mxu0 %v58
    %2972 = vmatprep.subr.mxu0 0.0
    %2973 = vmatpush1.msra.mxu0 %v59
    %2974 = vmatprep.subr.mxu0 0.0
    %2975 = vmatpush1.msra.mxu0 %v60
    %2976 = vmatprep.subr.mxu0 0.0
    %2977 = vmatpush1.msra.mxu0 0.0
    %2978 = vmatprep.subr.mxu0 0.0
    %2979 = vmatpush1.msra.mxu0 0.0
    %2980 = vmatprep.subr.mxu0 0.0
    %2981 = vmatpush1.msra.mxu0 0.0
    %2982 = vmatprep.subr.mxu0 0.0
    %2983 = vmatpush1.msra.mxu0 0.0
    %2984 = vmatprep.subr.mxu0 0.0
    %2985 = vmatpush1.msra.mxu0 0.0
    %2986 = vmatprep.subr.mxu0 0.0
    %2987 = vmatpush1.msra.mxu0 0.0
    %2988 = vmatprep.subr.mxu0 0.0
    %2989 = vmatpush1.msra.mxu0 0.0
    %2990 = vmatprep.subr.mxu0 0.0
    %2991 = vmatpush1.msra.mxu0 0.0
    %2992 = vmatprep.subr.mxu0 0.0
    %2993 = vmatpush1.msra.mxu0 0.0
    %2994 = vmatprep.subr.mxu0 0.0
    %2995 = vmatpush1.msra.mxu0 0.0
    %2996 = vmatprep.subr.mxu0 0.0
    %2997 = vmatpush1.msra.mxu0 0.0
    %2998 = vmatprep.subr.mxu0 0.0
    %2999 = vmatpush1.msra.mxu0 0.0
    %3000 = vmatprep.subr.mxu0 0.0
    %3001 = vmatpush1.msra.mxu0 0.0
    %3002 = vmatprep.subr.mxu0 0.0
    %3003 = vmatpush1.msra.mxu0 0.0
    %3004 = vmatprep.subr.mxu0 0.0
    %3005 = vmatpush1.msra.mxu0 0.0
    %3006 = vmatprep.subr.mxu0 0.0
    %3007 = vmatpush1.msra.mxu0 0.0
    %3008 = vmatprep.mubr.f32.mxu0 0.0
    %3009 = vmatmul.mubr.f32.gmra.mrb[0].mxu0 %v2942
    %v3010 = vpop.f32.mrb[0].mxu0
    %v3011 = vadd.f32 %v66, %v3010
    %v3012 = vpop.f32.mrb[0].mxu0
    %3013 = vmatprep.mubr.f32.mxu0 0.0
    %3014 = vmatmul.mubr.f32.gmra.mrb[0].mxu0 %v2943
    %v3015 = vpop.f32.mrb[0].mxu0
    %v3016 = vadd.f32 %v66, %v3015
    %v3017 = vpop.f32.mrb[0].mxu0
    %3018 = vdwg.mxu0
    %v3019 = vtanh.pop %v3011
    %v3020 = vtanh.pop %v3016
    %v3021 = vmul.f32 %v2853, 1.0864197
    %v3022 = vmul.f32 %v2854, 1.0864197
    %v3023 = vadd.f32 %v2776, %v3021
    %v3024 = vadd.f32 %v2777, %v3022
    %v3025 = vmul.f32 %v2934, -4.148148
    %v3026 = vmul.f32 %v2935, -4.148148
    %v3027 = vadd.f32 %v3023, %v3025
    %v3028 = vadd.f32 %v3024, %v3026
    %v3029 = vmul.f32 %v3019, 3.9506173
    %v3030 = vmul.f32 %v3020, 3.9506173
    %v3031 = vadd.f32 %v3027, %v3029
    %v3032 = vadd.f32 %v3028, %v3030
    %3033 = vmatprep.subr.mxu0 0.0
    %3034 = vmatpush1.msra.mxu0 %v45
    %3035 = vmatprep.subr.mxu0 0.0
    %3036 = vmatpush1.msra.mxu0 %v46
    %3037 = vmatprep.subr.mxu0 0.0
    %3038 = vmatpush1.msra.mxu0 %v47
    %3039 = vmatprep.subr.mxu0 0.0
    %3040 = vmatpush1.msra.mxu0 %v48
    %3041 = vmatprep.subr.mxu0 0.0
    %3042 = vmatpush1.msra.mxu0 %v49
    %3043 = vmatprep.subr.mxu0 0.0
    %3044 = vmatpush1.msra.mxu0 %v50
    %3045 = vmatprep.subr.mxu0 0.0
    %3046 = vmatpush1.msra.mxu0 %v51
    %3047 = vmatprep.subr.mxu0 0.0
    %3048 = vmatpush1.msra.mxu0 %v52
    %3049 = vmatprep.subr.mxu0 0.0
    %3050 = vmatpush1.msra.mxu0 %v53
    %3051 = vmatprep.subr.mxu0 0.0
    %3052 = vmatpush1.msra.mxu0 %v54
    %3053 = vmatprep.subr.mxu0 0.0
    %3054 = vmatpush1.msra.mxu0 %v55
    %3055 = vmatprep.subr.mxu0 0.0
    %3056 = vmatpush1.msra.mxu0 %v56
    %3057 = vmatprep.subr.mxu0 0.0
    %3058 = vmatpush1.msra.mxu0 %v57
    %3059 = vmatprep.subr.mxu0 0.0
    %3060 = vmatpush1.msra.mxu0 %v58
    %3061 = vmatprep.subr.mxu0 0.0
    %3062 = vmatpush1.msra.mxu0 %v59
    %3063 = vmatprep.subr.mxu0 0.0
    %3064 = vmatpush1.msra.mxu0 %v60
    %3065 = vmatprep.subr.mxu0 0.0
    %3066 = vmatpush1.msra.mxu0 0.0
    %3067 = vmatprep.subr.mxu0 0.0
    %3068 = vmatpush1.msra.mxu0 0.0
    %3069 = vmatprep.subr.mxu0 0.0
    %3070 = vmatpush1.msra.mxu0 0.0
    %3071 = vmatprep.subr.mxu0 0.0
    %3072 = vmatpush1.msra.mxu0 0.0
    %3073 = vmatprep.subr.mxu0 0.0
    %3074 = vmatpush1.msra.mxu0 0.0
    %3075 = vmatprep.subr.mxu0 0.0
    %3076 = vmatpush1.msra.mxu0 0.0
    %3077 = vmatprep.subr.mxu0 0.0
    %3078 = vmatpush1.msra.mxu0 0.0
    %3079 = vmatprep.subr.mxu0 0.0
    %3080 = vmatpush1.msra.mxu0 0.0
    %3081 = vmatprep.subr.mxu0 0.0
    %3082 = vmatpush1.msra.mxu0 0.0
    %3083 = vmatprep.subr.mxu0 0.0
    %3084 = vmatpush1.msra.mxu0 0.0
    %3085 = vmatprep.subr.mxu0 0.0
    %3086 = vmatpush1.msra.mxu0 0.0
    %3087 = vmatprep.subr.mxu0 0.0
    %3088 = vmatpush1.msra.mxu0 0.0
    %3089 = vmatprep.subr.mxu0 0.0
    %3090 = vmatpush1.msra.mxu0 0.0
    %3091 = vmatprep.subr.mxu0 0.0
    %3092 = vmatpush1.msra.mxu0 0.0
    %3093 = vmatprep.subr.mxu0 0.0
    %3094 = vmatpush1.msra.mxu0 0.0
    %3095 = vmatprep.subr.mxu0 0.0
    %3096 = vmatpush1.msra.mxu0 0.0
    %3097 = vmatprep.mubr.f32.mxu0 0.0
    %3098 = vmatmul.mubr.f32.gmra.mrb[0].mxu0 %v3031
    %v3099 = vpop.f32.mrb[0].mxu0
    %v3100 = vadd.f32 %v66, %v3099
    %v3101 = vpop.f32.mrb[0].mxu0
    %3102 = vmatprep.mubr.f32.mxu0 0.0
    %3103 = vmatmul.mubr.f32.gmra.mrb[0].mxu0 %v3032
    %v3104 = vpop.f32.mrb[0].mxu0
    %v3105 = vadd.f32 %v66, %v3104
    %v3106 = vpop.f32.mrb[0].mxu0
    %3107 = vdwg.mxu0
    %v3108 = vtanh.pop %v3100
    %v3109 = vtanh.pop %v3105
    %v3110 = vmul.f32 %v2853, 3.2806652
    %v3111 = vmul.f32 %v2854, 3.2806652
    %v3112 = vadd.f32 %v2776, %v3110
    %v3113 = vadd.f32 %v2777, %v3111
    %v3114 = vmul.f32 %v2934, -12.884214
    %v3115 = vmul.f32 %v2935, -12.884214
    %v3116 = vadd.f32 %v3112, %v3114
    %v3117 = vadd.f32 %v3113, %v3115
    %v3118 = vmul.f32 %v3019, 10.914326
    %v3119 = vmul.f32 %v3020, 10.914326
    %v3120 = vadd.f32 %v3116, %v3118
    %v3121 = vadd.f32 %v3117, %v3119
    %v3122 = vmul.f32 %v3108, -0.3231215
    %v3123 = vmul.f32 %v3109, -0.3231215
    %v3124 = vadd.f32 %v3120, %v3122
    %v3125 = vadd.f32 %v3121, %v3123
    %3126 = vmatprep.subr.mxu0 0.0
    %3127 = vmatpush1.msra.mxu0 %v45
    %3128 = vmatprep.subr.mxu0 0.0
    %3129 = vmatpush1.msra.mxu0 %v46
    %3130 = vmatprep.subr.mxu0 0.0
    %3131 = vmatpush1.msra.mxu0 %v47
    %3132 = vmatprep.subr.mxu0 0.0
    %3133 = vmatpush1.msra.mxu0 %v48
    %3134 = vmatprep.subr.mxu0 0.0
    %3135 = vmatpush1.msra.mxu0 %v49
    %3136 = vmatprep.subr.mxu0 0.0
    %3137 = vmatpush1.msra.mxu0 %v50
    %3138 = vmatprep.subr.mxu0 0.0
    %3139 = vmatpush1.msra.mxu0 %v51
    %3140 = vmatprep.subr.mxu0 0.0
    %3141 = vmatpush1.msra.mxu0 %v52
    %3142 = vmatprep.subr.mxu0 0.0
    %3143 = vmatpush1.msra.mxu0 %v53
    %3144 = vmatprep.subr.mxu0 0.0
    %3145 = vmatpush1.msra.mxu0 %v54
    %3146 = vmatprep.subr.mxu0 0.0
    %3147 = vmatpush1.msra.mxu0 %v55
    %3148 = vmatprep.subr.mxu0 0.0
    %3149 = vmatpush1.msra.mxu0 %v56
    %3150 = vmatprep.subr.mxu0 0.0
    %3151 = vmatpush1.msra.mxu0 %v57
    %3152 = vmatprep.subr.mxu0 0.0
    %3153 = vmatpush1.msra.mxu0 %v58
    %3154 = vmatprep.subr.mxu0 0.0
    %3155 = vmatpush1.msra.mxu0 %v59
    %3156 = vmatprep.subr.mxu0 0.0
    %3157 = vmatpush1.msra.mxu0 %v60
    %3158 = vmatprep.subr.mxu0 0.0
    %3159 = vmatpush1.msra.mxu0 0.0
    %3160 = vmatprep.subr.mxu0 0.0
    %3161 = vmatpush1.msra.mxu0 0.0
    %3162 = vmatprep.subr.mxu0 0.0
    %3163 = vmatpush1.msra.mxu0 0.0
    %3164 = vmatprep.subr.mxu0 0.0
    %3165 = vmatpush1.msra.mxu0 0.0
    %3166 = vmatprep.subr.mxu0 0.0
    %3167 = vmatpush1.msra.mxu0 0.0
    %3168 = vmatprep.subr.mxu0 0.0
    %3169 = vmatpush1.msra.mxu0 0.0
    %3170 = vmatprep.subr.mxu0 0.0
    %3171 = vmatpush1.msra.mxu0 0.0
    %3172 = vmatprep.subr.mxu0 0.0
    %3173 = vmatpush1.msra.mxu0 0.0
    %3174 = vmatprep.subr.mxu0 0.0
    %3175 = vmatpush1.msra.mxu0 0.0
    %3176 = vmatprep.subr.mxu0 0.0
    %3177 = vmatpush1.msra.mxu0 0.0
    %3178 = vmatprep.subr.mxu0 0.0
    %3179 = vmatpush1.msra.mxu0 0.0
    %3180 = vmatprep.subr.mxu0 0.0
    %3181 = vmatpush1.msra.mxu0 0.0
    %3182 = vmatprep.subr.mxu0 0.0
    %3183 = vmatpush1.msra.mxu0 0.0
    %3184 = vmatprep.subr.mxu0 0.0
    %3185 = vmatpush1.msra.mxu0 0.0
    %3186 = vmatprep.subr.mxu0 0.0
    %3187 = vmatpush1.msra.mxu0 0.0
    %3188 = vmatprep.subr.mxu0 0.0
    %3189 = vmatpush1.msra.mxu0 0.0
    %3190 = vmatprep.mubr.f32.mxu0 0.0
    %3191 = vmatmul.mubr.f32.gmra.mrb[0].mxu0 %v3124
    %v3192 = vpop.f32.mrb[0].mxu0
    %v3193 = vadd.f32 %v66, %v3192
    %v3194 = vpop.f32.mrb[0].mxu0
    %3195 = vmatprep.mubr.f32.mxu0 0.0
    %3196 = vmatmul.mubr.f32.gmra.mrb[0].mxu0 %v3125
    %v3197 = vpop.f32.mrb[0].mxu0
    %v3198 = vadd.f32 %v66, %v3197
    %v3199 = vpop.f32.mrb[0].mxu0
    %3200 = vdwg.mxu0
    %v3201 = vtanh.pop %v3193
    %v3202 = vtanh.pop %v3198
    %v3203 = vmul.f32 %v2853, 3.162528
    %v3204 = vmul.f32 %v2854, 3.162528
    %v3205 = vadd.f32 %v2776, %v3203
    %v3206 = vadd.f32 %v2777, %v3204
    %v3207 = vmul.f32 %v2934, -11.952862
    %v3208 = vmul.f32 %v2935, -11.952862
    %v3209 = vadd.f32 %v3205, %v3207
    %v3210 = vadd.f32 %v3206, %v3208
    %v3211 = vmul.f32 %v3019, 9.896026
    %v3212 = vmul.f32 %v3020, 9.896026
    %v3213 = vadd.f32 %v3209, %v3211
    %v3214 = vadd.f32 %v3210, %v3212
    %v3215 = vmul.f32 %v3108, 0.30934343
    %v3216 = vmul.f32 %v3109, 0.30934343
    %v3217 = vadd.f32 %v3213, %v3215
    %v3218 = vadd.f32 %v3214, %v3216
    %v3219 = vmul.f32 %v3201, -0.30392367
    %v3220 = vmul.f32 %v3202, -0.30392367
    %v3221 = vadd.f32 %v3217, %v3219
    %v3222 = vadd.f32 %v3218, %v3220
    %3223 = vmatprep.subr.mxu0 0.0
    %3224 = vmatpush1.msra.mxu0 %v45
    %3225 = vmatprep.subr.mxu0 0.0
    %3226 = vmatpush1.msra.mxu0 %v46
    %3227 = vmatprep.subr.mxu0 0.0
    %3228 = vmatpush1.msra.mxu0 %v47
    %3229 = vmatprep.subr.mxu0 0.0
    %3230 = vmatpush1.msra.mxu0 %v48
    %3231 = vmatprep.subr.mxu0 0.0
    %3232 = vmatpush1.msra.mxu0 %v49
    %3233 = vmatprep.subr.mxu0 0.0
    %3234 = vmatpush1.msra.mxu0 %v50
    %3235 = vmatprep.subr.mxu0 0.0
    %3236 = vmatpush1.msra.mxu0 %v51
    %3237 = vmatprep.subr.mxu0 0.0
    %3238 = vmatpush1.msra.mxu0 %v52
    %3239 = vmatprep.subr.mxu0 0.0
    %3240 = vmatpush1.msra.mxu0 %v53
    %3241 = vmatprep.subr.mxu0 0.0
    %3242 = vmatpush1.msra.mxu0 %v54
    %3243 = vmatprep.subr.mxu0 0.0
    %3244 = vmatpush1.msra.mxu0 %v55
    %3245 = vmatprep.subr.mxu0 0.0
    %3246 = vmatpush1.msra.mxu0 %v56
    %3247 = vmatprep.subr.mxu0 0.0
    %3248 = vmatpush1.msra.mxu0 %v57
    %3249 = vmatprep.subr.mxu0 0.0
    %3250 = vmatpush1.msra.mxu0 %v58
    %3251 = vmatprep.subr.mxu0 0.0
    %3252 = vmatpush1.msra.mxu0 %v59
    %3253 = vmatprep.subr.mxu0 0.0
    %3254 = vmatpush1.msra.mxu0 %v60
    %3255 = vmatprep.subr.mxu0 0.0
    %3256 = vmatpush1.msra.mxu0 0.0
    %3257 = vmatprep.subr.mxu0 0.0
    %3258 = vmatpush1.msra.mxu0 0.0
    %3259 = vmatprep.subr.mxu0 0.0
    %3260 = vmatpush1.msra.mxu0 0.0
    %3261 = vmatprep.subr.mxu0 0.0
    %3262 = vmatpush1.msra.mxu0 0.0
    %3263 = vmatprep.subr.mxu0 0.0
    %3264 = vmatpush1.msra.mxu0 0.0
    %3265 = vmatprep.subr.mxu0 0.0
    %3266 = vmatpush1.msra.mxu0 0.0
    %3267 = vmatprep.subr.mxu0 0.0
    %3268 = vmatpush1.msra.mxu0 0.0
    %3269 = vmatprep.subr.mxu0 0.0
    %3270 = vmatpush1.msra.mxu0 0.0
    %3271 = vmatprep.subr.mxu0 0.0
    %3272 = vmatpush1.msra.mxu0 0.0
    %3273 = vmatprep.subr.mxu0 0.0
    %3274 = vmatpush1.msra.mxu0 0.0
    %3275 = vmatprep.subr.mxu0 0.0
    %3276 = vmatpush1.msra.mxu0 0.0
    %3277 = vmatprep.subr.mxu0 0.0
    %3278 = vmatpush1.msra.mxu0 0.0
    %3279 = vmatprep.subr.mxu0 0.0
    %3280 = vmatpush1.msra.mxu0 0.0
    %3281 = vmatprep.subr.mxu0 0.0
    %3282 = vmatpush1.msra.mxu0 0.0
    %3283 = vmatprep.subr.mxu0 0.0
    %3284 = vmatpush1.msra.mxu0 0.0
    %3285 = vmatprep.subr.mxu0 0.0
    %3286 = vmatpush1.msra.mxu0 0.0
    %3287 = vmatprep.mubr.f32.mxu0 0.0
    %3288 = vmatmul.mubr.f32.gmra.mrb[0].mxu0 %v3221
    %v3289 = vpop.f32.mrb[0].mxu0
    %v3290 = vadd.f32 %v66, %v3289
    %v3291 = vpop.f32.mrb[0].mxu0
    %3292 = vmatprep.mubr.f32.mxu0 0.0
    %3293 = vmatmul.mubr.f32.gmra.mrb[0].mxu0 %v3222
    %v3294 = vpop.f32.mrb[0].mxu0
    %v3295 = vadd.f32 %v66, %v3294
    %v3296 = vpop.f32.mrb[0].mxu0
    %3297 = vdwg.mxu0
    %v3298 = vtanh.pop %v3290
    %v3299 = vtanh.pop %v3295
    %v3300 = vmul.f32 %v2853, 0.10127315
    %v3301 = vmul.f32 %v2854, 0.10127315
    %v3302 = vadd.f32 %v2776, %v3300
    %v3303 = vadd.f32 %v2777, %v3301
    %v3304 = vmul.f32 %v3019, 0.49915144
    %v3305 = vmul.f32 %v3020, 0.49915144
    %v3306 = vadd.f32 %v3302, %v3304
    %v3307 = vadd.f32 %v3303, %v3305
    %v3308 = vmul.f32 %v3108, 0.7233796
    %v3309 = vmul.f32 %v3109, 0.7233796
    %v3310 = vadd.f32 %v3306, %v3308
    %v3311 = vadd.f32 %v3307, %v3309
    %v3312 = vmul.f32 %v3201, -0.35819575
    %v3313 = vmul.f32 %v3202, -0.35819575
    %v3314 = vadd.f32 %v3310, %v3312
    %v3315 = vadd.f32 %v3311, %v3313
    %v3316 = vmul.f32 %v3298, 0.14550264
    %v3317 = vmul.f32 %v3299, 0.14550264
    %v3318 = vadd.f32 %v3314, %v3316
    %v3319 = vadd.f32 %v3315, %v3317
    %3320 = vmatprep.subr.mxu0 0.0
    %3321 = vmatpush1.msra.mxu0 %v45
    %3322 = vmatprep.subr.mxu0 0.0
    %3323 = vmatpush1.msra.mxu0 %v46
    %3324 = vmatprep.subr.mxu0 0.0
    %3325 = vmatpush1.msra.mxu0 %v47
    %3326 = vmatprep.subr.mxu0 0.0
    %3327 = vmatpush1.msra.mxu0 %v48
    %3328 = vmatprep.subr.mxu0 0.0
    %3329 = vmatpush1.msra.mxu0 %v49
    %3330 = vmatprep.subr.mxu0 0.0
    %3331 = vmatpush1.msra.mxu0 %v50
    %3332 = vmatprep.subr.mxu0 0.0
    %3333 = vmatpush1.msra.mxu0 %v51
    %3334 = vmatprep.subr.mxu0 0.0
    %3335 = vmatpush1.msra.mxu0 %v52
    %3336 = vmatprep.subr.mxu0 0.0
    %3337 = vmatpush1.msra.mxu0 %v53
    %3338 = vmatprep.subr.mxu0 0.0
    %3339 = vmatpush1.msra.mxu0 %v54
    %3340 = vmatprep.subr.mxu0 0.0
    %3341 = vmatpush1.msra.mxu0 %v55
    %3342 = vmatprep.subr.mxu0 0.0
    %3343 = vmatpush1.msra.mxu0 %v56
    %3344 = vmatprep.subr.mxu0 0.0
    %3345 = vmatpush1.msra.mxu0 %v57
    %3346 = vmatprep.subr.mxu0 0.0
    %3347 = vmatpush1.msra.mxu0 %v58
    %3348 = vmatprep.subr.mxu0 0.0
    %3349 = vmatpush1.msra.mxu0 %v59
    %3350 = vmatprep.subr.mxu0 0.0
    %3351 = vmatpush1.msra.mxu0 %v60
    %3352 = vmatprep.subr.mxu0 0.0
    %3353 = vmatpush1.msra.mxu0 0.0
    %3354 = vmatprep.subr.mxu0 0.0
    %3355 = vmatpush1.msra.mxu0 0.0
    %3356 = vmatprep.subr.mxu0 0.0
    %3357 = vmatpush1.msra.mxu0 0.0
    %3358 = vmatprep.subr.mxu0 0.0
    %3359 = vmatpush1.msra.mxu0 0.0
    %3360 = vmatprep.subr.mxu0 0.0
    %3361 = vmatpush1.msra.mxu0 0.0
    %3362 = vmatprep.subr.mxu0 0.0
    %3363 = vmatpush1.msra.mxu0 0.0
    %3364 = vmatprep.subr.mxu0 0.0
    %3365 = vmatpush1.msra.mxu0 0.0
    %3366 = vmatprep.subr.mxu0 0.0
    %3367 = vmatpush1.msra.mxu0 0.0
    %3368 = vmatprep.subr.mxu0 0.0
    %3369 = vmatpush1.msra.mxu0 0.0
    %3370 = vmatprep.subr.mxu0 0.0
    %3371 = vmatpush1.msra.mxu0 0.0
    %3372 = vmatprep.subr.mxu0 0.0
    %3373 = vmatpush1.msra.mxu0 0.0
    %3374 = vmatprep.subr.mxu0 0.0
    %3375 = vmatpush1.msra.mxu0 0.0
    %3376 = vmatprep.subr.mxu0 0.0
    %3377 = vmatpush1.msra.mxu0 0.0
    %3378 = vmatprep.subr.mxu0 0.0
    %3379 = vmatpush1.msra.mxu0 0.0
    %3380 = vmatprep.subr.mxu0 0.0
    %3381 = vmatpush1.msra.mxu0 0.0
    %3382 = vmatprep.subr.mxu0 0.0
    %3383 = vmatpush1.msra.mxu0 0.0
    %3384 = vmatprep.mubr.f32.mxu0 0.0
    %3385 = vmatmul.mubr.f32.gmra.mrb[0].mxu0 %v3318
    %v3386 = vpop.f32.mrb[0].mxu0
    %v3387 = vadd.f32 %v66, %v3386
    %v3388 = vpop.f32.mrb[0].mxu0
    %3389 = vmatprep.mubr.f32.mxu0 0.0
    %3390 = vmatmul.mubr.f32.gmra.mrb[0].mxu0 %v3319
    %v3391 = vpop.f32.mrb[0].mxu0
    %v3392 = vadd.f32 %v66, %v3391
    %v3393 = vpop.f32.mrb[0].mxu0
    %3394 = vdwg.mxu0
    %v3395 = vtanh.pop %v3387
    %v3396 = vtanh.pop %v3392
    %v3397 = vmul.f32 %v3395, 0.22222222
    %v3398 = vmul.f32 %v3396, 0.22222222
    %v3399 = vadd.f32 %v3318, %v3397
    %v3400 = vadd.f32 %v3319, %v3398
    %3401 = vmatprep.subr.mxu0 0.0
    %3402 = vmatpush1.msra.mxu0 %v45
    %3403 = vmatprep.subr.mxu0 0.0
    %3404 = vmatpush1.msra.mxu0 %v46
    %3405 = vmatprep.subr.mxu0 0.0
    %3406 = vmatpush1.msra.mxu0 %v47
    %3407 = vmatprep.subr.mxu0 0.0
    %3408 = vmatpush1.msra.mxu0 %v48
    %3409 = vmatprep.subr.mxu0 0.0
    %3410 = vmatpush1.msra.mxu0 %v49
    %3411 = vmatprep.subr.mxu0 0.0
    %3412 = vmatpush1.msra.mxu0 %v50
    %3413 = vmatprep.subr.mxu0 0.0
    %3414 = vmatpush1.msra.mxu0 %v51
    %3415 = vmatprep.subr.mxu0 0.0
    %3416 = vmatpush1.msra.mxu0 %v52
    %3417 = vmatprep.subr.mxu0 0.0
    %3418 = vmatpush1.msra.mxu0 %v53
    %3419 = vmatprep.subr.mxu0 0.0
    %3420 = vmatpush1.msra.mxu0 %v54
    %3421 = vmatprep.subr.mxu0 0.0
    %3422 = vmatpush1.msra.mxu0 %v55
    %3423 = vmatprep.subr.mxu0 0.0
    %3424 = vmatpush1.msra.mxu0 %v56
    %3425 = vmatprep.subr.mxu0 0.0
    %3426 = vmatpush1.msra.mxu0 %v57
    %3427 = vmatprep.subr.mxu0 0.0
    %3428 = vmatpush1.msra.mxu0 %v58
    %3429 = vmatprep.subr.mxu0 0.0
    %3430 = vmatpush1.msra.mxu0 %v59
    %3431 = vmatprep.subr.mxu0 0.0
    %3432 = vmatpush1.msra.mxu0 %v60
    %3433 = vmatprep.subr.mxu0 0.0
    %3434 = vmatpush1.msra.mxu0 0.0
    %3435 = vmatprep.subr.mxu0 0.0
    %3436 = vmatpush1.msra.mxu0 0.0
    %3437 = vmatprep.subr.mxu0 0.0
    %3438 = vmatpush1.msra.mxu0 0.0
    %3439 = vmatprep.subr.mxu0 0.0
    %3440 = vmatpush1.msra.mxu0 0.0
    %3441 = vmatprep.subr.mxu0 0.0
    %3442 = vmatpush1.msra.mxu0 0.0
    %3443 = vmatprep.subr.mxu0 0.0
    %3444 = vmatpush1.msra.mxu0 0.0
    %3445 = vmatprep.subr.mxu0 0.0
    %3446 = vmatpush1.msra.mxu0 0.0
    %3447 = vmatprep.subr.mxu0 0.0
    %3448 = vmatpush1.msra.mxu0 0.0
    %3449 = vmatprep.subr.mxu0 0.0
    %3450 = vmatpush1.msra.mxu0 0.0
    %3451 = vmatprep.subr.mxu0 0.0
    %3452 = vmatpush1.msra.mxu0 0.0
    %3453 = vmatprep.subr.mxu0 0.0
    %3454 = vmatpush1.msra.mxu0 0.0
    %3455 = vmatprep.subr.mxu0 0.0
    %3456 = vmatpush1.msra.mxu0 0.0
    %3457 = vmatprep.subr.mxu0 0.0
    %3458 = vmatpush1.msra.mxu0 0.0
    %3459 = vmatprep.subr.mxu0 0.0
    %3460 = vmatpush1.msra.mxu0 0.0
    %3461 = vmatprep.subr.mxu0 0.0
    %3462 = vmatpush1.msra.mxu0 0.0
    %3463 = vmatprep.subr.mxu0 0.0
    %3464 = vmatpush1.msra.mxu0 0.0
    %3465 = vmatprep.mubr.f32.mxu0 0.0
    %3466 = vmatmul.mubr.f32.gmra.mrb[0].mxu0 %v3399
    %v3467 = vpop.f32.mrb[0].mxu0
    %v3468 = vadd.f32 %v66, %v3467
    %v3469 = vpop.f32.mrb[0].mxu0
    %3470 = vmatprep.mubr.f32.mxu0 0.0
    %3471 = vmatmul.mubr.f32.gmra.mrb[0].mxu0 %v3400
    %v3472 = vpop.f32.mrb[0].mxu0
    %v3473 = vadd.f32 %v66, %v3472
    %v3474 = vpop.f32.mrb[0].mxu0
    %3475 = vdwg.mxu0
    %v3476 = vtanh.pop %v3468
    %v3477 = vtanh.pop %v3473
    %v3478 = vmul.f32 %v3395, 0.083333336
    %v3479 = vmul.f32 %v3396, 0.083333336
    %v3480 = vadd.f32 %v3318, %v3478
    %v3481 = vadd.f32 %v3319, %v3479
    %v3482 = vmul.f32 %v3476, 0.25
    %v3483 = vmul.f32 %v3477, 0.25
    %v3484 = vadd.f32 %v3480, %v3482
    %v3485 = vadd.f32 %v3481, %v3483
    %3486 = vmatprep.subr.mxu0 0.0
    %3487 = vmatpush1.msra.mxu0 %v45
    %3488 = vmatprep.subr.mxu0 0.0
    %3489 = vmatpush1.msra.mxu0 %v46
    %3490 = vmatprep.subr.mxu0 0.0
    %3491 = vmatpush1.msra.mxu0 %v47
    %3492 = vmatprep.subr.mxu0 0.0
    %3493 = vmatpush1.msra.mxu0 %v48
    %3494 = vmatprep.subr.mxu0 0.0
    %3495 = vmatpush1.msra.mxu0 %v49
    %3496 = vmatprep.subr.mxu0 0.0
    %3497 = vmatpush1.msra.mxu0 %v50
    %3498 = vmatprep.subr.mxu0 0.0
    %3499 = vmatpush1.msra.mxu0 %v51
    %3500 = vmatprep.subr.mxu0 0.0
    %3501 = vmatpush1.msra.mxu0 %v52
    %3502 = vmatprep.subr.mxu0 0.0
    %3503 = vmatpush1.msra.mxu0 %v53
    %3504 = vmatprep.subr.mxu0 0.0
    %3505 = vmatpush1.msra.mxu0 %v54
    %3506 = vmatprep.subr.mxu0 0.0
    %3507 = vmatpush1.msra.mxu0 %v55
    %3508 = vmatprep.subr.mxu0 0.0
    %3509 = vmatpush1.msra.mxu0 %v56
    %3510 = vmatprep.subr.mxu0 0.0
    %3511 = vmatpush1.msra.mxu0 %v57
    %3512 = vmatprep.subr.mxu0 0.0
    %3513 = vmatpush1.msra.mxu0 %v58
    %3514 = vmatprep.subr.mxu0 0.0
    %3515 = vmatpush1.msra.mxu0 %v59
    %3516 = vmatprep.subr.mxu0 0.0
    %3517 = vmatpush1.msra.mxu0 %v60
    %3518 = vmatprep.subr.mxu0 0.0
    %3519 = vmatpush1.msra.mxu0 0.0
    %3520 = vmatprep.subr.mxu0 0.0
    %3521 = vmatpush1.msra.mxu0 0.0
    %3522 = vmatprep.subr.mxu0 0.0
    %3523 = vmatpush1.msra.mxu0 0.0
    %3524 = vmatprep.subr.mxu0 0.0
    %3525 = vmatpush1.msra.mxu0 0.0
    %3526 = vmatprep.subr.mxu0 0.0
    %3527 = vmatpush1.msra.mxu0 0.0
    %3528 = vmatprep.subr.mxu0 0.0
    %3529 = vmatpush1.msra.mxu0 0.0
    %3530 = vmatprep.subr.mxu0 0.0
    %3531 = vmatpush1.msra.mxu0 0.0
    %3532 = vmatprep.subr.mxu0 0.0
    %3533 = vmatpush1.msra.mxu0 0.0
    %3534 = vmatprep.subr.mxu0 0.0
    %3535 = vmatpush1.msra.mxu0 0.0
    %3536 = vmatprep.subr.mxu0 0.0
    %3537 = vmatpush1.msra.mxu0 0.0
    %3538 = vmatprep.subr.mxu0 0.0
    %3539 = vmatpush1.msra.mxu0 0.0
    %3540 = vmatprep.subr.mxu0 0.0
    %3541 = vmatpush1.msra.mxu0 0.0
    %3542 = vmatprep.subr.mxu0 0.0
    %3543 = vmatpush1.msra.mxu0 0.0
    %3544 = vmatprep.subr.mxu0 0.0
    %3545 = vmatpush1.msra.mxu0 0.0
    %3546 = vmatprep.subr.mxu0 0.0
    %3547 = vmatpush1.msra.mxu0 0.0
    %3548 = vmatprep.subr.mxu0 0.0
    %3549 = vmatpush1.msra.mxu0 0.0
    %3550 = vmatprep.mubr.f32.mxu0 0.0
    %3551 = vmatmul.mubr.f32.gmra.mrb[0].mxu0 %v3484
    %v3552 = vpop.f32.mrb[0].mxu0
    %v3553 = vadd.f32 %v66, %v3552
    %v3554 = vpop.f32.mrb[0].mxu0
    %3555 = vmatprep.mubr.f32.mxu0 0.0
    %3556 = vmatmul.mubr.f32.gmra.mrb[0].mxu0 %v3485
    %v3557 = vpop.f32.mrb[0].mxu0
    %v3558 = vadd.f32 %v66, %v3557
    %v3559 = vpop.f32.mrb[0].mxu0
    %3560 = vdwg.mxu0
    %v3561 = vtanh.pop %v3553
    %v3562 = vtanh.pop %v3558
    %v3563 = vmul.f32 %v3395, 1.0864197
    %v3564 = vmul.f32 %v3396, 1.0864197
    %v3565 = vadd.f32 %v3318, %v3563
    %v3566 = vadd.f32 %v3319, %v3564
    %v3567 = vmul.f32 %v3476, -4.148148
    %v3568 = vmul.f32 %v3477, -4.148148
    %v3569 = vadd.f32 %v3565, %v3567
    %v3570 = vadd.f32 %v3566, %v3568
    %v3571 = vmul.f32 %v3561, 3.9506173
    %v3572 = vmul.f32 %v3562, 3.9506173
    %v3573 = vadd.f32 %v3569, %v3571
    %v3574 = vadd.f32 %v3570, %v3572
    %3575 = vmatprep.subr.mxu0 0.0
    %3576 = vmatpush1.msra.mxu0 %v45
    %3577 = vmatprep.subr.mxu0 0.0
    %3578 = vmatpush1.msra.mxu0 %v46
    %3579 = vmatprep.subr.mxu0 0.0
    %3580 = vmatpush1.msra.mxu0 %v47
    %3581 = vmatprep.subr.mxu0 0.0
    %3582 = vmatpush1.msra.mxu0 %v48
    %3583 = vmatprep.subr.mxu0 0.0
    %3584 = vmatpush1.msra.mxu0 %v49
    %3585 = vmatprep.subr.mxu0 0.0
    %3586 = vmatpush1.msra.mxu0 %v50
    %3587 = vmatprep.subr.mxu0 0.0
    %3588 = vmatpush1.msra.mxu0 %v51
    %3589 = vmatprep.subr.mxu0 0.0
    %3590 = vmatpush1.msra.mxu0 %v52
    %3591 = vmatprep.subr.mxu0 0.0
    %3592 = vmatpush1.msra.mxu0 %v53
    %3593 = vmatprep.subr.mxu0 0.0
    %3594 = vmatpush1.msra.mxu0 %v54
    %3595 = vmatprep.subr.mxu0 0.0
    %3596 = vmatpush1.msra.mxu0 %v55
    %3597 = vmatprep.subr.mxu0 0.0
    %3598 = vmatpush1.msra.mxu0 %v56
    %3599 = vmatprep.subr.mxu0 0.0
    %3600 = vmatpush1.msra.mxu0 %v57
    %3601 = vmatprep.subr.mxu0 0.0
    %3602 = vmatpush1.msra.mxu0 %v58
    %3603 = vmatprep.subr.mxu0 0.0
    %3604 = vmatpush1.msra.mxu0 %v59
    %3605 = vmatprep.subr.mxu0 0.0
    %3606 = vmatpush1.msra.mxu0 %v60
    %3607 = vmatprep.subr.mxu0 0.0
    %3608 = vmatpush1.msra.mxu0 0.0
    %3609 = vmatprep.subr.mxu0 0.0
    %3610 = vmatpush1.msra.mxu0 0.0
    %3611 = vmatprep.subr.mxu0 0.0
    %3612 = vmatpush1.msra.mxu0 0.0
    %3613 = vmatprep.subr.mxu0 0.0
    %3614 = vmatpush1.msra.mxu0 0.0
    %3615 = vmatprep.subr.mxu0 0.0
    %3616 = vmatpush1.msra.mxu0 0.0
    %3617 = vmatprep.subr.mxu0 0.0
    %3618 = vmatpush1.msra.mxu0 0.0
    %3619 = vmatprep.subr.mxu0 0.0
    %3620 = vmatpush1.msra.mxu0 0.0
    %3621 = vmatprep.subr.mxu0 0.0
    %3622 = vmatpush1.msra.mxu0 0.0
    %3623 = vmatprep.subr.mxu0 0.0
    %3624 = vmatpush1.msra.mxu0 0.0
    %3625 = vmatprep.subr.mxu0 0.0
    %3626 = vmatpush1.msra.mxu0 0.0
    %3627 = vmatprep.subr.mxu0 0.0
    %3628 = vmatpush1.msra.mxu0 0.0
    %3629 = vmatprep.subr.mxu0 0.0
    %3630 = vmatpush1.msra.mxu0 0.0
    %3631 = vmatprep.subr.mxu0 0.0
    %3632 = vmatpush1.msra.mxu0 0.0
    %3633 = vmatprep.subr.mxu0 0.0
    %3634 = vmatpush1.msra.mxu0 0.0
    %3635 = vmatprep.subr.mxu0 0.0
    %3636 = vmatpush1.msra.mxu0 0.0
    %3637 = vmatprep.subr.mxu0 0.0
    %3638 = vmatpush1.msra.mxu0 0.0
    %3639 = vmatprep.mubr.f32.mxu0 0.0
    %3640 = vmatmul.mubr.f32.gmra.mrb[0].mxu0 %v3573
    %v3641 = vpop.f32.mrb[0].mxu0
    %v3642 = vadd.f32 %v66, %v3641
    %v3643 = vpop.f32.mrb[0].mxu0
    %3644 = vmatprep.mubr.f32.mxu0 0.0
    %3645 = vmatmul.mubr.f32.gmra.mrb[0].mxu0 %v3574
    %v3646 = vpop.f32.mrb[0].mxu0
    %v3647 = vadd.f32 %v66, %v3646
    %v3648 = vpop.f32.mrb[0].mxu0
    %3649 = vdwg.mxu0
    %v3650 = vtanh.pop %v3642
    %v3651 = vtanh.pop %v3647
    %v3652 = vmul.f32 %v3395, 3.2806652
    %v3653 = vmul.f32 %v3396, 3.2806652
    %v3654 = vadd.f32 %v3318, %v3652
    %v3655 = vadd.f32 %v3319, %v3653
    %v3656 = vmul.f32 %v3476, -12.884214
    %v3657 = vmul.f32 %v3477, -12.884214
    %v3658 = vadd.f32 %v3654, %v3656
    %v3659 = vadd.f32 %v3655, %v3657
    %v3660 = vmul.f32 %v3561, 10.914326
    %v3661 = vmul.f32 %v3562, 10.914326
    %v3662 = vadd.f32 %v3658, %v3660
    %v3663 = vadd.f32 %v3659, %v3661
    %v3664 = vmul.f32 %v3650, -0.3231215
    %v3665 = vmul.f32 %v3651, -0.3231215
    %v3666 = vadd.f32 %v3662, %v3664
    %v3667 = vadd.f32 %v3663, %v3665
    %3668 = vmatprep.subr.mxu0 0.0
    %3669 = vmatpush1.msra.mxu0 %v45
    %3670 = vmatprep.subr.mxu0 0.0
    %3671 = vmatpush1.msra.mxu0 %v46
    %3672 = vmatprep.subr.mxu0 0.0
    %3673 = vmatpush1.msra.mxu0 %v47
    %3674 = vmatprep.subr.mxu0 0.0
    %3675 = vmatpush1.msra.mxu0 %v48
    %3676 = vmatprep.subr.mxu0 0.0
    %3677 = vmatpush1.msra.mxu0 %v49
    %3678 = vmatprep.subr.mxu0 0.0
    %3679 = vmatpush1.msra.mxu0 %v50
    %3680 = vmatprep.subr.mxu0 0.0
    %3681 = vmatpush1.msra.mxu0 %v51
    %3682 = vmatprep.subr.mxu0 0.0
    %3683 = vmatpush1.msra.mxu0 %v52
    %3684 = vmatprep.subr.mxu0 0.0
    %3685 = vmatpush1.msra.mxu0 %v53
    %3686 = vmatprep.subr.mxu0 0.0
    %3687 = vmatpush1.msra.mxu0 %v54
    %3688 = vmatprep.subr.mxu0 0.0
    %3689 = vmatpush1.msra.mxu0 %v55
    %3690 = vmatprep.subr.mxu0 0.0
    %3691 = vmatpush1.msra.mxu0 %v56
    %3692 = vmatprep.subr.mxu0 0.0
    %3693 = vmatpush1.msra.mxu0 %v57
    %3694 = vmatprep.subr.mxu0 0.0
    %3695 = vmatpush1.msra.mxu0 %v58
    %3696 = vmatprep.subr.mxu0 0.0
    %3697 = vmatpush1.msra.mxu0 %v59
    %3698 = vmatprep.subr.mxu0 0.0
    %3699 = vmatpush1.msra.mxu0 %v60
    %3700 = vmatprep.subr.mxu0 0.0
    %3701 = vmatpush1.msra.mxu0 0.0
    %3702 = vmatprep.subr.mxu0 0.0
    %3703 = vmatpush1.msra.mxu0 0.0
    %3704 = vmatprep.subr.mxu0 0.0
    %3705 = vmatpush1.msra.mxu0 0.0
    %3706 = vmatprep.subr.mxu0 0.0
    %3707 = vmatpush1.msra.mxu0 0.0
    %3708 = vmatprep.subr.mxu0 0.0
    %3709 = vmatpush1.msra.mxu0 0.0
    %3710 = vmatprep.subr.mxu0 0.0
    %3711 = vmatpush1.msra.mxu0 0.0
    %3712 = vmatprep.subr.mxu0 0.0
    %3713 = vmatpush1.msra.mxu0 0.0
    %3714 = vmatprep.subr.mxu0 0.0
    %3715 = vmatpush1.msra.mxu0 0.0
    %3716 = vmatprep.subr.mxu0 0.0
    %3717 = vmatpush1.msra.mxu0 0.0
    %3718 = vmatprep.subr.mxu0 0.0
    %3719 = vmatpush1.msra.mxu0 0.0
    %3720 = vmatprep.subr.mxu0 0.0
    %3721 = vmatpush1.msra.mxu0 0.0
    %3722 = vmatprep.subr.mxu0 0.0
    %3723 = vmatpush1.msra.mxu0 0.0
    %3724 = vmatprep.subr.mxu0 0.0
    %3725 = vmatpush1.msra.mxu0 0.0
    %3726 = vmatprep.subr.mxu0 0.0
    %3727 = vmatpush1.msra.mxu0 0.0
    %3728 = vmatprep.subr.mxu0 0.0
    %3729 = vmatpush1.msra.mxu0 0.0
    %3730 = vmatprep.subr.mxu0 0.0
    %3731 = vmatpush1.msra.mxu0 0.0
    %3732 = vmatprep.mubr.f32.mxu0 0.0
    %3733 = vmatmul.mubr.f32.gmra.mrb[0].mxu0 %v3666
    %v3734 = vpop.f32.mrb[0].mxu0
    %v3735 = vadd.f32 %v66, %v3734
    %v3736 = vpop.f32.mrb[0].mxu0
    %3737 = vmatprep.mubr.f32.mxu0 0.0
    %3738 = vmatmul.mubr.f32.gmra.mrb[0].mxu0 %v3667
    %v3739 = vpop.f32.mrb[0].mxu0
    %v3740 = vadd.f32 %v66, %v3739
    %v3741 = vpop.f32.mrb[0].mxu0
    %3742 = vdwg.mxu0
    %v3743 = vtanh.pop %v3735
    %v3744 = vtanh.pop %v3740
    %v3745 = vmul.f32 %v3395, 3.162528
    %v3746 = vmul.f32 %v3396, 3.162528
    %v3747 = vadd.f32 %v3318, %v3745
    %v3748 = vadd.f32 %v3319, %v3746
    %v3749 = vmul.f32 %v3476, -11.952862
    %v3750 = vmul.f32 %v3477, -11.952862
    %v3751 = vadd.f32 %v3747, %v3749
    %v3752 = vadd.f32 %v3748, %v3750
    %v3753 = vmul.f32 %v3561, 9.896026
    %v3754 = vmul.f32 %v3562, 9.896026
    %v3755 = vadd.f32 %v3751, %v3753
    %v3756 = vadd.f32 %v3752, %v3754
    %v3757 = vmul.f32 %v3650, 0.30934343
    %v3758 = vmul.f32 %v3651, 0.30934343
    %v3759 = vadd.f32 %v3755, %v3757
    %v3760 = vadd.f32 %v3756, %v3758
    %v3761 = vmul.f32 %v3743, -0.30392367
    %v3762 = vmul.f32 %v3744, -0.30392367
    %v3763 = vadd.f32 %v3759, %v3761
    %v3764 = vadd.f32 %v3760, %v3762
    %3765 = vmatprep.subr.mxu0 0.0
    %3766 = vmatpush1.msra.mxu0 %v45
    %3767 = vmatprep.subr.mxu0 0.0
    %3768 = vmatpush1.msra.mxu0 %v46
    %3769 = vmatprep.subr.mxu0 0.0
    %3770 = vmatpush1.msra.mxu0 %v47
    %3771 = vmatprep.subr.mxu0 0.0
    %3772 = vmatpush1.msra.mxu0 %v48
    %3773 = vmatprep.subr.mxu0 0.0
    %3774 = vmatpush1.msra.mxu0 %v49
    %3775 = vmatprep.subr.mxu0 0.0
    %3776 = vmatpush1.msra.mxu0 %v50
    %3777 = vmatprep.subr.mxu0 0.0
    %3778 = vmatpush1.msra.mxu0 %v51
    %3779 = vmatprep.subr.mxu0 0.0
    %3780 = vmatpush1.msra.mxu0 %v52
    %3781 = vmatprep.subr.mxu0 0.0
    %3782 = vmatpush1.msra.mxu0 %v53
    %3783 = vmatprep.subr.mxu0 0.0
    %3784 = vmatpush1.msra.mxu0 %v54
    %3785 = vmatprep.subr.mxu0 0.0
    %3786 = vmatpush1.msra.mxu0 %v55
    %3787 = vmatprep.subr.mxu0 0.0
    %3788 = vmatpush1.msra.mxu0 %v56
    %3789 = vmatprep.subr.mxu0 0.0
    %3790 = vmatpush1.msra.mxu0 %v57
    %3791 = vmatprep.subr.mxu0 0.0
    %3792 = vmatpush1.msra.mxu0 %v58
    %3793 = vmatprep.subr.mxu0 0.0
    %3794 = vmatpush1.msra.mxu0 %v59
    %3795 = vmatprep.subr.mxu0 0.0
    %3796 = vmatpush1.msra.mxu0 %v60
    %3797 = vmatprep.subr.mxu0 0.0
    %3798 = vmatpush1.msra.mxu0 0.0
    %3799 = vmatprep.subr.mxu0 0.0
    %3800 = vmatpush1.msra.mxu0 0.0
    %3801 = vmatprep.subr.mxu0 0.0
    %3802 = vmatpush1.msra.mxu0 0.0
    %3803 = vmatprep.subr.mxu0 0.0
    %3804 = vmatpush1.msra.mxu0 0.0
    %3805 = vmatprep.subr.mxu0 0.0
    %3806 = vmatpush1.msra.mxu0 0.0
    %3807 = vmatprep.subr.mxu0 0.0
    %3808 = vmatpush1.msra.mxu0 0.0
    %3809 = vmatprep.subr.mxu0 0.0
    %3810 = vmatpush1.msra.mxu0 0.0
    %3811 = vmatprep.subr.mxu0 0.0
    %3812 = vmatpush1.msra.mxu0 0.0
    %3813 = vmatprep.subr.mxu0 0.0
    %3814 = vmatpush1.msra.mxu0 0.0
    %3815 = vmatprep.subr.mxu0 0.0
    %3816 = vmatpush1.msra.mxu0 0.0
    %3817 = vmatprep.subr.mxu0 0.0
    %3818 = vmatpush1.msra.mxu0 0.0
    %3819 = vmatprep.subr.mxu0 0.0
    %3820 = vmatpush1.msra.mxu0 0.0
    %3821 = vmatprep.subr.mxu0 0.0
    %3822 = vmatpush1.msra.mxu0 0.0
    %3823 = vmatprep.subr.mxu0 0.0
    %3824 = vmatpush1.msra.mxu0 0.0
    %3825 = vmatprep.subr.mxu0 0.0
    %3826 = vmatpush1.msra.mxu0 0.0
    %3827 = vmatprep.subr.mxu0 0.0
    %3828 = vmatpush1.msra.mxu0 0.0
    %3829 = vmatprep.mubr.f32.mxu0 0.0
    %3830 = vmatmul.mubr.f32.gmra.mrb[0].mxu0 %v3763
    %v3831 = vpop.f32.mrb[0].mxu0
    %v3832 = vadd.f32 %v66, %v3831
    %v3833 = vpop.f32.mrb[0].mxu0
    %3834 = vmatprep.mubr.f32.mxu0 0.0
    %3835 = vmatmul.mubr.f32.gmra.mrb[0].mxu0 %v3764
    %v3836 = vpop.f32.mrb[0].mxu0
    %v3837 = vadd.f32 %v66, %v3836
    %v3838 = vpop.f32.mrb[0].mxu0
    %3839 = vdwg.mxu0
    %v3840 = vtanh.pop %v3832
    %v3841 = vtanh.pop %v3837
    %v3842 = vmul.f32 %v3395, 0.10127315
    %v3843 = vmul.f32 %v3396, 0.10127315
    %v3844 = vadd.f32 %v3318, %v3842
    %v3845 = vadd.f32 %v3319, %v3843
    %v3846 = vmul.f32 %v3561, 0.49915144
    %v3847 = vmul.f32 %v3562, 0.49915144
    %v3848 = vadd.f32 %v3844, %v3846
    %v3849 = vadd.f32 %v3845, %v3847
    %v3850 = vmul.f32 %v3650, 0.7233796
    %v3851 = vmul.f32 %v3651, 0.7233796
    %v3852 = vadd.f32 %v3848, %v3850
    %v3853 = vadd.f32 %v3849, %v3851
    %v3854 = vmul.f32 %v3743, -0.35819575
    %v3855 = vmul.f32 %v3744, -0.35819575
    %v3856 = vadd.f32 %v3852, %v3854
    %v3857 = vadd.f32 %v3853, %v3855
    %v3858 = vmul.f32 %v3840, 0.14550264
    %v3859 = vmul.f32 %v3841, 0.14550264
    %v3860 = vadd.f32 %v3856, %v3858
    %v3861 = vadd.f32 %v3857, %v3859
    %3862 = vmatprep.subr.mxu0 0.0
    %3863 = vmatpush1.msra.mxu0 %v45
    %3864 = vmatprep.subr.mxu0 0.0
    %3865 = vmatpush1.msra.mxu0 %v46
    %3866 = vmatprep.subr.mxu0 0.0
    %3867 = vmatpush1.msra.mxu0 %v47
    %3868 = vmatprep.subr.mxu0 0.0
    %3869 = vmatpush1.msra.mxu0 %v48
    %3870 = vmatprep.subr.mxu0 0.0
    %3871 = vmatpush1.msra.mxu0 %v49
    %3872 = vmatprep.subr.mxu0 0.0
    %3873 = vmatpush1.msra.mxu0 %v50
    %3874 = vmatprep.subr.mxu0 0.0
    %3875 = vmatpush1.msra.mxu0 %v51
    %3876 = vmatprep.subr.mxu0 0.0
    %3877 = vmatpush1.msra.mxu0 %v52
    %3878 = vmatprep.subr.mxu0 0.0
    %3879 = vmatpush1.msra.mxu0 %v53
    %3880 = vmatprep.subr.mxu0 0.0
    %3881 = vmatpush1.msra.mxu0 %v54
    %3882 = vmatprep.subr.mxu0 0.0
    %3883 = vmatpush1.msra.mxu0 %v55
    %3884 = vmatprep.subr.mxu0 0.0
    %3885 = vmatpush1.msra.mxu0 %v56
    %3886 = vmatprep.subr.mxu0 0.0
    %3887 = vmatpush1.msra.mxu0 %v57
    %3888 = vmatprep.subr.mxu0 0.0
    %3889 = vmatpush1.msra.mxu0 %v58
    %3890 = vmatprep.subr.mxu0 0.0
    %3891 = vmatpush1.msra.mxu0 %v59
    %3892 = vmatprep.subr.mxu0 0.0
    %3893 = vmatpush1.msra.mxu0 %v60
    %3894 = vmatprep.subr.mxu0 0.0
    %3895 = vmatpush1.msra.mxu0 0.0
    %3896 = vmatprep.subr.mxu0 0.0
    %3897 = vmatpush1.msra.mxu0 0.0
    %3898 = vmatprep.subr.mxu0 0.0
    %3899 = vmatpush1.msra.mxu0 0.0
    %3900 = vmatprep.subr.mxu0 0.0
    %3901 = vmatpush1.msra.mxu0 0.0
    %3902 = vmatprep.subr.mxu0 0.0
    %3903 = vmatpush1.msra.mxu0 0.0
    %3904 = vmatprep.subr.mxu0 0.0
    %3905 = vmatpush1.msra.mxu0 0.0
    %3906 = vmatprep.subr.mxu0 0.0
    %3907 = vmatpush1.msra.mxu0 0.0
    %3908 = vmatprep.subr.mxu0 0.0
    %3909 = vmatpush1.msra.mxu0 0.0
    %3910 = vmatprep.subr.mxu0 0.0
    %3911 = vmatpush1.msra.mxu0 0.0
    %3912 = vmatprep.subr.mxu0 0.0
    %3913 = vmatpush1.msra.mxu0 0.0
    %3914 = vmatprep.subr.mxu0 0.0
    %3915 = vmatpush1.msra.mxu0 0.0
    %3916 = vmatprep.subr.mxu0 0.0
    %3917 = vmatpush1.msra.mxu0 0.0
    %3918 = vmatprep.subr.mxu0 0.0
    %3919 = vmatpush1.msra.mxu0 0.0
    %3920 = vmatprep.subr.mxu0 0.0
    %3921 = vmatpush1.msra.mxu0 0.0
    %3922 = vmatprep.subr.mxu0 0.0
    %3923 = vmatpush1.msra.mxu0 0.0
    %3924 = vmatprep.subr.mxu0 0.0
    %3925 = vmatpush1.msra.mxu0 0.0
    %3926 = vmatprep.mubr.f32.mxu0 0.0
    %3927 = vmatmul.mubr.f32.gmra.mrb[0].mxu0 %v3860
    %v3928 = vpop.f32.mrb[0].mxu0
    %v3929 = vadd.f32 %v66, %v3928
    %v3930 = vpop.f32.mrb[0].mxu0
    %3931 = vmatprep.mubr.f32.mxu0 0.0
    %3932 = vmatmul.mubr.f32.gmra.mrb[0].mxu0 %v3861
    %v3933 = vpop.f32.mrb[0].mxu0
    %v3934 = vadd.f32 %v66, %v3933
    %v3935 = vpop.f32.mrb[0].mxu0
    %3936 = vdwg.mxu0
    %v3937 = vtanh.pop %v3929
    %v3938 = vtanh.pop %v3934
    %v3939 = vmul.f32 %v3937, 0.22222222
    %v3940 = vmul.f32 %v3938, 0.22222222
    %v3941 = vadd.f32 %v3860, %v3939
    %v3942 = vadd.f32 %v3861, %v3940
    %3943 = vmatprep.subr.mxu0 0.0
    %3944 = vmatpush1.msra.mxu0 %v45
    %3945 = vmatprep.subr.mxu0 0.0
    %3946 = vmatpush1.msra.mxu0 %v46
    %3947 = vmatprep.subr.mxu0 0.0
    %3948 = vmatpush1.msra.mxu0 %v47
    %3949 = vmatprep.subr.mxu0 0.0
    %3950 = vmatpush1.msra.mxu0 %v48
    %3951 = vmatprep.subr.mxu0 0.0
    %3952 = vmatpush1.msra.mxu0 %v49
    %3953 = vmatprep.subr.mxu0 0.0
    %3954 = vmatpush1.msra.mxu0 %v50
    %3955 = vmatprep.subr.mxu0 0.0
    %3956 = vmatpush1.msra.mxu0 %v51
    %3957 = vmatprep.subr.mxu0 0.0
    %3958 = vmatpush1.msra.mxu0 %v52
    %3959 = vmatprep.subr.mxu0 0.0
    %3960 = vmatpush1.msra.mxu0 %v53
    %3961 = vmatprep.subr.mxu0 0.0
    %3962 = vmatpush1.msra.mxu0 %v54
    %3963 = vmatprep.subr.mxu0 0.0
    %3964 = vmatpush1.msra.mxu0 %v55
    %3965 = vmatprep.subr.mxu0 0.0
    %3966 = vmatpush1.msra.mxu0 %v56
    %3967 = vmatprep.subr.mxu0 0.0
    %3968 = vmatpush1.msra.mxu0 %v57
    %3969 = vmatprep.subr.mxu0 0.0
    %3970 = vmatpush1.msra.mxu0 %v58
    %3971 = vmatprep.subr.mxu0 0.0
    %3972 = vmatpush1.msra.mxu0 %v59
    %3973 = vmatprep.subr.mxu0 0.0
    %3974 = vmatpush1.msra.mxu0 %v60
    %3975 = vmatprep.subr.mxu0 0.0
    %3976 = vmatpush1.msra.mxu0 0.0
    %3977 = vmatprep.subr.mxu0 0.0
    %3978 = vmatpush1.msra.mxu0 0.0
    %3979 = vmatprep.subr.mxu0 0.0
    %3980 = vmatpush1.msra.mxu0 0.0
    %3981 = vmatprep.subr.mxu0 0.0
    %3982 = vmatpush1.msra.mxu0 0.0
    %3983 = vmatprep.subr.mxu0 0.0
    %3984 = vmatpush1.msra.mxu0 0.0
    %3985 = vmatprep.subr.mxu0 0.0
    %3986 = vmatpush1.msra.mxu0 0.0
    %3987 = vmatprep.subr.mxu0 0.0
    %3988 = vmatpush1.msra.mxu0 0.0
    %3989 = vmatprep.subr.mxu0 0.0
    %3990 = vmatpush1.msra.mxu0 0.0
    %3991 = vmatprep.subr.mxu0 0.0
    %3992 = vmatpush1.msra.mxu0 0.0
    %3993 = vmatprep.subr.mxu0 0.0
    %3994 = vmatpush1.msra.mxu0 0.0
    %3995 = vmatprep.subr.mxu0 0.0
    %3996 = vmatpush1.msra.mxu0 0.0
    %3997 = vmatprep.subr.mxu0 0.0
    %3998 = vmatpush1.msra.mxu0 0.0
    %3999 = vmatprep.subr.mxu0 0.0
    %4000 = vmatpush1.msra.mxu0 0.0
    %4001 = vmatprep.subr.mxu0 0.0
    %4002 = vmatpush1.msra.mxu0 0.0
    %4003 = vmatprep.subr.mxu0 0.0
    %4004 = vmatpush1.msra.mxu0 0.0
    %4005 = vmatprep.subr.mxu0 0.0
    %4006 = vmatpush1.msra.mxu0 0.0
    %4007 = vmatprep.mubr.f32.mxu0 0.0
    %4008 = vmatmul.mubr.f32.gmra.mrb[0].mxu0 %v3941
    %v4009 = vpop.f32.mrb[0].mxu0
    %v4010 = vadd.f32 %v66, %v4009
    %v4011 = vpop.f32.mrb[0].mxu0
    %4012 = vmatprep.mubr.f32.mxu0 0.0
    %4013 = vmatmul.mubr.f32.gmra.mrb[0].mxu0 %v3942
    %v4014 = vpop.f32.mrb[0].mxu0
    %v4015 = vadd.f32 %v66, %v4014
    %v4016 = vpop.f32.mrb[0].mxu0
    %4017 = vdwg.mxu0
    %v4018 = vtanh.pop %v4010
    %v4019 = vtanh.pop %v4015
    %v4020 = vmul.f32 %v3937, 0.083333336
    %v4021 = vmul.f32 %v3938, 0.083333336
    %v4022 = vadd.f32 %v3860, %v4020
    %v4023 = vadd.f32 %v3861, %v4021
    %v4024 = vmul.f32 %v4018, 0.25
    %v4025 = vmul.f32 %v4019, 0.25
    %v4026 = vadd.f32 %v4022, %v4024
    %v4027 = vadd.f32 %v4023, %v4025
    %4028 = vmatprep.subr.mxu0 0.0
    %4029 = vmatpush1.msra.mxu0 %v45
    %4030 = vmatprep.subr.mxu0 0.0
    %4031 = vmatpush1.msra.mxu0 %v46
    %4032 = vmatprep.subr.mxu0 0.0
    %4033 = vmatpush1.msra.mxu0 %v47
    %4034 = vmatprep.subr.mxu0 0.0
    %4035 = vmatpush1.msra.mxu0 %v48
    %4036 = vmatprep.subr.mxu0 0.0
    %4037 = vmatpush1.msra.mxu0 %v49
    %4038 = vmatprep.subr.mxu0 0.0
    %4039 = vmatpush1.msra.mxu0 %v50
    %4040 = vmatprep.subr.mxu0 0.0
    %4041 = vmatpush1.msra.mxu0 %v51
    %4042 = vmatprep.subr.mxu0 0.0
    %4043 = vmatpush1.msra.mxu0 %v52
    %4044 = vmatprep.subr.mxu0 0.0
    %4045 = vmatpush1.msra.mxu0 %v53
    %4046 = vmatprep.subr.mxu0 0.0
    %4047 = vmatpush1.msra.mxu0 %v54
    %4048 = vmatprep.subr.mxu0 0.0
    %4049 = vmatpush1.msra.mxu0 %v55
    %4050 = vmatprep.subr.mxu0 0.0
    %4051 = vmatpush1.msra.mxu0 %v56
    %4052 = vmatprep.subr.mxu0 0.0
    %4053 = vmatpush1.msra.mxu0 %v57
    %4054 = vmatprep.subr.mxu0 0.0
    %4055 = vmatpush1.msra.mxu0 %v58
    %4056 = vmatprep.subr.mxu0 0.0
    %4057 = vmatpush1.msra.mxu0 %v59
    %4058 = vmatprep.subr.mxu0 0.0
    %4059 = vmatpush1.msra.mxu0 %v60
    %4060 = vmatprep.subr.mxu0 0.0
    %4061 = vmatpush1.msra.mxu0 0.0
    %4062 = vmatprep.subr.mxu0 0.0
    %4063 = vmatpush1.msra.mxu0 0.0
    %4064 = vmatprep.subr.mxu0 0.0
    %4065 = vmatpush1.msra.mxu0 0.0
    %4066 = vmatprep.subr.mxu0 0.0
    %4067 = vmatpush1.msra.mxu0 0.0
    %4068 = vmatprep.subr.mxu0 0.0
    %4069 = vmatpush1.msra.mxu0 0.0
    %4070 = vmatprep.subr.mxu0 0.0
    %4071 = vmatpush1.msra.mxu0 0.0
    %4072 = vmatprep.subr.mxu0 0.0
    %4073 = vmatpush1.msra.mxu0 0.0
    %4074 = vmatprep.subr.mxu0 0.0
    %4075 = vmatpush1.msra.mxu0 0.0
    %4076 = vmatprep.subr.mxu0 0.0
    %4077 = vmatpush1.msra.mxu0 0.0
    %4078 = vmatprep.subr.mxu0 0.0
    %4079 = vmatpush1.msra.mxu0 0.0
    %4080 = vmatprep.subr.mxu0 0.0
    %4081 = vmatpush1.msra.mxu0 0.0
    %4082 = vmatprep.subr.mxu0 0.0
    %4083 = vmatpush1.msra.mxu0 0.0
    %4084 = vmatprep.subr.mxu0 0.0
    %4085 = vmatpush1.msra.mxu0 0.0
    %4086 = vmatprep.subr.mxu0 0.0
    %4087 = vmatpush1.msra.mxu0 0.0
    %4088 = vmatprep.subr.mxu0 0.0
    %4089 = vmatpush1.msra.mxu0 0.0
    %4090 = vmatprep.subr.mxu0 0.0
    %4091 = vmatpush1.msra.mxu0 0.0
    %4092 = vmatprep.mubr.f32.mxu0 0.0
    %4093 = vmatmul.mubr.f32.gmra.mrb[0].mxu0 %v4026
    %v4094 = vpop.f32.mrb[0].mxu0
    %v4095 = vadd.f32 %v66, %v4094
    %v4096 = vpop.f32.mrb[0].mxu0
    %4097 = vmatprep.mubr.f32.mxu0 0.0
    %4098 = vmatmul.mubr.f32.gmra.mrb[0].mxu0 %v4027
    %v4099 = vpop.f32.mrb[0].mxu0
    %v4100 = vadd.f32 %v66, %v4099
    %v4101 = vpop.f32.mrb[0].mxu0
    %4102 = vdwg.mxu0
    %v4103 = vtanh.pop %v4095
    %v4104 = vtanh.pop %v4100
    %v4105 = vmul.f32 %v3937, 1.0864197
    %v4106 = vmul.f32 %v3938, 1.0864197
    %v4107 = vadd.f32 %v3860, %v4105
    %v4108 = vadd.f32 %v3861, %v4106
    %v4109 = vmul.f32 %v4018, -4.148148
    %v4110 = vmul.f32 %v4019, -4.148148
    %v4111 = vadd.f32 %v4107, %v4109
    %v4112 = vadd.f32 %v4108, %v4110
    %v4113 = vmul.f32 %v4103, 3.9506173
    %v4114 = vmul.f32 %v4104, 3.9506173
    %v4115 = vadd.f32 %v4111, %v4113
    %v4116 = vadd.f32 %v4112, %v4114
    %4117 = vmatprep.subr.mxu0 0.0
    %4118 = vmatpush1.msra.mxu0 %v45
    %4119 = vmatprep.subr.mxu0 0.0
    %4120 = vmatpush1.msra.mxu0 %v46
    %4121 = vmatprep.subr.mxu0 0.0
    %4122 = vmatpush1.msra.mxu0 %v47
    %4123 = vmatprep.subr.mxu0 0.0
    %4124 = vmatpush1.msra.mxu0 %v48
    %4125 = vmatprep.subr.mxu0 0.0
    %4126 = vmatpush1.msra.mxu0 %v49
    %4127 = vmatprep.subr.mxu0 0.0
    %4128 = vmatpush1.msra.mxu0 %v50
    %4129 = vmatprep.subr.mxu0 0.0
    %4130 = vmatpush1.msra.mxu0 %v51
    %4131 = vmatprep.subr.mxu0 0.0
    %4132 = vmatpush1.msra.mxu0 %v52
    %4133 = vmatprep.subr.mxu0 0.0
    %4134 = vmatpush1.msra.mxu0 %v53
    %4135 = vmatprep.subr.mxu0 0.0
    %4136 = vmatpush1.msra.mxu0 %v54
    %4137 = vmatprep.subr.mxu0 0.0
    %4138 = vmatpush1.msra.mxu0 %v55
    %4139 = vmatprep.subr.mxu0 0.0
    %4140 = vmatpush1.msra.mxu0 %v56
    %4141 = vmatprep.subr.mxu0 0.0
    %4142 = vmatpush1.msra.mxu0 %v57
    %4143 = vmatprep.subr.mxu0 0.0
    %4144 = vmatpush1.msra.mxu0 %v58
    %4145 = vmatprep.subr.mxu0 0.0
    %4146 = vmatpush1.msra.mxu0 %v59
    %4147 = vmatprep.subr.mxu0 0.0
    %4148 = vmatpush1.msra.mxu0 %v60
    %4149 = vmatprep.subr.mxu0 0.0
    %4150 = vmatpush1.msra.mxu0 0.0
    %4151 = vmatprep.subr.mxu0 0.0
    %4152 = vmatpush1.msra.mxu0 0.0
    %4153 = vmatprep.subr.mxu0 0.0
    %4154 = vmatpush1.msra.mxu0 0.0
    %4155 = vmatprep.subr.mxu0 0.0
    %4156 = vmatpush1.msra.mxu0 0.0
    %4157 = vmatprep.subr.mxu0 0.0
    %4158 = vmatpush1.msra.mxu0 0.0
    %4159 = vmatprep.subr.mxu0 0.0
    %4160 = vmatpush1.msra.mxu0 0.0
    %4161 = vmatprep.subr.mxu0 0.0
    %4162 = vmatpush1.msra.mxu0 0.0
    %4163 = vmatprep.subr.mxu0 0.0
    %4164 = vmatpush1.msra.mxu0 0.0
    %4165 = vmatprep.subr.mxu0 0.0
    %4166 = vmatpush1.msra.mxu0 0.0
    %4167 = vmatprep.subr.mxu0 0.0
    %4168 = vmatpush1.msra.mxu0 0.0
    %4169 = vmatprep.subr.mxu0 0.0
    %4170 = vmatpush1.msra.mxu0 0.0
    %4171 = vmatprep.subr.mxu0 0.0
    %4172 = vmatpush1.msra.mxu0 0.0
    %4173 = vmatprep.subr.mxu0 0.0
    %4174 = vmatpush1.msra.mxu0 0.0
    %4175 = vmatprep.subr.mxu0 0.0
    %4176 = vmatpush1.msra.mxu0 0.0
    %4177 = vmatprep.subr.mxu0 0.0
    %4178 = vmatpush1.msra.mxu0 0.0
    %4179 = vmatprep.subr.mxu0 0.0
    %4180 = vmatpush1.msra.mxu0 0.0
    %4181 = vmatprep.mubr.f32.mxu0 0.0
    %4182 = vmatmul.mubr.f32.gmra.mrb[0].mxu0 %v4115
    %v4183 = vpop.f32.mrb[0].mxu0
    %v4184 = vadd.f32 %v66, %v4183
    %v4185 = vpop.f32.mrb[0].mxu0
    %4186 = vmatprep.mubr.f32.mxu0 0.0
    %4187 = vmatmul.mubr.f32.gmra.mrb[0].mxu0 %v4116
    %v4188 = vpop.f32.mrb[0].mxu0
    %v4189 = vadd.f32 %v66, %v4188
    %v4190 = vpop.f32.mrb[0].mxu0
    %4191 = vdwg.mxu0
    %v4192 = vtanh.pop %v4184
    %v4193 = vtanh.pop %v4189
    %v4194 = vmul.f32 %v3937, 3.2806652
    %v4195 = vmul.f32 %v3938, 3.2806652
    %v4196 = vadd.f32 %v3860, %v4194
    %v4197 = vadd.f32 %v3861, %v4195
    %v4198 = vmul.f32 %v4018, -12.884214
    %v4199 = vmul.f32 %v4019, -12.884214
    %v4200 = vadd.f32 %v4196, %v4198
    %v4201 = vadd.f32 %v4197, %v4199
    %v4202 = vmul.f32 %v4103, 10.914326
    %v4203 = vmul.f32 %v4104, 10.914326
    %v4204 = vadd.f32 %v4200, %v4202
    %v4205 = vadd.f32 %v4201, %v4203
    %v4206 = vmul.f32 %v4192, -0.3231215
    %v4207 = vmul.f32 %v4193, -0.3231215
    %v4208 = vadd.f32 %v4204, %v4206
    %v4209 = vadd.f32 %v4205, %v4207
    %4210 = vmatprep.subr.mxu0 0.0
    %4211 = vmatpush1.msra.mxu0 %v45
    %4212 = vmatprep.subr.mxu0 0.0
    %4213 = vmatpush1.msra.mxu0 %v46
    %4214 = vmatprep.subr.mxu0 0.0
    %4215 = vmatpush1.msra.mxu0 %v47
    %4216 = vmatprep.subr.mxu0 0.0
    %4217 = vmatpush1.msra.mxu0 %v48
    %4218 = vmatprep.subr.mxu0 0.0
    %4219 = vmatpush1.msra.mxu0 %v49
    %4220 = vmatprep.subr.mxu0 0.0
    %4221 = vmatpush1.msra.mxu0 %v50
    %4222 = vmatprep.subr.mxu0 0.0
    %4223 = vmatpush1.msra.mxu0 %v51
    %4224 = vmatprep.subr.mxu0 0.0
    %4225 = vmatpush1.msra.mxu0 %v52
    %4226 = vmatprep.subr.mxu0 0.0
    %4227 = vmatpush1.msra.mxu0 %v53
    %4228 = vmatprep.subr.mxu0 0.0
    %4229 = vmatpush1.msra.mxu0 %v54
    %4230 = vmatprep.subr.mxu0 0.0
    %4231 = vmatpush1.msra.mxu0 %v55
    %4232 = vmatprep.subr.mxu0 0.0
    %4233 = vmatpush1.msra.mxu0 %v56
    %4234 = vmatprep.subr.mxu0 0.0
    %4235 = vmatpush1.msra.mxu0 %v57
    %4236 = vmatprep.subr.mxu0 0.0
    %4237 = vmatpush1.msra.mxu0 %v58
    %4238 = vmatprep.subr.mxu0 0.0
    %4239 = vmatpush1.msra.mxu0 %v59
    %4240 = vmatprep.subr.mxu0 0.0
    %4241 = vmatpush1.msra.mxu0 %v60
    %4242 = vmatprep.subr.mxu0 0.0
    %4243 = vmatpush1.msra.mxu0 0.0
    %4244 = vmatprep.subr.mxu0 0.0
    %4245 = vmatpush1.msra.mxu0 0.0
    %4246 = vmatprep.subr.mxu0 0.0
    %4247 = vmatpush1.msra.mxu0 0.0
    %4248 = vmatprep.subr.mxu0 0.0
    %4249 = vmatpush1.msra.mxu0 0.0
    %4250 = vmatprep.subr.mxu0 0.0
    %4251 = vmatpush1.msra.mxu0 0.0
    %4252 = vmatprep.subr.mxu0 0.0
    %4253 = vmatpush1.msra.mxu0 0.0
    %4254 = vmatprep.subr.mxu0 0.0
    %4255 = vmatpush1.msra.mxu0 0.0
    %4256 = vmatprep.subr.mxu0 0.0
    %4257 = vmatpush1.msra.mxu0 0.0
    %4258 = vmatprep.subr.mxu0 0.0
    %4259 = vmatpush1.msra.mxu0 0.0
    %4260 = vmatprep.subr.mxu0 0.0
    %4261 = vmatpush1.msra.mxu0 0.0
    %4262 = vmatprep.subr.mxu0 0.0
    %4263 = vmatpush1.msra.mxu0 0.0
    %4264 = vmatprep.subr.mxu0 0.0
    %4265 = vmatpush1.msra.mxu0 0.0
    %4266 = vmatprep.subr.mxu0 0.0
    %4267 = vmatpush1.msra.mxu0 0.0
    %4268 = vmatprep.subr.mxu0 0.0
    %4269 = vmatpush1.msra.mxu0 0.0
    %4270 = vmatprep.subr.mxu0 0.0
    %4271 = vmatpush1.msra.mxu0 0.0
    %4272 = vmatprep.subr.mxu0 0.0
    %4273 = vmatpush1.msra.mxu0 0.0
    %4274 = vmatprep.mubr.f32.mxu0 0.0
    %4275 = vmatmul.mubr.f32.gmra.mrb[0].mxu0 %v4208
    %v4276 = vpop.f32.mrb[0].mxu0
    %v4277 = vadd.f32 %v66, %v4276
    %v4278 = vpop.f32.mrb[0].mxu0
    %4279 = vmatprep.mubr.f32.mxu0 0.0
    %4280 = vmatmul.mubr.f32.gmra.mrb[0].mxu0 %v4209
    %v4281 = vpop.f32.mrb[0].mxu0
    %v4282 = vadd.f32 %v66, %v4281
    %v4283 = vpop.f32.mrb[0].mxu0
    %4284 = vdwg.mxu0
    %v4285 = vtanh.pop %v4277
    %v4286 = vtanh.pop %v4282
    %v4287 = vmul.f32 %v3937, 3.162528
    %v4288 = vmul.f32 %v3938, 3.162528
    %v4289 = vadd.f32 %v3860, %v4287
    %v4290 = vadd.f32 %v3861, %v4288
    %v4291 = vmul.f32 %v4018, -11.952862
    %v4292 = vmul.f32 %v4019, -11.952862
    %v4293 = vadd.f32 %v4289, %v4291
    %v4294 = vadd.f32 %v4290, %v4292
    %v4295 = vmul.f32 %v4103, 9.896026
    %v4296 = vmul.f32 %v4104, 9.896026
    %v4297 = vadd.f32 %v4293, %v4295
    %v4298 = vadd.f32 %v4294, %v4296
    %v4299 = vmul.f32 %v4192, 0.30934343
    %v4300 = vmul.f32 %v4193, 0.30934343
    %v4301 = vadd.f32 %v4297, %v4299
    %v4302 = vadd.f32 %v4298, %v4300
    %v4303 = vmul.f32 %v4285, -0.30392367
    %v4304 = vmul.f32 %v4286, -0.30392367
    %v4305 = vadd.f32 %v4301, %v4303
    %v4306 = vadd.f32 %v4302, %v4304
    %4307 = vmatprep.subr.mxu0 0.0
    %4308 = vmatpush1.msra.mxu0 %v45
    %4309 = vmatprep.subr.mxu0 0.0
    %4310 = vmatpush1.msra.mxu0 %v46
    %4311 = vmatprep.subr.mxu0 0.0
    %4312 = vmatpush1.msra.mxu0 %v47
    %4313 = vmatprep.subr.mxu0 0.0
    %4314 = vmatpush1.msra.mxu0 %v48
    %4315 = vmatprep.subr.mxu0 0.0
    %4316 = vmatpush1.msra.mxu0 %v49
    %4317 = vmatprep.subr.mxu0 0.0
    %4318 = vmatpush1.msra.mxu0 %v50
    %4319 = vmatprep.subr.mxu0 0.0
    %4320 = vmatpush1.msra.mxu0 %v51
    %4321 = vmatprep.subr.mxu0 0.0
    %4322 = vmatpush1.msra.mxu0 %v52
    %4323 = vmatprep.subr.mxu0 0.0
    %4324 = vmatpush1.msra.mxu0 %v53
    %4325 = vmatprep.subr.mxu0 0.0
    %4326 = vmatpush1.msra.mxu0 %v54
    %4327 = vmatprep.subr.mxu0 0.0
    %4328 = vmatpush1.msra.mxu0 %v55
    %4329 = vmatprep.subr.mxu0 0.0
    %4330 = vmatpush1.msra.mxu0 %v56
    %4331 = vmatprep.subr.mxu0 0.0
    %4332 = vmatpush1.msra.mxu0 %v57
    %4333 = vmatprep.subr.mxu0 0.0
    %4334 = vmatpush1.msra.mxu0 %v58
    %4335 = vmatprep.subr.mxu0 0.0
    %4336 = vmatpush1.msra.mxu0 %v59
    %4337 = vmatprep.subr.mxu0 0.0
    %4338 = vmatpush1.msra.mxu0 %v60
    %4339 = vmatprep.subr.mxu0 0.0
    %4340 = vmatpush1.msra.mxu0 0.0
    %4341 = vmatprep.subr.mxu0 0.0
    %4342 = vmatpush1.msra.mxu0 0.0
    %4343 = vmatprep.subr.mxu0 0.0
    %4344 = vmatpush1.msra.mxu0 0.0
    %4345 = vmatprep.subr.mxu0 0.0
    %4346 = vmatpush1.msra.mxu0 0.0
    %4347 = vmatprep.subr.mxu0 0.0
    %4348 = vmatpush1.msra.mxu0 0.0
    %4349 = vmatprep.subr.mxu0 0.0
    %4350 = vmatpush1.msra.mxu0 0.0
    %4351 = vmatprep.subr.mxu0 0.0
    %4352 = vmatpush1.msra.mxu0 0.0
    %4353 = vmatprep.subr.mxu0 0.0
    %4354 = vmatpush1.msra.mxu0 0.0
    %4355 = vmatprep.subr.mxu0 0.0
    %4356 = vmatpush1.msra.mxu0 0.0
    %4357 = vmatprep.subr.mxu0 0.0
    %4358 = vmatpush1.msra.mxu0 0.0
    %4359 = vmatprep.subr.mxu0 0.0
    %4360 = vmatpush1.msra.mxu0 0.0
    %4361 = vmatprep.subr.mxu0 0.0
    %4362 = vmatpush1.msra.mxu0 0.0
    %4363 = vmatprep.subr.mxu0 0.0
    %4364 = vmatpush1.msra.mxu0 0.0
    %4365 = vmatprep.subr.mxu0 0.0
    %4366 = vmatpush1.msra.mxu0 0.0
    %4367 = vmatprep.subr.mxu0 0.0
    %4368 = vmatpush1.msra.mxu0 0.0
    %4369 = vmatprep.subr.mxu0 0.0
    %4370 = vmatpush1.msra.mxu0 0.0
    %4371 = vmatprep.mubr.f32.mxu0 0.0
    %4372 = vmatmul.mubr.f32.gmra.mrb[0].mxu0 %v4305
    %v4373 = vpop.f32.mrb[0].mxu0
    %v4374 = vadd.f32 %v66, %v4373
    %v4375 = vpop.f32.mrb[0].mxu0
    %4376 = vmatprep.mubr.f32.mxu0 0.0
    %4377 = vmatmul.mubr.f32.gmra.mrb[0].mxu0 %v4306
    %v4378 = vpop.f32.mrb[0].mxu0
    %v4379 = vadd.f32 %v66, %v4378
    %v4380 = vpop.f32.mrb[0].mxu0
    %4381 = vdwg.mxu0
    %v4382 = vtanh.pop %v4374
    %v4383 = vtanh.pop %v4379
    %v4384 = vmul.f32 %v3937, 0.10127315
    %v4385 = vmul.f32 %v3938, 0.10127315
    %v4386 = vadd.f32 %v3860, %v4384
    %v4387 = vadd.f32 %v3861, %v4385
    %v4388 = vmul.f32 %v4103, 0.49915144
    %v4389 = vmul.f32 %v4104, 0.49915144
    %v4390 = vadd.f32 %v4386, %v4388
    %v4391 = vadd.f32 %v4387, %v4389
    %v4392 = vmul.f32 %v4192, 0.7233796
    %v4393 = vmul.f32 %v4193, 0.7233796
    %v4394 = vadd.f32 %v4390, %v4392
    %v4395 = vadd.f32 %v4391, %v4393
    %v4396 = vmul.f32 %v4285, -0.35819575
    %v4397 = vmul.f32 %v4286, -0.35819575
    %v4398 = vadd.f32 %v4394, %v4396
    %v4399 = vadd.f32 %v4395, %v4397
    %v4400 = vmul.f32 %v4382, 0.14550264
    %v4401 = vmul.f32 %v4383, 0.14550264
    %v4402 = vadd.f32 %v4398, %v4400
    %v4403 = vadd.f32 %v4399, %v4401
    %4404 = vmatprep.subr.mxu0 0.0
    %4405 = vmatpush1.msra.mxu0 %v45
    %4406 = vmatprep.subr.mxu0 0.0
    %4407 = vmatpush1.msra.mxu0 %v46
    %4408 = vmatprep.subr.mxu0 0.0
    %4409 = vmatpush1.msra.mxu0 %v47
    %4410 = vmatprep.subr.mxu0 0.0
    %4411 = vmatpush1.msra.mxu0 %v48
    %4412 = vmatprep.subr.mxu0 0.0
    %4413 = vmatpush1.msra.mxu0 %v49
    %4414 = vmatprep.subr.mxu0 0.0
    %4415 = vmatpush1.msra.mxu0 %v50
    %4416 = vmatprep.subr.mxu0 0.0
    %4417 = vmatpush1.msra.mxu0 %v51
    %4418 = vmatprep.subr.mxu0 0.0
    %4419 = vmatpush1.msra.mxu0 %v52
    %4420 = vmatprep.subr.mxu0 0.0
    %4421 = vmatpush1.msra.mxu0 %v53
    %4422 = vmatprep.subr.mxu0 0.0
    %4423 = vmatpush1.msra.mxu0 %v54
    %4424 = vmatprep.subr.mxu0 0.0
    %4425 = vmatpush1.msra.mxu0 %v55
    %4426 = vmatprep.subr.mxu0 0.0
    %4427 = vmatpush1.msra.mxu0 %v56
    %4428 = vmatprep.subr.mxu0 0.0
    %4429 = vmatpush1.msra.mxu0 %v57
    %4430 = vmatprep.subr.mxu0 0.0
    %4431 = vmatpush1.msra.mxu0 %v58
    %4432 = vmatprep.subr.mxu0 0.0
    %4433 = vmatpush1.msra.mxu0 %v59
    %4434 = vmatprep.subr.mxu0 0.0
    %4435 = vmatpush1.msra.mxu0 %v60
    %4436 = vmatprep.subr.mxu0 0.0
    %4437 = vmatpush1.msra.mxu0 0.0
    %4438 = vmatprep.subr.mxu0 0.0
    %4439 = vmatpush1.msra.mxu0 0.0
    %4440 = vmatprep.subr.mxu0 0.0
    %4441 = vmatpush1.msra.mxu0 0.0
    %4442 = vmatprep.subr.mxu0 0.0
    %4443 = vmatpush1.msra.mxu0 0.0
    %4444 = vmatprep.subr.mxu0 0.0
    %4445 = vmatpush1.msra.mxu0 0.0
    %4446 = vmatprep.subr.mxu0 0.0
    %4447 = vmatpush1.msra.mxu0 0.0
    %4448 = vmatprep.subr.mxu0 0.0
    %4449 = vmatpush1.msra.mxu0 0.0
    %4450 = vmatprep.subr.mxu0 0.0
    %4451 = vmatpush1.msra.mxu0 0.0
    %4452 = vmatprep.subr.mxu0 0.0
    %4453 = vmatpush1.msra.mxu0 0.0
    %4454 = vmatprep.subr.mxu0 0.0
    %4455 = vmatpush1.msra.mxu0 0.0
    %4456 = vmatprep.subr.mxu0 0.0
    %4457 = vmatpush1.msra.mxu0 0.0
    %4458 = vmatprep.subr.mxu0 0.0
    %4459 = vmatpush1.msra.mxu0 0.0
    %4460 = vmatprep.subr.mxu0 0.0
    %4461 = vmatpush1.msra.mxu0 0.0
    %4462 = vmatprep.subr.mxu0 0.0
    %4463 = vmatpush1.msra.mxu0 0.0
    %4464 = vmatprep.subr.mxu0 0.0
    %4465 = vmatpush1.msra.mxu0 0.0
    %4466 = vmatprep.subr.mxu0 0.0
    %4467 = vmatpush1.msra.mxu0 0.0
    %4468 = vmatprep.mubr.f32.mxu0 0.0
    %4469 = vmatmul.mubr.f32.gmra.mrb[0].mxu0 %v4402
    %v4470 = vpop.f32.mrb[0].mxu0
    %v4471 = vadd.f32 %v66, %v4470
    %v4472 = vpop.f32.mrb[0].mxu0
    %4473 = vmatprep.mubr.f32.mxu0 0.0
    %4474 = vmatmul.mubr.f32.gmra.mrb[0].mxu0 %v4403
    %v4475 = vpop.f32.mrb[0].mxu0
    %v4476 = vadd.f32 %v66, %v4475
    %v4477 = vpop.f32.mrb[0].mxu0
    %4478 = vdwg.mxu0
    %v4479 = vtanh.pop %v4471
    %v4480 = vtanh.pop %v4476
    %v4481 = vmul.f32 %v4479, 0.22222222
    %v4482 = vmul.f32 %v4480, 0.22222222
    %v4483 = vadd.f32 %v4402, %v4481
    %v4484 = vadd.f32 %v4403, %v4482
    %4485 = vmatprep.subr.mxu0 0.0
    %4486 = vmatpush1.msra.mxu0 %v45
    %4487 = vmatprep.subr.mxu0 0.0
    %4488 = vmatpush1.msra.mxu0 %v46
    %4489 = vmatprep.subr.mxu0 0.0
    %4490 = vmatpush1.msra.mxu0 %v47
    %4491 = vmatprep.subr.mxu0 0.0
    %4492 = vmatpush1.msra.mxu0 %v48
    %4493 = vmatprep.subr.mxu0 0.0
    %4494 = vmatpush1.msra.mxu0 %v49
    %4495 = vmatprep.subr.mxu0 0.0
    %4496 = vmatpush1.msra.mxu0 %v50
    %4497 = vmatprep.subr.mxu0 0.0
    %4498 = vmatpush1.msra.mxu0 %v51
    %4499 = vmatprep.subr.mxu0 0.0
    %4500 = vmatpush1.msra.mxu0 %v52
    %4501 = vmatprep.subr.mxu0 0.0
    %4502 = vmatpush1.msra.mxu0 %v53
    %4503 = vmatprep.subr.mxu0 0.0
    %4504 = vmatpush1.msra.mxu0 %v54
    %4505 = vmatprep.subr.mxu0 0.0
    %4506 = vmatpush1.msra.mxu0 %v55
    %4507 = vmatprep.subr.mxu0 0.0
    %4508 = vmatpush1.msra.mxu0 %v56
    %4509 = vmatprep.subr.mxu0 0.0
    %4510 = vmatpush1.msra.mxu0 %v57
    %4511 = vmatprep.subr.mxu0 0.0
    %4512 = vmatpush1.msra.mxu0 %v58
    %4513 = vmatprep.subr.mxu0 0.0
    %4514 = vmatpush1.msra.mxu0 %v59
    %4515 = vmatprep.subr.mxu0 0.0
    %4516 = vmatpush1.msra.mxu0 %v60
    %4517 = vmatprep.subr.mxu0 0.0
    %4518 = vmatpush1.msra.mxu0 0.0
    %4519 = vmatprep.subr.mxu0 0.0
    %4520 = vmatpush1.msra.mxu0 0.0
    %4521 = vmatprep.subr.mxu0 0.0
    %4522 = vmatpush1.msra.mxu0 0.0
    %4523 = vmatprep.subr.mxu0 0.0
    %4524 = vmatpush1.msra.mxu0 0.0
    %4525 = vmatprep.subr.mxu0 0.0
    %4526 = vmatpush1.msra.mxu0 0.0
    %4527 = vmatprep.subr.mxu0 0.0
    %4528 = vmatpush1.msra.mxu0 0.0
    %4529 = vmatprep.subr.mxu0 0.0
    %4530 = vmatpush1.msra.mxu0 0.0
    %4531 = vmatprep.subr.mxu0 0.0
    %4532 = vmatpush1.msra.mxu0 0.0
    %4533 = vmatprep.subr.mxu0 0.0
    %4534 = vmatpush1.msra.mxu0 0.0
    %4535 = vmatprep.subr.mxu0 0.0
    %4536 = vmatpush1.msra.mxu0 0.0
    %4537 = vmatprep.subr.mxu0 0.0
    %4538 = vmatpush1.msra.mxu0 0.0
    %4539 = vmatprep.subr.mxu0 0.0
    %4540 = vmatpush1.msra.mxu0 0.0
    %4541 = vmatprep.subr.mxu0 0.0
    %4542 = vmatpush1.msra.mxu0 0.0
    %4543 = vmatprep.subr.mxu0 0.0
    %4544 = vmatpush1.msra.mxu0 0.0
    %4545 = vmatprep.subr.mxu0 0.0
    %4546 = vmatpush1.msra.mxu0 0.0
    %4547 = vmatprep.subr.mxu0 0.0
    %4548 = vmatpush1.msra.mxu0 0.0
    %4549 = vmatprep.mubr.f32.mxu0 0.0
    %4550 = vmatmul.mubr.f32.gmra.mrb[0].mxu0 %v4483
    %v4551 = vpop.f32.mrb[0].mxu0
    %v4552 = vadd.f32 %v66, %v4551
    %v4553 = vpop.f32.mrb[0].mxu0
    %4554 = vmatprep.mubr.f32.mxu0 0.0
    %4555 = vmatmul.mubr.f32.gmra.mrb[0].mxu0 %v4484
    %v4556 = vpop.f32.mrb[0].mxu0
    %v4557 = vadd.f32 %v66, %v4556
    %v4558 = vpop.f32.mrb[0].mxu0
    %4559 = vdwg.mxu0
    %v4560 = vtanh.pop %v4552
    %v4561 = vtanh.pop %v4557
    %v4562 = vmul.f32 %v4479, 0.083333336
    %v4563 = vmul.f32 %v4480, 0.083333336
    %v4564 = vadd.f32 %v4402, %v4562
    %v4565 = vadd.f32 %v4403, %v4563
    %v4566 = vmul.f32 %v4560, 0.25
    %v4567 = vmul.f32 %v4561, 0.25
    %v4568 = vadd.f32 %v4564, %v4566
    %v4569 = vadd.f32 %v4565, %v4567
    %4570 = vmatprep.subr.mxu0 0.0
    %4571 = vmatpush1.msra.mxu0 %v45
    %4572 = vmatprep.subr.mxu0 0.0
    %4573 = vmatpush1.msra.mxu0 %v46
    %4574 = vmatprep.subr.mxu0 0.0
    %4575 = vmatpush1.msra.mxu0 %v47
    %4576 = vmatprep.subr.mxu0 0.0
    %4577 = vmatpush1.msra.mxu0 %v48
    %4578 = vmatprep.subr.mxu0 0.0
    %4579 = vmatpush1.msra.mxu0 %v49
    %4580 = vmatprep.subr.mxu0 0.0
    %4581 = vmatpush1.msra.mxu0 %v50
    %4582 = vmatprep.subr.mxu0 0.0
    %4583 = vmatpush1.msra.mxu0 %v51
    %4584 = vmatprep.subr.mxu0 0.0
    %4585 = vmatpush1.msra.mxu0 %v52
    %4586 = vmatprep.subr.mxu0 0.0
    %4587 = vmatpush1.msra.mxu0 %v53
    %4588 = vmatprep.subr.mxu0 0.0
    %4589 = vmatpush1.msra.mxu0 %v54
    %4590 = vmatprep.subr.mxu0 0.0
    %4591 = vmatpush1.msra.mxu0 %v55
    %4592 = vmatprep.subr.mxu0 0.0
    %4593 = vmatpush1.msra.mxu0 %v56
    %4594 = vmatprep.subr.mxu0 0.0
    %4595 = vmatpush1.msra.mxu0 %v57
    %4596 = vmatprep.subr.mxu0 0.0
    %4597 = vmatpush1.msra.mxu0 %v58
    %4598 = vmatprep.subr.mxu0 0.0
    %4599 = vmatpush1.msra.mxu0 %v59
    %4600 = vmatprep.subr.mxu0 0.0
    %4601 = vmatpush1.msra.mxu0 %v60
    %4602 = vmatprep.subr.mxu0 0.0
    %4603 = vmatpush1.msra.mxu0 0.0
    %4604 = vmatprep.subr.mxu0 0.0
    %4605 = vmatpush1.msra.mxu0 0.0
    %4606 = vmatprep.subr.mxu0 0.0
    %4607 = vmatpush1.msra.mxu0 0.0
    %4608 = vmatprep.subr.mxu0 0.0
    %4609 = vmatpush1.msra.mxu0 0.0
    %4610 = vmatprep.subr.mxu0 0.0
    %4611 = vmatpush1.msra.mxu0 0.0
    %4612 = vmatprep.subr.mxu0 0.0
    %4613 = vmatpush1.msra.mxu0 0.0
    %4614 = vmatprep.subr.mxu0 0.0
    %4615 = vmatpush1.msra.mxu0 0.0
    %4616 = vmatprep.subr.mxu0 0.0
    %4617 = vmatpush1.msra.mxu0 0.0
    %4618 = vmatprep.subr.mxu0 0.0
    %4619 = vmatpush1.msra.mxu0 0.0
    %4620 = vmatprep.subr.mxu0 0.0
    %4621 = vmatpush1.msra.mxu0 0.0
    %4622 = vmatprep.subr.mxu0 0.0
    %4623 = vmatpush1.msra.mxu0 0.0
    %4624 = vmatprep.subr.mxu0 0.0
    %4625 = vmatpush1.msra.mxu0 0.0
    %4626 = vmatprep.subr.mxu0 0.0
    %4627 = vmatpush1.msra.mxu0 0.0
    %4628 = vmatprep.subr.mxu0 0.0
    %4629 = vmatpush1.msra.mxu0 0.0
    %4630 = vmatprep.subr.mxu0 0.0
    %4631 = vmatpush1.msra.mxu0 0.0
    %4632 = vmatprep.subr.mxu0 0.0
    %4633 = vmatpush1.msra.mxu0 0.0
    %4634 = vmatprep.mubr.f32.mxu0 0.0
    %4635 = vmatmul.mubr.f32.gmra.mrb[0].mxu0 %v4568
    %v4636 = vpop.f32.mrb[0].mxu0
    %v4637 = vadd.f32 %v66, %v4636
    %v4638 = vpop.f32.mrb[0].mxu0
    %4639 = vmatprep.mubr.f32.mxu0 0.0
    %4640 = vmatmul.mubr.f32.gmra.mrb[0].mxu0 %v4569
    %v4641 = vpop.f32.mrb[0].mxu0
    %v4642 = vadd.f32 %v66, %v4641
    %v4643 = vpop.f32.mrb[0].mxu0
    %4644 = vdwg.mxu0
    %v4645 = vtanh.pop %v4637
    %v4646 = vtanh.pop %v4642
    %v4647 = vmul.f32 %v4479, 1.0864197
    %v4648 = vmul.f32 %v4480, 1.0864197
    %v4649 = vadd.f32 %v4402, %v4647
    %v4650 = vadd.f32 %v4403, %v4648
    %v4651 = vmul.f32 %v4560, -4.148148
    %v4652 = vmul.f32 %v4561, -4.148148
    %v4653 = vadd.f32 %v4649, %v4651
    %v4654 = vadd.f32 %v4650, %v4652
    %v4655 = vmul.f32 %v4645, 3.9506173
    %v4656 = vmul.f32 %v4646, 3.9506173
    %v4657 = vadd.f32 %v4653, %v4655
    %v4658 = vadd.f32 %v4654, %v4656
    %4659 = vmatprep.subr.mxu0 0.0
    %4660 = vmatpush1.msra.mxu0 %v45
    %4661 = vmatprep.subr.mxu0 0.0
    %4662 = vmatpush1.msra.mxu0 %v46
    %4663 = vmatprep.subr.mxu0 0.0
    %4664 = vmatpush1.msra.mxu0 %v47
    %4665 = vmatprep.subr.mxu0 0.0
    %4666 = vmatpush1.msra.mxu0 %v48
    %4667 = vmatprep.subr.mxu0 0.0
    %4668 = vmatpush1.msra.mxu0 %v49
    %4669 = vmatprep.subr.mxu0 0.0
    %4670 = vmatpush1.msra.mxu0 %v50
    %4671 = vmatprep.subr.mxu0 0.0
    %4672 = vmatpush1.msra.mxu0 %v51
    %4673 = vmatprep.subr.mxu0 0.0
    %4674 = vmatpush1.msra.mxu0 %v52
    %4675 = vmatprep.subr.mxu0 0.0
    %4676 = vmatpush1.msra.mxu0 %v53
    %4677 = vmatprep.subr.mxu0 0.0
    %4678 = vmatpush1.msra.mxu0 %v54
    %4679 = vmatprep.subr.mxu0 0.0
    %4680 = vmatpush1.msra.mxu0 %v55
    %4681 = vmatprep.subr.mxu0 0.0
    %4682 = vmatpush1.msra.mxu0 %v56
    %4683 = vmatprep.subr.mxu0 0.0
    %4684 = vmatpush1.msra.mxu0 %v57
    %4685 = vmatprep.subr.mxu0 0.0
    %4686 = vmatpush1.msra.mxu0 %v58
    %4687 = vmatprep.subr.mxu0 0.0
    %4688 = vmatpush1.msra.mxu0 %v59
    %4689 = vmatprep.subr.mxu0 0.0
    %4690 = vmatpush1.msra.mxu0 %v60
    %4691 = vmatprep.subr.mxu0 0.0
    %4692 = vmatpush1.msra.mxu0 0.0
    %4693 = vmatprep.subr.mxu0 0.0
    %4694 = vmatpush1.msra.mxu0 0.0
    %4695 = vmatprep.subr.mxu0 0.0
    %4696 = vmatpush1.msra.mxu0 0.0
    %4697 = vmatprep.subr.mxu0 0.0
    %4698 = vmatpush1.msra.mxu0 0.0
    %4699 = vmatprep.subr.mxu0 0.0
    %4700 = vmatpush1.msra.mxu0 0.0
    %4701 = vmatprep.subr.mxu0 0.0
    %4702 = vmatpush1.msra.mxu0 0.0
    %4703 = vmatprep.subr.mxu0 0.0
    %4704 = vmatpush1.msra.mxu0 0.0
    %4705 = vmatprep.subr.mxu0 0.0
    %4706 = vmatpush1.msra.mxu0 0.0
    %4707 = vmatprep.subr.mxu0 0.0
    %4708 = vmatpush1.msra.mxu0 0.0
    %4709 = vmatprep.subr.mxu0 0.0
    %4710 = vmatpush1.msra.mxu0 0.0
    %4711 = vmatprep.subr.mxu0 0.0
    %4712 = vmatpush1.msra.mxu0 0.0
    %4713 = vmatprep.subr.mxu0 0.0
    %4714 = vmatpush1.msra.mxu0 0.0
    %4715 = vmatprep.subr.mxu0 0.0
    %4716 = vmatpush1.msra.mxu0 0.0
    %4717 = vmatprep.subr.mxu0 0.0
    %4718 = vmatpush1.msra.mxu0 0.0
    %4719 = vmatprep.subr.mxu0 0.0
    %4720 = vmatpush1.msra.mxu0 0.0
    %4721 = vmatprep.subr.mxu0 0.0
    %4722 = vmatpush1.msra.mxu0 0.0
    %4723 = vmatprep.mubr.f32.mxu0 0.0
    %4724 = vmatmul.mubr.f32.gmra.mrb[0].mxu0 %v4657
    %v4725 = vpop.f32.mrb[0].mxu0
    %v4726 = vadd.f32 %v66, %v4725
    %v4727 = vpop.f32.mrb[0].mxu0
    %4728 = vmatprep.mubr.f32.mxu0 0.0
    %4729 = vmatmul.mubr.f32.gmra.mrb[0].mxu0 %v4658
    %v4730 = vpop.f32.mrb[0].mxu0
    %v4731 = vadd.f32 %v66, %v4730
    %v4732 = vpop.f32.mrb[0].mxu0
    %4733 = vdwg.mxu0
    %v4734 = vtanh.pop %v4726
    %v4735 = vtanh.pop %v4731
    %v4736 = vmul.f32 %v4479, 3.2806652
    %v4737 = vmul.f32 %v4480, 3.2806652
    %v4738 = vadd.f32 %v4402, %v4736
    %v4739 = vadd.f32 %v4403, %v4737
    %v4740 = vmul.f32 %v4560, -12.884214
    %v4741 = vmul.f32 %v4561, -12.884214
    %v4742 = vadd.f32 %v4738, %v4740
    %v4743 = vadd.f32 %v4739, %v4741
    %v4744 = vmul.f32 %v4645, 10.914326
    %v4745 = vmul.f32 %v4646, 10.914326
    %v4746 = vadd.f32 %v4742, %v4744
    %v4747 = vadd.f32 %v4743, %v4745
    %v4748 = vmul.f32 %v4734, -0.3231215
    %v4749 = vmul.f32 %v4735, -0.3231215
    %v4750 = vadd.f32 %v4746, %v4748
    %v4751 = vadd.f32 %v4747, %v4749
    %4752 = vmatprep.subr.mxu0 0.0
    %4753 = vmatpush1.msra.mxu0 %v45
    %4754 = vmatprep.subr.mxu0 0.0
    %4755 = vmatpush1.msra.mxu0 %v46
    %4756 = vmatprep.subr.mxu0 0.0
    %4757 = vmatpush1.msra.mxu0 %v47
    %4758 = vmatprep.subr.mxu0 0.0
    %4759 = vmatpush1.msra.mxu0 %v48
    %4760 = vmatprep.subr.mxu0 0.0
    %4761 = vmatpush1.msra.mxu0 %v49
    %4762 = vmatprep.subr.mxu0 0.0
    %4763 = vmatpush1.msra.mxu0 %v50
    %4764 = vmatprep.subr.mxu0 0.0
    %4765 = vmatpush1.msra.mxu0 %v51
    %4766 = vmatprep.subr.mxu0 0.0
    %4767 = vmatpush1.msra.mxu0 %v52
    %4768 = vmatprep.subr.mxu0 0.0
    %4769 = vmatpush1.msra.mxu0 %v53
    %4770 = vmatprep.subr.mxu0 0.0
    %4771 = vmatpush1.msra.mxu0 %v54
    %4772 = vmatprep.subr.mxu0 0.0
    %4773 = vmatpush1.msra.mxu0 %v55
    %4774 = vmatprep.subr.mxu0 0.0
    %4775 = vmatpush1.msra.mxu0 %v56
    %4776 = vmatprep.subr.mxu0 0.0
    %4777 = vmatpush1.msra.mxu0 %v57
    %4778 = vmatprep.subr.mxu0 0.0
    %4779 = vmatpush1.msra.mxu0 %v58
    %4780 = vmatprep.subr.mxu0 0.0
    %4781 = vmatpush1.msra.mxu0 %v59
    %4782 = vmatprep.subr.mxu0 0.0
    %4783 = vmatpush1.msra.mxu0 %v60
    %4784 = vmatprep.subr.mxu0 0.0
    %4785 = vmatpush1.msra.mxu0 0.0
    %4786 = vmatprep.subr.mxu0 0.0
    %4787 = vmatpush1.msra.mxu0 0.0
    %4788 = vmatprep.subr.mxu0 0.0
    %4789 = vmatpush1.msra.mxu0 0.0
    %4790 = vmatprep.subr.mxu0 0.0
    %4791 = vmatpush1.msra.mxu0 0.0
    %4792 = vmatprep.subr.mxu0 0.0
    %4793 = vmatpush1.msra.mxu0 0.0
    %4794 = vmatprep.subr.mxu0 0.0
    %4795 = vmatpush1.msra.mxu0 0.0
    %4796 = vmatprep.subr.mxu0 0.0
    %4797 = vmatpush1.msra.mxu0 0.0
    %4798 = vmatprep.subr.mxu0 0.0
    %4799 = vmatpush1.msra.mxu0 0.0
    %4800 = vmatprep.subr.mxu0 0.0
    %4801 = vmatpush1.msra.mxu0 0.0
    %4802 = vmatprep.subr.mxu0 0.0
    %4803 = vmatpush1.msra.mxu0 0.0
    %4804 = vmatprep.subr.mxu0 0.0
    %4805 = vmatpush1.msra.mxu0 0.0
    %4806 = vmatprep.subr.mxu0 0.0
    %4807 = vmatpush1.msra.mxu0 0.0
    %4808 = vmatprep.subr.mxu0 0.0
    %4809 = vmatpush1.msra.mxu0 0.0
    %4810 = vmatprep.subr.mxu0 0.0
    %4811 = vmatpush1.msra.mxu0 0.0
    %4812 = vmatprep.subr.mxu0 0.0
    %4813 = vmatpush1.msra.mxu0 0.0
    %4814 = vmatprep.subr.mxu0 0.0
    %4815 = vmatpush1.msra.mxu0 0.0
    %4816 = vmatprep.mubr.f32.mxu0 0.0
    %4817 = vmatmul.mubr.f32.gmra.mrb[0].mxu0 %v4750
    %v4818 = vpop.f32.mrb[0].mxu0
    %v4819 = vadd.f32 %v66, %v4818
    %v4820 = vpop.f32.mrb[0].mxu0
    %4821 = vmatprep.mubr.f32.mxu0 0.0
    %4822 = vmatmul.mubr.f32.gmra.mrb[0].mxu0 %v4751
    %v4823 = vpop.f32.mrb[0].mxu0
    %v4824 = vadd.f32 %v66, %v4823
    %v4825 = vpop.f32.mrb[0].mxu0
    %4826 = vdwg.mxu0
    %v4827 = vtanh.pop %v4819
    %v4828 = vtanh.pop %v4824
    %v4829 = vmul.f32 %v4479, 3.162528
    %v4830 = vmul.f32 %v4480, 3.162528
    %v4831 = vadd.f32 %v4402, %v4829
    %v4832 = vadd.f32 %v4403, %v4830
    %v4833 = vmul.f32 %v4560, -11.952862
    %v4834 = vmul.f32 %v4561, -11.952862
    %v4835 = vadd.f32 %v4831, %v4833
    %v4836 = vadd.f32 %v4832, %v4834
    %v4837 = vmul.f32 %v4645, 9.896026
    %v4838 = vmul.f32 %v4646, 9.896026
    %v4839 = vadd.f32 %v4835, %v4837
    %v4840 = vadd.f32 %v4836, %v4838
    %v4841 = vmul.f32 %v4734, 0.30934343
    %v4842 = vmul.f32 %v4735, 0.30934343
    %v4843 = vadd.f32 %v4839, %v4841
    %v4844 = vadd.f32 %v4840, %v4842
    %v4845 = vmul.f32 %v4827, -0.30392367
    %v4846 = vmul.f32 %v4828, -0.30392367
    %v4847 = vadd.f32 %v4843, %v4845
    %v4848 = vadd.f32 %v4844, %v4846
    %4849 = vmatprep.subr.mxu0 0.0
    %4850 = vmatpush1.msra.mxu0 %v45
    %4851 = vmatprep.subr.mxu0 0.0
    %4852 = vmatpush1.msra.mxu0 %v46
    %4853 = vmatprep.subr.mxu0 0.0
    %4854 = vmatpush1.msra.mxu0 %v47
    %4855 = vmatprep.subr.mxu0 0.0
    %4856 = vmatpush1.msra.mxu0 %v48
    %4857 = vmatprep.subr.mxu0 0.0
    %4858 = vmatpush1.msra.mxu0 %v49
    %4859 = vmatprep.subr.mxu0 0.0
    %4860 = vmatpush1.msra.mxu0 %v50
    %4861 = vmatprep.subr.mxu0 0.0
    %4862 = vmatpush1.msra.mxu0 %v51
    %4863 = vmatprep.subr.mxu0 0.0
    %4864 = vmatpush1.msra.mxu0 %v52
    %4865 = vmatprep.subr.mxu0 0.0
    %4866 = vmatpush1.msra.mxu0 %v53
    %4867 = vmatprep.subr.mxu0 0.0
    %4868 = vmatpush1.msra.mxu0 %v54
    %4869 = vmatprep.subr.mxu0 0.0
    %4870 = vmatpush1.msra.mxu0 %v55
    %4871 = vmatprep.subr.mxu0 0.0
    %4872 = vmatpush1.msra.mxu0 %v56
    %4873 = vmatprep.subr.mxu0 0.0
    %4874 = vmatpush1.msra.mxu0 %v57
    %4875 = vmatprep.subr.mxu0 0.0
    %4876 = vmatpush1.msra.mxu0 %v58
    %4877 = vmatprep.subr.mxu0 0.0
    %4878 = vmatpush1.msra.mxu0 %v59
    %4879 = vmatprep.subr.mxu0 0.0
    %4880 = vmatpush1.msra.mxu0 %v60
    %4881 = vmatprep.subr.mxu0 0.0
    %4882 = vmatpush1.msra.mxu0 0.0
    %4883 = vmatprep.subr.mxu0 0.0
    %4884 = vmatpush1.msra.mxu0 0.0
    %4885 = vmatprep.subr.mxu0 0.0
    %4886 = vmatpush1.msra.mxu0 0.0
    %4887 = vmatprep.subr.mxu0 0.0
    %4888 = vmatpush1.msra.mxu0 0.0
    %4889 = vmatprep.subr.mxu0 0.0
    %4890 = vmatpush1.msra.mxu0 0.0
    %4891 = vmatprep.subr.mxu0 0.0
    %4892 = vmatpush1.msra.mxu0 0.0
    %4893 = vmatprep.subr.mxu0 0.0
    %4894 = vmatpush1.msra.mxu0 0.0
    %4895 = vmatprep.subr.mxu0 0.0
    %4896 = vmatpush1.msra.mxu0 0.0
    %4897 = vmatprep.subr.mxu0 0.0
    %4898 = vmatpush1.msra.mxu0 0.0
    %4899 = vmatprep.subr.mxu0 0.0
    %4900 = vmatpush1.msra.mxu0 0.0
    %4901 = vmatprep.subr.mxu0 0.0
    %4902 = vmatpush1.msra.mxu0 0.0
    %4903 = vmatprep.subr.mxu0 0.0
    %4904 = vmatpush1.msra.mxu0 0.0
    %4905 = vmatprep.subr.mxu0 0.0
    %4906 = vmatpush1.msra.mxu0 0.0
    %4907 = vmatprep.subr.mxu0 0.0
    %4908 = vmatpush1.msra.mxu0 0.0
    %4909 = vmatprep.subr.mxu0 0.0
    %4910 = vmatpush1.msra.mxu0 0.0
    %4911 = vmatprep.subr.mxu0 0.0
    %4912 = vmatpush1.msra.mxu0 0.0
    %4913 = vmatprep.mubr.f32.mxu0 0.0
    %4914 = vmatmul.mubr.f32.gmra.mrb[0].mxu0 %v4847
    %v4915 = vpop.f32.mrb[0].mxu0
    %v4916 = vadd.f32 %v66, %v4915
    %v4917 = vpop.f32.mrb[0].mxu0
    %4918 = vmatprep.mubr.f32.mxu0 0.0
    %4919 = vmatmul.mubr.f32.gmra.mrb[0].mxu0 %v4848
    %v4920 = vpop.f32.mrb[0].mxu0
    %v4921 = vadd.f32 %v66, %v4920
    %v4922 = vpop.f32.mrb[0].mxu0
    %4923 = vdwg.mxu0
    %v4924 = vtanh.pop %v4916
    %v4925 = vtanh.pop %v4921
    %v4926 = vmul.f32 %v4479, 0.10127315
    %v4927 = vmul.f32 %v4480, 0.10127315
    %v4928 = vadd.f32 %v4402, %v4926
    %v4929 = vadd.f32 %v4403, %v4927
    %v4930 = vmul.f32 %v4645, 0.49915144
    %v4931 = vmul.f32 %v4646, 0.49915144
    %v4932 = vadd.f32 %v4928, %v4930
    %v4933 = vadd.f32 %v4929, %v4931
    %v4934 = vmul.f32 %v4734, 0.7233796
    %v4935 = vmul.f32 %v4735, 0.7233796
    %v4936 = vadd.f32 %v4932, %v4934
    %v4937 = vadd.f32 %v4933, %v4935
    %v4938 = vmul.f32 %v4827, -0.35819575
    %v4939 = vmul.f32 %v4828, -0.35819575
    %v4940 = vadd.f32 %v4936, %v4938
    %v4941 = vadd.f32 %v4937, %v4939
    %v4942 = vmul.f32 %v4924, 0.14550264
    %v4943 = vmul.f32 %v4925, 0.14550264
    %v4944 = vadd.f32 %v4940, %v4942
    %v4945 = vadd.f32 %v4941, %v4943
    %4946 = vst [vmem:[#allocation7] sm:$0xff] %v4944
    %4947 = vst [vmem:[#allocation7 + $0x8] sm:$0xff] %v4945
    // Predicated region
    $region22: #{tpu_custom_call.1} parent=1 // pred_check
      _
    $region23: #{tpu_custom_call.1} parent=1 // pred_check_branch
      %4949 = sbr.rel (0) target = $region25
    $region24: #{tpu_custom_call.1} parent=1 // pred_region
      %s4951 = ssub.s32 256, 256
      %4952 = vsyncadd [#allocation4], %s4951
      %s4953 = sshll.u32 [#allocation7], 4
      %s4954 = int_to_ptr.vmem [resolvable:$true] %s4953
      %4959 = dma.vmem_to_hbm [thread:$0]  %s4954, 256, %s3, [#allocation4], 128, 128, 8
    $region25: #{tpu_custom_call.1} parent=1 // pred_fallthru
      _
    // Predicated region
    $region26: #{tpu_custom_call.1} parent=1 // pred_check
      _
    $region27: #{tpu_custom_call.1} parent=1 // pred_check_branch
      %4961 = sbr.rel (0) target = $region29
    $region28: #{tpu_custom_call.1} parent=1 // pred_region
      %4962 = dma.done [#allocation4], 256
    $region29: #{tpu_custom_call.1} parent=1 // pred_fallthru
      _
    %4963 = vsyncpa [#allocation3], 1
    %4964 = vsyncpa [#allocation6], 1
    %4965 = vsyncpa [#allocation4], 1

</llo_original>
